<compile_context>
chip_gen: v7x
topology: tpu7x:2x2x1
jax: 0.10.0
libtpu: 0.0.40
codegen_flags: <defaults>
</compile_context>

<pallas_src>
import functools

import jax
import jax.numpy as jnp
from jax.experimental import pallas as pl
from jax.experimental.pallas import tpu as pltpu

F_IN, C1, C2, C3, K = 960, 512, 256, 128, 3
K_PAD = 8            # pad conv4 output rows 3 -> 8 (one f32 sublane tile)
EPS = 1e-5


def _round_up(x, m):
    return (x + m - 1) // m * m


def _cdiv(a, b):
    return (a + b - 1) // b


def rot_green_kernel(x_ref,
                     w1_ref, w2_ref, w3_ref, w4_ref,
                     t1_ref, t2_ref, t3_ref, b4_ref,
                     o_ref):
    # x_ref : (960, TN) f32 tile in native NCL layout (channels x points).
    # w*_ref: (out, in) bf16 weights with eval-mode BN scale folded into rows.
    # t*_ref/b4_ref: (out, 1) f32 per-channel shifts (conv bias + BN offset).
    # o_ref : (3, TN) f32 output tile.
    x = x_ref[...].astype(jnp.bfloat16)      # in-kernel cast: no extra HBM pass over x

    h = jnp.dot(w1_ref[...], x, preferred_element_type=jnp.float32)     # (512, TN)
    h = jnp.maximum(h + t1_ref[...], 0.0).astype(jnp.bfloat16)          # bn1 shift + relu

    h = jnp.dot(w2_ref[...], h, preferred_element_type=jnp.float32)     # (256, TN)
    h = jnp.maximum(h + t2_ref[...], 0.0).astype(jnp.bfloat16)          # bn2 shift + relu

    h = jnp.dot(w3_ref[...], h, preferred_element_type=jnp.float32)     # (128, TN)
    h = jnp.maximum(h + t3_ref[...], 0.0).astype(jnp.bfloat16)          # bn3 shift + relu

    h = jnp.dot(w4_ref[...], h, preferred_element_type=jnp.float32)     # (8, TN), rows 3..7 are zero
    o_ref[...] = (h + b4_ref[...])[:K, :].astype(o_ref.dtype)           # keep the 3 real rows


def init_params(key):
    """Deterministic synthetic parameters matching the PyTorch module's shapes."""
    ks = jax.random.split(key, 20)
    p = {}

    # Conv1d weights: PyTorch shape (out_c, in_c, 1) -> stored here as (in_c, out_c).
    def conv_w(k, cin, cout):
        bound = 1.0 / jnp.sqrt(cin)
        return jax.random.uniform(k, (cin, cout), jnp.float32, -bound, bound)

    def conv_b(k, cin, cout):
        bound = 1.0 / jnp.sqrt(cin)
        return jax.random.uniform(k, (cout,), jnp.float32, -bound, bound)

    p["w1"], p["b1"] = conv_w(ks[0], F_IN, C1), conv_b(ks[1], F_IN, C1)
    p["w2"], p["b2"] = conv_w(ks[2], C1, C2), conv_b(ks[3], C1, C2)
    p["w3"], p["b3"] = conv_w(ks[4], C2, C3), conv_b(ks[5], C2, C3)
    p["w4"], p["b4"] = conv_w(ks[6], C3, K), conv_b(ks[7], C3, K)

    # BatchNorm1d params (eval mode: gamma, beta, running_mean, running_var).
    def bn(kg, kb, km, kv, c):
        gamma = 1.0 + 0.1 * jax.random.normal(kg, (c,), jnp.float32)
        beta = 0.1 * jax.random.normal(kb, (c,), jnp.float32)
        mean = 0.1 * jax.random.normal(km, (c,), jnp.float32)
        var = jax.random.uniform(kv, (c,), jnp.float32, 0.5, 1.5)
        return gamma, beta, mean, var

    p["bn1"] = bn(ks[8], ks[9], ks[10], ks[11], C1)
    p["bn2"] = bn(ks[12], ks[13], ks[14], ks[15], C2)
    p["bn3"] = bn(ks[16], ks[17], ks[18], ks[19], C3)
    return p


def _fold_bn(conv_bias, bn_params):
    """Fold conv bias + eval-mode BatchNorm into (row_scale, column_shift)."""
    gamma, beta, mean, var = bn_params
    scale = gamma / jnp.sqrt(var + EPS)            # (C,)
    shift = (conv_bias - mean) * scale + beta      # (C,)
    return scale, shift[:, None]                   # (C,), (C, 1)


@functools.partial(jax.jit, static_argnames=("tn",))
def rot_green_forward(x, params, *, tn=512):
    """x: (B, 960, N) float32 -> (B, 3, N) float32 (eval-mode BN)."""
    B, C, N = x.shape
    assert C == F_IN

    # Points tile: multiple of 128 lanes; keep >= 2 programs so the v7x
    # megacore can shard the parallel grid even for B == 1.
    n_blk = _round_up(N, 128)
    TN = min(_round_up(tn, 128), n_blk)
    if B * _cdiv(N, TN) < 2 and n_blk > 128:
        TN = _round_up(_cdiv(n_blk, 2), 128)
    grid = (B, _cdiv(N, TN))

    # Fold eval-mode BN into the (out, in)-oriented weights / channel shifts.
    s1, t1 = _fold_bn(params["b1"], params["bn1"])
    s2, t2 = _fold_bn(params["b2"], params["bn2"])
    s3, t3 = _fold_bn(params["b3"], params["bn3"])
    w1 = (params["w1"].T * s1[:, None]).astype(jnp.bfloat16)        # (512, 960)
    w2 = (params["w2"].T * s2[:, None]).astype(jnp.bfloat16)        # (256, 512)
    w3 = (params["w3"].T * s3[:, None]).astype(jnp.bfloat16)        # (128, 256)
    w4 = (jnp.zeros((K_PAD, C3), jnp.float32)
          .at[:K, :].set(params["w4"].T)
          .astype(jnp.bfloat16))                                    # (8, 128), rows 3..7 zero
    b4 = jnp.zeros((K_PAD, 1), jnp.float32).at[:K, 0].set(params["b4"])

    # Grid-invariant params: constant index_map keeps them VMEM-resident.
    const = lambda shape: pl.BlockSpec(shape, lambda b, n: (0, 0))

    flops = 2 * B * N * (F_IN * C1 + C1 * C2 + C2 * C3 + C3 * K_PAD)
    bytes_accessed = (x.size * 4
                      + 2 * (C1 * F_IN + C2 * C1 + C3 * C2 + K_PAD * C3)
                      + 4 * (C1 + C2 + C3 + K_PAD)
                      + 4 * B * K * N)

    return pl.pallas_call(
        rot_green_kernel,
        out_shape=jax.ShapeDtypeStruct((B, K, N), jnp.float32),
        grid_spec=pltpu.PrefetchScalarGridSpec(
            num_scalar_prefetch=0,
            grid=grid,
            in_specs=[
                pl.BlockSpec((pl.Squeezed(), F_IN, TN), lambda b, n: (b, 0, n)),  # x tile
                const((C1, F_IN)), const((C2, C1)), const((C3, C2)), const((K_PAD, C3)),
                const((C1, 1)), const((C2, 1)), const((C3, 1)), const((K_PAD, 1)),
            ],
            out_specs=pl.BlockSpec((pl.Squeezed(), K, TN), lambda b, n: (b, 0, n)),
        ),
        compiler_params=pltpu.CompilerParams(
            # Batch and points axes are embarrassingly parallel -> megacore sharding.
            dimension_semantics=("parallel", "parallel"),
        ),
        cost_estimate=pl.CostEstimate(
            flops=flops, transcendentals=0, bytes_accessed=bytes_accessed),
    )(x, w1, w2, w3, w4, t1, t2, t3, b4)


def _reference(x, params):
    """Pure-JAX f32 reference (eval-mode BN), matching the PyTorch forward."""
    def layer(h, w, b, bn):
        h = jnp.einsum("bcn,cd->bdn", h, w) + b[None, :, None]
        gamma, beta, mean, var = bn
        h = (h - mean[None, :, None]) / jnp.sqrt(var[None, :, None] + EPS)
        h = h * gamma[None, :, None] + beta[None, :, None]
        return jnp.maximum(h, 0.0)

    h = layer(x, params["w1"], params["b1"], params["bn1"])
    h = layer(h, params["w2"], params["b2"], params["bn2"])
    h = layer(h, params["w3"], params["b3"], params["bn3"])
    h = jnp.einsum("bcn,cd->bdn", h, params["w4"]) + params["b4"][None, :, None]
    return h


if __name__ == "__main__":
    key = jax.random.PRNGKey(0)
    kx, kp = jax.random.split(key)

    # Small but multi-tile: tn=128 -> grid = (2 batches, 2 point-tiles) with a
    # ragged tail (200 = 128 + 72) exercising the partial-block path.
    B, N = 2, 200
    x = jax.random.normal(kx, (B, F_IN, N), jnp.float32)
    params = init_params(kp)

    out = jax.block_until_ready(rot_green_forward(x, params, tn=128))
    ref = _reference(x, params)

    assert out.shape == (B, K, N), out.shape
    # bf16 matmuls with f32 accumulation: loose but bug-catching tolerance.
    max_err = float(jnp.max(jnp.abs(out - ref)))
    assert jnp.allclose(out, ref, atol=5e-2, rtol=5e-2), max_err

    print("KERNEL_OK")
</pallas_src>

<mosaic_0001>
module attributes {stable_mosaic.version = 11 : i64} {
  func.func @rot_green_kernel(%arg0: i32, %arg1: i32, %arg2: memref<1x960x128xf32, #tpu.memory_space<vmem>>, %arg3: memref<512x960xbf16, #tpu.memory_space<vmem>>, %arg4: memref<256x512xbf16, #tpu.memory_space<vmem>>, %arg5: memref<128x256xbf16, #tpu.memory_space<vmem>>, %arg6: memref<8x128xbf16, #tpu.memory_space<vmem>>, %arg7: memref<512x1xf32, #tpu.memory_space<vmem>>, %arg8: memref<256x1xf32, #tpu.memory_space<vmem>>, %arg9: memref<128x1xf32, #tpu.memory_space<vmem>>, %arg10: memref<8x1xf32, #tpu.memory_space<vmem>>, %arg11: memref<1x3x128xf32, #tpu.memory_space<vmem>>) attributes {dimension_semantics = [#tpu.dimension_semantics<parallel>, #tpu.dimension_semantics<parallel>], iteration_bounds = array<i64: 2, 2>, scalar_prefetch = 0 : i64, scratch_operands = 0 : i64, tpu.core_type = #tpu.core_type<tc>, window_params = [{transform_indices = @transform_0, window_bounds = array<i64: 1, 960, 128>}, {pipeline_mode = #tpu.pipeline_mode<synchronous>, transform_indices = @transform_1, window_bounds = array<i64: 512, 960>}, {pipeline_mode = #tpu.pipeline_mode<synchronous>, transform_indices = @transform_2, window_bounds = array<i64: 256, 512>}, {pipeline_mode = #tpu.pipeline_mode<synchronous>, transform_indices = @transform_3, window_bounds = array<i64: 128, 256>}, {pipeline_mode = #tpu.pipeline_mode<synchronous>, transform_indices = @transform_4, window_bounds = array<i64: 8, 128>}, {pipeline_mode = #tpu.pipeline_mode<synchronous>, transform_indices = @transform_5, window_bounds = array<i64: 512, 1>}, {pipeline_mode = #tpu.pipeline_mode<synchronous>, transform_indices = @transform_6, window_bounds = array<i64: 256, 1>}, {pipeline_mode = #tpu.pipeline_mode<synchronous>, transform_indices = @transform_7, window_bounds = array<i64: 128, 1>}, {pipeline_mode = #tpu.pipeline_mode<synchronous>, transform_indices = @transform_8, window_bounds = array<i64: 8, 1>}, {transform_indices = @transform_9, window_bounds = array<i64: 1, 3, 128>}]} {
    %c0 = arith.constant 0 : index
    %c0_0 = arith.constant 0 : index
    %c0_1 = arith.constant 0 : index
    %0 = vector.load %arg2[%c0, %c0_0, %c0_1] : memref<1x960x128xf32, #tpu.memory_space<vmem>>, vector<1x960x128xf32>
    %1 = vector.shape_cast %0 : vector<1x960x128xf32> to vector<960x128xf32>
    %2 = arith.truncf %1 : vector<960x128xf32> to vector<960x128xbf16>
    %c0_2 = arith.constant 0 : index
    %c0_3 = arith.constant 0 : index
    %3 = vector.load %arg3[%c0_2, %c0_3] : memref<512x960xbf16, #tpu.memory_space<vmem>>, vector<512x960xbf16>
    %cst = arith.constant dense<0.000000e+00> : vector<512x128xf32>
    %4 = tpu.matmul %3, %2, %cst {dimension_numbers = #tpu.dot_dimension_numbers<[1], [0], [0], [1], [0, 0, 1, 1], [], []>} : vector<512x960xbf16>, vector<960x128xbf16>, vector<512x128xf32> -> vector<512x128xf32>
    %c0_4 = arith.constant 0 : index
    %c0_5 = arith.constant 0 : index
    %5 = vector.load %arg7[%c0_4, %c0_5] : memref<512x1xf32, #tpu.memory_space<vmem>>, vector<512x1xf32>
    %6 = vector.broadcast %5 : vector<512x1xf32> to vector<512x128xf32>
    %7 = arith.addf %4, %6 : vector<512x128xf32>
    %cst_6 = arith.constant 0.000000e+00 : f32
    %8 = vector.broadcast %cst_6 : f32 to vector<512x128xf32>
    %9 = arith.maximumf %7, %8 : vector<512x128xf32>
    %10 = arith.truncf %9 : vector<512x128xf32> to vector<512x128xbf16>
    %c0_7 = arith.constant 0 : index
    %c0_8 = arith.constant 0 : index
    %11 = vector.load %arg4[%c0_7, %c0_8] : memref<256x512xbf16, #tpu.memory_space<vmem>>, vector<256x512xbf16>
    %cst_9 = arith.constant dense<0.000000e+00> : vector<256x128xf32>
    %12 = tpu.matmul %11, %10, %cst_9 {dimension_numbers = #tpu.dot_dimension_numbers<[1], [0], [0], [1], [0, 0, 1, 1], [], []>} : vector<256x512xbf16>, vector<512x128xbf16>, vector<256x128xf32> -> vector<256x128xf32>
    %c0_10 = arith.constant 0 : index
    %c0_11 = arith.constant 0 : index
    %13 = vector.load %arg8[%c0_10, %c0_11] : memref<256x1xf32, #tpu.memory_space<vmem>>, vector<256x1xf32>
    %14 = vector.broadcast %13 : vector<256x1xf32> to vector<256x128xf32>
    %15 = arith.addf %12, %14 : vector<256x128xf32>
    %cst_12 = arith.constant 0.000000e+00 : f32
    %16 = vector.broadcast %cst_12 : f32 to vector<256x128xf32>
    %17 = arith.maximumf %15, %16 : vector<256x128xf32>
    %18 = arith.truncf %17 : vector<256x128xf32> to vector<256x128xbf16>
    %c0_13 = arith.constant 0 : index
    %c0_14 = arith.constant 0 : index
    %19 = vector.load %arg5[%c0_13, %c0_14] : memref<128x256xbf16, #tpu.memory_space<vmem>>, vector<128x256xbf16>
    %cst_15 = arith.constant dense<0.000000e+00> : vector<128x128xf32>
    %20 = tpu.matmul %19, %18, %cst_15 {dimension_numbers = #tpu.dot_dimension_numbers<[1], [0], [0], [1], [0, 0, 1, 1], [], []>} : vector<128x256xbf16>, vector<256x128xbf16>, vector<128x128xf32> -> vector<128x128xf32>
    %c0_16 = arith.constant 0 : index
    %c0_17 = arith.constant 0 : index
    %21 = vector.load %arg9[%c0_16, %c0_17] : memref<128x1xf32, #tpu.memory_space<vmem>>, vector<128x1xf32>
    %22 = vector.broadcast %21 : vector<128x1xf32> to vector<128x128xf32>
    %23 = arith.addf %20, %22 : vector<128x128xf32>
    %cst_18 = arith.constant 0.000000e+00 : f32
    %24 = vector.broadcast %cst_18 : f32 to vector<128x128xf32>
    %25 = arith.maximumf %23, %24 : vector<128x128xf32>
    %26 = arith.truncf %25 : vector<128x128xf32> to vector<128x128xbf16>
    %c0_19 = arith.constant 0 : index
    %c0_20 = arith.constant 0 : index
    %27 = vector.load %arg6[%c0_19, %c0_20] : memref<8x128xbf16, #tpu.memory_space<vmem>>, vector<8x128xbf16>
    %cst_21 = arith.constant dense<0.000000e+00> : vector<8x128xf32>
    %28 = tpu.matmul %27, %26, %cst_21 {dimension_numbers = #tpu.dot_dimension_numbers<[1], [0], [0], [1], [0, 0, 1, 1], [], []>} : vector<8x128xbf16>, vector<128x128xbf16>, vector<8x128xf32> -> vector<8x128xf32>
    %c0_22 = arith.constant 0 : index
    %c0_23 = arith.constant 0 : index
    %29 = vector.load %arg10[%c0_22, %c0_23] : memref<8x1xf32, #tpu.memory_space<vmem>>, vector<8x1xf32>
    %30 = vector.broadcast %29 : vector<8x1xf32> to vector<8x128xf32>
    %31 = arith.addf %28, %30 : vector<8x128xf32>
    %32 = vector.extract_strided_slice %31 {offsets = [0, 0], sizes = [3, 128], strides = [1, 1]} : vector<8x128xf32> to vector<3x128xf32>
    %c0_24 = arith.constant 0 : index
    %c0_25 = arith.constant 0 : index
    %c0_26 = arith.constant 0 : index
    %33 = vector.load %arg11[%c0_24, %c0_25, %c0_26] : memref<1x3x128xf32, #tpu.memory_space<vmem>>, vector<1x3x128xf32>
    %34 = vector.shape_cast %33 : vector<1x3x128xf32> to vector<3x128xf32>
    %35 = vector.shape_cast %32 : vector<3x128xf32> to vector<1x3x128xf32>
    tpu.vector_store %arg11[%c0_24, %c0_25, %c0_26], %35 {strides = array<i32>} : memref<1x3x128xf32, #tpu.memory_space<vmem>>, vector<1x3x128xf32>,
    return
  }
  func.func @transform_0(%arg0: i32, %arg1: i32) -> (i32, i32, i32) {
    %c0_i32 = arith.constant 0 : i32
    %c0_i32_0 = arith.constant 0 : i32
    return %arg0, %c0_i32, %arg1 : i32, i32, i32
  }
  func.func @transform_1(%arg0: i32, %arg1: i32) -> (i32, i32) {
    %c0_i32 = arith.constant 0 : i32
    %c0_i32_0 = arith.constant 0 : i32
    %c0_i32_1 = arith.constant 0 : i32
    return %c0_i32, %c0_i32_0 : i32, i32
  }
  func.func @transform_2(%arg0: i32, %arg1: i32) -> (i32, i32) {
    %c0_i32 = arith.constant 0 : i32
    %c0_i32_0 = arith.constant 0 : i32
    %c0_i32_1 = arith.constant 0 : i32
    return %c0_i32, %c0_i32_0 : i32, i32
  }
  func.func @transform_3(%arg0: i32, %arg1: i32) -> (i32, i32) {
    %c0_i32 = arith.constant 0 : i32
    %c0_i32_0 = arith.constant 0 : i32
    %c0_i32_1 = arith.constant 0 : i32
    return %c0_i32, %c0_i32_0 : i32, i32
  }
  func.func @transform_4(%arg0: i32, %arg1: i32) -> (i32, i32) {
    %c0_i32 = arith.constant 0 : i32
    %c0_i32_0 = arith.constant 0 : i32
    %c0_i32_1 = arith.constant 0 : i32
    return %c0_i32, %c0_i32_0 : i32, i32
  }
  func.func @transform_5(%arg0: i32, %arg1: i32) -> (i32, i32) {
    %c0_i32 = arith.constant 0 : i32
    %c0_i32_0 = arith.constant 0 : i32
    %c0_i32_1 = arith.constant 0 : i32
    return %c0_i32, %c0_i32_0 : i32, i32
  }
  func.func @transform_6(%arg0: i32, %arg1: i32) -> (i32, i32) {
    %c0_i32 = arith.constant 0 : i32
    %c0_i32_0 = arith.constant 0 : i32
    %c0_i32_1 = arith.constant 0 : i32
    return %c0_i32, %c0_i32_0 : i32, i32
  }
  func.func @transform_7(%arg0: i32, %arg1: i32) -> (i32, i32) {
    %c0_i32 = arith.constant 0 : i32
    %c0_i32_0 = arith.constant 0 : i32
    %c0_i32_1 = arith.constant 0 : i32
    return %c0_i32, %c0_i32_0 : i32, i32
  }
  func.func @transform_8(%arg0: i32, %arg1: i32) -> (i32, i32) {
    %c0_i32 = arith.constant 0 : i32
    %c0_i32_0 = arith.constant 0 : i32
    %c0_i32_1 = arith.constant 0 : i32
    return %c0_i32, %c0_i32_0 : i32, i32
  }
  func.func @transform_9(%arg0: i32, %arg1: i32) -> (i32, i32, i32) {
    %c0_i32 = arith.constant 0 : i32
    %c0_i32_0 = arith.constant 0 : i32
    return %arg0, %c0_i32, %arg1 : i32, i32, i32
  }
}

</mosaic_0001>

<llo_original>
// kernel: rot_green_forward.1
$region0: #{rot_green_forward.1}
  #allocation0 [shape = 'u32[]', space=smem, size = 0x4, offset = 0x4, fixed_abs, tag = 'smem constant byte address 0x4 - core index']
  #allocation1 [shape = 'u32[144,128]{1,0:T(1,128)}', space=vmem, size = 0x12000, scoped, tag = 'internal scratch']
  %s0 = inlined_call_operand.vmem [shape: f32[2,960,200], index: 0, kind: input, shape index: {}]
  %s1 = inlined_call_operand.vmem [shape: bf16[512,960], index: 1, kind: input, shape index: {}]
  %s2 = inlined_call_operand.vmem [shape: bf16[256,512], index: 2, kind: input, shape index: {}]
  %s3 = inlined_call_operand.vmem [shape: bf16[128,256], index: 3, kind: input, shape index: {}]
  %s4 = inlined_call_operand.vmem [shape: bf16[8,128], index: 4, kind: input, shape index: {}]
  %s5 = inlined_call_operand.vmem [shape: f32[512,1], index: 5, kind: input, shape index: {}]
  %s6 = inlined_call_operand.vmem [shape: f32[256,1], index: 6, kind: input, shape index: {}]
  %s7 = inlined_call_operand.vmem [shape: f32[128,1], index: 7, kind: input, shape index: {}]
  %s8 = inlined_call_operand.vmem [shape: f32[8,1], index: 8, kind: input, shape index: {}]
  %s9 = inlined_call_operand.vmem [shape: f32[2,3,200], index: 9, kind: output, shape index: {}]
  %s10 = sld [smem:[#allocation0]]
  $region107: #{rot_green_forward.1} parent=0
    _
  %s12 = ssub.s32 1, %s10
  %s13 = scalar_select 0, %s12, %s10
  $region1: #{rot_green_forward.1} parent=0
    #allocation2 [shape = 'u8[983040]{0}', space=vmem, size = 0xf0000, scoped, tag = 'input window, operand 0']
    loop: start=0, step=1, limit=6
    $region2: #{rot_green_forward.1} parent=1 // loop_pre_header
      _
    $region3: #{rot_green_forward.1} parent=1 // loop_header
      %s15 = sphi 0, %s19
      %p16 = scmp.ge.s32.totalorder %s15, 6
      %s22 = sphi 0, %s34
      %s23 = sphi 0, %s30
      %s24 = sphi 0, %s22
      %s25 = sphi 0, %s23
      %s26 = sphi 0, %s24
      %s27 = sphi 0, %s25
      %s39 = sphi 0, %s41
      %s42 = sphi 0, %s39
      %s43 = sphi 0, %s42
      %s59 = sphi 0, %s43
      %s63 = sphi 0, %s63
      %s65 = sphi 0, %s63
      %s66 = sphi 0, %s65
      %s80 = sphi 0, %s66
      %s84 = sphi 0, %s84
      %s86 = sphi 0, %s84
      %s87 = sphi 0, %s86
      %s101 = sphi 0, %s87
      %s105 = sphi 0, %s105
      %s107 = sphi 0, %s105
      %s108 = sphi 0, %s107
      %s122 = sphi 0, %s108
      %s126 = sphi 0, %s126
      %s128 = sphi 0, %s126
      %s129 = sphi 0, %s128
      %s143 = sphi 0, %s129
      %s147 = sphi 0, %s147
      %s149 = sphi 0, %s147
      %s150 = sphi 0, %s149
      %s164 = sphi 0, %s150
      %s168 = sphi 0, %s168
      %s170 = sphi 0, %s168
      %s171 = sphi 0, %s170
      %s185 = sphi 0, %s171
      %s189 = sphi 0, %s189
      %s191 = sphi 0, %s189
      %s192 = sphi 0, %s191
      %s206 = sphi 0, %s192
      %s210 = sphi 0, %s210
      %s212 = sphi 0, %s210
      %s213 = sphi 0, %s212
      %s227 = sphi 0, %s213
      %s235 = sphi 0, %s237
      %s238 = sphi 0, %s235
      %s239 = sphi 0, %s238
      %s255 = sphi 0, %s239
    $region4: #{rot_green_forward.1} parent=1 // loop_header_branch
      %18 = sbr.rel (%p16) target = $region8
    $region5: #{rot_green_forward.1} parent=1 // loop_body
      %s20 = ssub.s32 %s15, 1
      %s21 = ssub.s32 %s15, 2
      %s28 = sadd.s32 1, %s23
      %p29 = scmp.ge.s32.totalorder %s28, 2
      %s30 = scalar_select %p29, 0, %s28
      %s31 = sadd.s32 1, %s22
      %s32 = scalar_select %p29, %s31, %s22
      %p33 = scmp.ge.s32.totalorder %s32, 2
      %s34 = scalar_select %p33, 0, %s32
      %s35 = ssub.s32 %s22, %s34
      %s36 = ssub.s32 %s23, %s30
      %s37 = sor.u32 %s35, %s36
      %p38 = scmp.eq.s32.totalorder %s37, 0
      %s40 = sadd.s32 %s39, 1
      %s41 = scalar_select %p38, %s39, %s40
      %p44 = pneg %p38
      %p45 = scmp.eq.s32.totalorder %s15, 3
      %p46 = por %p44, %p45
      %p47 = scmp.ne.s32.totalorder %s39, %s42
      %p48 = scmp.eq.s32.totalorder %s15, 0
      %p49 = por %p47, %p48
      %p50 = scmp.ne.s32.totalorder %s39, %s42
      %p51 = scmp.eq.s32.totalorder %s20, 3
      %p52 = por %p50, %p51
      %p53 = scmp.ne.s32.totalorder %s42, %s43
      %p54 = scmp.eq.s32.totalorder %s20, 0
      %p55 = por %p53, %p54
      %p56 = scmp.ne.s32.totalorder %s42, %s43
      %p57 = scmp.eq.s32.totalorder %s21, 3
      %p58 = por %p56, %p57
      %p60 = scmp.ne.s32.totalorder %s43, %s59
      %p61 = scmp.eq.s32.totalorder %s21, 0
      %p62 = por %p60, %p61
      %s64 = sadd.s32 %s63, 1
      %p67 = scmp.eq.s32.totalorder %s15, 3
      %p68 = scmp.ne.s32.totalorder %s63, %s65
      %p69 = scmp.eq.s32.totalorder %s15, 0
      %p70 = por %p68, %p69
      %p71 = scmp.ne.s32.totalorder %s63, %s65
      %p72 = scmp.eq.s32.totalorder %s20, 3
      %p73 = por %p71, %p72
      %p74 = scmp.ne.s32.totalorder %s65, %s66
      %p75 = scmp.eq.s32.totalorder %s20, 0
      %p76 = por %p74, %p75
      %p77 = scmp.ne.s32.totalorder %s65, %s66
      %p78 = scmp.eq.s32.totalorder %s21, 3
      %p79 = por %p77, %p78
      %p81 = scmp.ne.s32.totalorder %s66, %s80
      %p82 = scmp.eq.s32.totalorder %s21, 0
      %p83 = por %p81, %p82
      %s85 = sadd.s32 %s84, 1
      %p88 = scmp.eq.s32.totalorder %s15, 3
      %p89 = scmp.ne.s32.totalorder %s84, %s86
      %p90 = scmp.eq.s32.totalorder %s15, 0
      %p91 = por %p89, %p90
      %p92 = scmp.ne.s32.totalorder %s84, %s86
      %p93 = scmp.eq.s32.totalorder %s20, 3
      %p94 = por %p92, %p93
      %p95 = scmp.ne.s32.totalorder %s86, %s87
      %p96 = scmp.eq.s32.totalorder %s20, 0
      %p97 = por %p95, %p96
      %p98 = scmp.ne.s32.totalorder %s86, %s87
      %p99 = scmp.eq.s32.totalorder %s21, 3
      %p100 = por %p98, %p99
      %p102 = scmp.ne.s32.totalorder %s87, %s101
      %p103 = scmp.eq.s32.totalorder %s21, 0
      %p104 = por %p102, %p103
      %s106 = sadd.s32 %s105, 1
      %p109 = scmp.eq.s32.totalorder %s15, 3
      %p110 = scmp.ne.s32.totalorder %s105, %s107
      %p111 = scmp.eq.s32.totalorder %s15, 0
      %p112 = por %p110, %p111
      %p113 = scmp.ne.s32.totalorder %s105, %s107
      %p114 = scmp.eq.s32.totalorder %s20, 3
      %p115 = por %p113, %p114
      %p116 = scmp.ne.s32.totalorder %s107, %s108
      %p117 = scmp.eq.s32.totalorder %s20, 0
      %p118 = por %p116, %p117
      %p119 = scmp.ne.s32.totalorder %s107, %s108
      %p120 = scmp.eq.s32.totalorder %s21, 3
      %p121 = por %p119, %p120
      %p123 = scmp.ne.s32.totalorder %s108, %s122
      %p124 = scmp.eq.s32.totalorder %s21, 0
      %p125 = por %p123, %p124
      %s127 = sadd.s32 %s126, 1
      %p130 = scmp.eq.s32.totalorder %s15, 3
      %p131 = scmp.ne.s32.totalorder %s126, %s128
      %p132 = scmp.eq.s32.totalorder %s15, 0
      %p133 = por %p131, %p132
      %p134 = scmp.ne.s32.totalorder %s126, %s128
      %p135 = scmp.eq.s32.totalorder %s20, 3
      %p136 = por %p134, %p135
      %p137 = scmp.ne.s32.totalorder %s128, %s129
      %p138 = scmp.eq.s32.totalorder %s20, 0
      %p139 = por %p137, %p138
      %p140 = scmp.ne.s32.totalorder %s128, %s129
      %p141 = scmp.eq.s32.totalorder %s21, 3
      %p142 = por %p140, %p141
      %p144 = scmp.ne.s32.totalorder %s129, %s143
      %p145 = scmp.eq.s32.totalorder %s21, 0
      %p146 = por %p144, %p145
      %s148 = sadd.s32 %s147, 1
      %p151 = scmp.eq.s32.totalorder %s15, 3
      %p152 = scmp.ne.s32.totalorder %s147, %s149
      %p153 = scmp.eq.s32.totalorder %s15, 0
      %p154 = por %p152, %p153
      %p155 = scmp.ne.s32.totalorder %s147, %s149
      %p156 = scmp.eq.s32.totalorder %s20, 3
      %p157 = por %p155, %p156
      %p158 = scmp.ne.s32.totalorder %s149, %s150
      %p159 = scmp.eq.s32.totalorder %s20, 0
      %p160 = por %p158, %p159
      %p161 = scmp.ne.s32.totalorder %s149, %s150
      %p162 = scmp.eq.s32.totalorder %s21, 3
      %p163 = por %p161, %p162
      %p165 = scmp.ne.s32.totalorder %s150, %s164
      %p166 = scmp.eq.s32.totalorder %s21, 0
      %p167 = por %p165, %p166
      %s169 = sadd.s32 %s168, 1
      %p172 = scmp.eq.s32.totalorder %s15, 3
      %p173 = scmp.ne.s32.totalorder %s168, %s170
      %p174 = scmp.eq.s32.totalorder %s15, 0
      %p175 = por %p173, %p174
      %p176 = scmp.ne.s32.totalorder %s168, %s170
      %p177 = scmp.eq.s32.totalorder %s20, 3
      %p178 = por %p176, %p177
      %p179 = scmp.ne.s32.totalorder %s170, %s171
      %p180 = scmp.eq.s32.totalorder %s20, 0
      %p181 = por %p179, %p180
      %p182 = scmp.ne.s32.totalorder %s170, %s171
      %p183 = scmp.eq.s32.totalorder %s21, 3
      %p184 = por %p182, %p183
      %p186 = scmp.ne.s32.totalorder %s171, %s185
      %p187 = scmp.eq.s32.totalorder %s21, 0
      %p188 = por %p186, %p187
      %s190 = sadd.s32 %s189, 1
      %p193 = scmp.eq.s32.totalorder %s15, 3
      %p194 = scmp.ne.s32.totalorder %s189, %s191
      %p195 = scmp.eq.s32.totalorder %s15, 0
      %p196 = por %p194, %p195
      %p197 = scmp.ne.s32.totalorder %s189, %s191
      %p198 = scmp.eq.s32.totalorder %s20, 3
      %p199 = por %p197, %p198
      %p200 = scmp.ne.s32.totalorder %s191, %s192
      %p201 = scmp.eq.s32.totalorder %s20, 0
      %p202 = por %p200, %p201
      %p203 = scmp.ne.s32.totalorder %s191, %s192
      %p204 = scmp.eq.s32.totalorder %s21, 3
      %p205 = por %p203, %p204
      %p207 = scmp.ne.s32.totalorder %s192, %s206
      %p208 = scmp.eq.s32.totalorder %s21, 0
      %p209 = por %p207, %p208
      %s211 = sadd.s32 %s210, 1
      %p214 = scmp.eq.s32.totalorder %s15, 3
      %p215 = scmp.ne.s32.totalorder %s210, %s212
      %p216 = scmp.eq.s32.totalorder %s15, 0
      %p217 = por %p215, %p216
      %p218 = scmp.ne.s32.totalorder %s210, %s212
      %p219 = scmp.eq.s32.totalorder %s20, 3
      %p220 = por %p218, %p219
      %p221 = scmp.ne.s32.totalorder %s212, %s213
      %p222 = scmp.eq.s32.totalorder %s20, 0
      %p223 = por %p221, %p222
      %p224 = scmp.ne.s32.totalorder %s212, %s213
      %p225 = scmp.eq.s32.totalorder %s21, 3
      %p226 = por %p224, %p225
      %p228 = scmp.ne.s32.totalorder %s213, %s227
      %p229 = scmp.eq.s32.totalorder %s21, 0
      %p230 = por %p228, %p229
      %s231 = ssub.s32 %s22, %s34
      %s232 = ssub.s32 %s23, %s30
      %s233 = sor.u32 %s231, %s232
      %p234 = scmp.eq.s32.totalorder %s233, 0
      %s236 = sadd.s32 %s235, 1
      %s237 = scalar_select %p234, %s235, %s236
      %p240 = pneg %p234
      %p241 = scmp.eq.s32.totalorder %s15, 3
      %p242 = por %p240, %p241
      %p243 = scmp.ne.s32.totalorder %s235, %s238
      %p244 = scmp.eq.s32.totalorder %s15, 0
      %p245 = por %p243, %p244
      %p246 = scmp.ne.s32.totalorder %s235, %s238
      %p247 = scmp.eq.s32.totalorder %s20, 3
      %p248 = por %p246, %p247
      %p249 = scmp.ne.s32.totalorder %s238, %s239
      %p250 = scmp.eq.s32.totalorder %s20, 0
      %p251 = por %p249, %p250
      %p252 = scmp.ne.s32.totalorder %s238, %s239
      %p253 = scmp.eq.s32.totalorder %s21, 3
      %p254 = por %p252, %p253
      %p256 = scmp.ne.s32.totalorder %s239, %s255
      %p257 = scmp.eq.s32.totalorder %s21, 0
      %p258 = por %p256, %p257
      %p259 = scmp.le.s32.totalorder 1, %s15
      %p260 = scmp.lt.s32.totalorder %s15, 5
      %p261 = pnand %p259, %p260
      %p262 = pneg %p261
      // Predicated region
      $region9: #{rot_green_forward.1} parent=5 // pred_check
        _
      $region10: #{rot_green_forward.1} parent=5 // pred_check_branch
        %264 = sbr.rel (%p261) target = $region12
      $region11: #{rot_green_forward.1} parent=5 // pred_region
        %s265 = ssub.s32 %s15, 1
        // Predicated region
        $region13: #{rot_green_forward.1} parent=11 // pred_check
          %p266 = pneg %p76
        $region14: #{rot_green_forward.1} parent=11 // pred_check_branch
          %268 = sbr.rel (%p266) target = $region16
        $region15: #{rot_green_forward.1} parent=11 // pred_region
          _
        $region16: #{rot_green_forward.1} parent=11 // pred_fallthru
          _
        // Predicated region
        $region17: #{rot_green_forward.1} parent=11 // pred_check
          %p269 = pneg %p97
        $region18: #{rot_green_forward.1} parent=11 // pred_check_branch
          %271 = sbr.rel (%p269) target = $region20
        $region19: #{rot_green_forward.1} parent=11 // pred_region
          _
        $region20: #{rot_green_forward.1} parent=11 // pred_fallthru
          _
        // Predicated region
        $region21: #{rot_green_forward.1} parent=11 // pred_check
          %p272 = pneg %p118
        $region22: #{rot_green_forward.1} parent=11 // pred_check_branch
          %274 = sbr.rel (%p272) target = $region24
        $region23: #{rot_green_forward.1} parent=11 // pred_region
          _
        $region24: #{rot_green_forward.1} parent=11 // pred_fallthru
          _
        // Predicated region
        $region25: #{rot_green_forward.1} parent=11 // pred_check
          %p275 = pneg %p139
        $region26: #{rot_green_forward.1} parent=11 // pred_check_branch
          %277 = sbr.rel (%p275) target = $region28
        $region27: #{rot_green_forward.1} parent=11 // pred_region
          _
        $region28: #{rot_green_forward.1} parent=11 // pred_fallthru
          _
        // Predicated region
        $region29: #{rot_green_forward.1} parent=11 // pred_check
          %p278 = pneg %p160
        $region30: #{rot_green_forward.1} parent=11 // pred_check_branch
          %280 = sbr.rel (%p278) target = $region32
        $region31: #{rot_green_forward.1} parent=11 // pred_region
          _
        $region32: #{rot_green_forward.1} parent=11 // pred_fallthru
          _
        // Predicated region
        $region33: #{rot_green_forward.1} parent=11 // pred_check
          %p281 = pneg %p181
        $region34: #{rot_green_forward.1} parent=11 // pred_check_branch
          %283 = sbr.rel (%p281) target = $region36
        $region35: #{rot_green_forward.1} parent=11 // pred_region
          _
        $region36: #{rot_green_forward.1} parent=11 // pred_fallthru
          _
        // Predicated region
        $region37: #{rot_green_forward.1} parent=11 // pred_check
          %p284 = pneg %p202
        $region38: #{rot_green_forward.1} parent=11 // pred_check_branch
          %286 = sbr.rel (%p284) target = $region40
        $region39: #{rot_green_forward.1} parent=11 // pred_region
          _
        $region40: #{rot_green_forward.1} parent=11 // pred_fallthru
          _
        // Predicated region
        $region41: #{rot_green_forward.1} parent=11 // pred_check
          %p287 = pneg %p223
        $region42: #{rot_green_forward.1} parent=11 // pred_check_branch
          %289 = sbr.rel (%p287) target = $region44
        $region43: #{rot_green_forward.1} parent=11 // pred_region
          _
        $region44: #{rot_green_forward.1} parent=11 // pred_fallthru
          _
      $region12: #{rot_green_forward.1} parent=5 // pred_fallthru
        _
      %p290 = scmp.lt.s32.totalorder %s15, 4
      // Predicated region
      $region45: #{rot_green_forward.1} parent=5 // pred_check
        %p291 = pneg %p290
      $region46: #{rot_green_forward.1} parent=5 // pred_check_branch
        %293 = sbr.rel (%p291) target = $region48
      $region47: #{rot_green_forward.1} parent=5 // pred_region
        // Predicated region
        $region49: #{rot_green_forward.1} parent=47 // pred_check
          %p294 = pneg %p49
        $region50: #{rot_green_forward.1} parent=47 // pred_check_branch
          %296 = sbr.rel (%p294) target = $region52
        $region51: #{rot_green_forward.1} parent=47 // pred_region
          %s297 = sand.u32 %s39, 1
          %s298 = sand.u32 %s39, 1
          %s299 = smul.addr %s298, 960
          %s300 = scalar_lea.vmem [#allocation2], %s299
          %s301 = smul.addr %s22, 240
          %s302 = sadd.s32 %s23, %s301
          %s303 = smul.addr %s302, 8
          %s304 = scalar_lea.vmem %s0, %s303
          // Predicated region
          $region53: #{rot_green_forward.1} parent=51 // pred_check
            _
          $region54: #{rot_green_forward.1} parent=51 // pred_check_branch
            %306 = sbr.rel (0) target = $region56
          $region55: #{rot_green_forward.1} parent=51 // pred_region
            // Predicated region
            $region57: #{rot_green_forward.1} parent=55 // pred_check
              _
            $region58: #{rot_green_forward.1} parent=55 // pred_check_branch
              %308 = sbr.rel (0) target = $region60
            $region59: #{rot_green_forward.1} parent=55 // pred_region
              // Predicated region
              $region72: #{rot_green_forward.1} parent=59 // pred_check
                _
              $region73: #{rot_green_forward.1} parent=59 // pred_check_branch
                %561 = sbr.rel (0) target = $region75
              $region74: #{rot_green_forward.1} parent=59 // pred_region
                loop: start=0, step=1, limit=1
                $region76: #{rot_green_forward.1} parent=74 // loop_pre_header
                  _
                $region77: #{rot_green_forward.1} parent=74 // loop_header
                  %s563 = sphi 0, %s567
                  %p564 = scmp.ge.s32.totalorder %s563, 1
                  %s568 = sphi %s304, %s304
                  %s569 = sphi %s300, %s300
                $region78: #{rot_green_forward.1} parent=74 // loop_header_branch
                  %566 = sbr.rel (%p564) target = $region82
                $region79: #{rot_green_forward.1} parent=74 // loop_body
                  %v570 = vld [vmem:[%s568] sm:$0xff]
                  %571 = vst [vmem:[%s569] sm:$0xff] %v570
                  %v572 = vld [vmem:[%s568 + $0x10] sm:$0xff]
                  %573 = vst [vmem:[%s569 + $0x8] sm:$0xff] %v572
                  %v574 = vld [vmem:[%s568 + $0x20] sm:$0xff]
                  %575 = vst [vmem:[%s569 + $0x10] sm:$0xff] %v574
                  %v576 = vld [vmem:[%s568 + $0x30] sm:$0xff]
                  %577 = vst [vmem:[%s569 + $0x18] sm:$0xff] %v576
                  %v578 = vld [vmem:[%s568 + $0x40] sm:$0xff]
                  %579 = vst [vmem:[%s569 + $0x20] sm:$0xff] %v578
                  %v580 = vld [vmem:[%s568 + $0x50] sm:$0xff]
                  %581 = vst [vmem:[%s569 + $0x28] sm:$0xff] %v580
                  %v582 = vld [vmem:[%s568 + $0x60] sm:$0xff]
                  %583 = vst [vmem:[%s569 + $0x30] sm:$0xff] %v582
                  %v584 = vld [vmem:[%s568 + $0x70] sm:$0xff]
                  %585 = vst [vmem:[%s569 + $0x38] sm:$0xff] %v584
                  %v586 = vld [vmem:[%s568 + $0x80] sm:$0xff]
                  %587 = vst [vmem:[%s569 + $0x40] sm:$0xff] %v586
                  %v588 = vld [vmem:[%s568 + $0x90] sm:$0xff]
                  %589 = vst [vmem:[%s569 + $0x48] sm:$0xff] %v588
                  %v590 = vld [vmem:[%s568 + $0xa0] sm:$0xff]
                  %591 = vst [vmem:[%s569 + $0x50] sm:$0xff] %v590
                  %v592 = vld [vmem:[%s568 + $0xb0] sm:$0xff]
                  %593 = vst [vmem:[%s569 + $0x58] sm:$0xff] %v592
                  %v594 = vld [vmem:[%s568 + $0xc0] sm:$0xff]
                  %595 = vst [vmem:[%s569 + $0x60] sm:$0xff] %v594
                  %v596 = vld [vmem:[%s568 + $0xd0] sm:$0xff]
                  %597 = vst [vmem:[%s569 + $0x68] sm:$0xff] %v596
                  %v598 = vld [vmem:[%s568 + $0xe0] sm:$0xff]
                  %599 = vst [vmem:[%s569 + $0x70] sm:$0xff] %v598
                  %v600 = vld [vmem:[%s568 + $0xf0] sm:$0xff]
                  %601 = vst [vmem:[%s569 + $0x78] sm:$0xff] %v600
                  %v602 = vld [vmem:[%s568 + $0x100] sm:$0xff]
                  %603 = vst [vmem:[%s569 + $0x80] sm:$0xff] %v602
                  %v604 = vld [vmem:[%s568 + $0x110] sm:$0xff]
                  %605 = vst [vmem:[%s569 + $0x88] sm:$0xff] %v604
                  %v606 = vld [vmem:[%s568 + $0x120] sm:$0xff]
                  %607 = vst [vmem:[%s569 + $0x90] sm:$0xff] %v606
                  %v608 = vld [vmem:[%s568 + $0x130] sm:$0xff]
                  %609 = vst [vmem:[%s569 + $0x98] sm:$0xff] %v608
                  %v610 = vld [vmem:[%s568 + $0x140] sm:$0xff]
                  %611 = vst [vmem:[%s569 + $0xa0] sm:$0xff] %v610
                  %v612 = vld [vmem:[%s568 + $0x150] sm:$0xff]
                  %613 = vst [vmem:[%s569 + $0xa8] sm:$0xff] %v612
                  %v614 = vld [vmem:[%s568 + $0x160] sm:$0xff]
                  %615 = vst [vmem:[%s569 + $0xb0] sm:$0xff] %v614
                  %v616 = vld [vmem:[%s568 + $0x170] sm:$0xff]
                  %617 = vst [vmem:[%s569 + $0xb8] sm:$0xff] %v616
                  %v618 = vld [vmem:[%s568 + $0x180] sm:$0xff]
                  %619 = vst [vmem:[%s569 + $0xc0] sm:$0xff] %v618
                  %v620 = vld [vmem:[%s568 + $0x190] sm:$0xff]
                  %621 = vst [vmem:[%s569 + $0xc8] sm:$0xff] %v620
                  %v622 = vld [vmem:[%s568 + $0x1a0] sm:$0xff]
                  %623 = vst [vmem:[%s569 + $0xd0] sm:$0xff] %v622
                  %v624 = vld [vmem:[%s568 + $0x1b0] sm:$0xff]
                  %625 = vst [vmem:[%s569 + $0xd8] sm:$0xff] %v624
                  %v626 = vld [vmem:[%s568 + $0x1c0] sm:$0xff]
                  %627 = vst [vmem:[%s569 + $0xe0] sm:$0xff] %v626
                  %v628 = vld [vmem:[%s568 + $0x1d0] sm:$0xff]
                  %629 = vst [vmem:[%s569 + $0xe8] sm:$0xff] %v628
                  %v630 = vld [vmem:[%s568 + $0x1e0] sm:$0xff]
                  %631 = vst [vmem:[%s569 + $0xf0] sm:$0xff] %v630
                  %v632 = vld [vmem:[%s568 + $0x1f0] sm:$0xff]
                  %633 = vst [vmem:[%s569 + $0xf8] sm:$0xff] %v632
                  %v634 = vld [vmem:[%s568 + $0x200] sm:$0xff]
                  %635 = vst [vmem:[%s569 + $0x100] sm:$0xff] %v634
                  %v636 = vld [vmem:[%s568 + $0x210] sm:$0xff]
                  %637 = vst [vmem:[%s569 + $0x108] sm:$0xff] %v636
                  %v638 = vld [vmem:[%s568 + $0x220] sm:$0xff]
                  %639 = vst [vmem:[%s569 + $0x110] sm:$0xff] %v638
                  %v640 = vld [vmem:[%s568 + $0x230] sm:$0xff]
                  %641 = vst [vmem:[%s569 + $0x118] sm:$0xff] %v640
                  %v642 = vld [vmem:[%s568 + $0x240] sm:$0xff]
                  %643 = vst [vmem:[%s569 + $0x120] sm:$0xff] %v642
                  %v644 = vld [vmem:[%s568 + $0x250] sm:$0xff]
                  %645 = vst [vmem:[%s569 + $0x128] sm:$0xff] %v644
                  %v646 = vld [vmem:[%s568 + $0x260] sm:$0xff]
                  %647 = vst [vmem:[%s569 + $0x130] sm:$0xff] %v646
                  %v648 = vld [vmem:[%s568 + $0x270] sm:$0xff]
                  %649 = vst [vmem:[%s569 + $0x138] sm:$0xff] %v648
                  %v650 = vld [vmem:[%s568 + $0x280] sm:$0xff]
                  %651 = vst [vmem:[%s569 + $0x140] sm:$0xff] %v650
                  %v652 = vld [vmem:[%s568 + $0x290] sm:$0xff]
                  %653 = vst [vmem:[%s569 + $0x148] sm:$0xff] %v652
                  %v654 = vld [vmem:[%s568 + $0x2a0] sm:$0xff]
                  %655 = vst [vmem:[%s569 + $0x150] sm:$0xff] %v654
                  %v656 = vld [vmem:[%s568 + $0x2b0] sm:$0xff]
                  %657 = vst [vmem:[%s569 + $0x158] sm:$0xff] %v656
                  %v658 = vld [vmem:[%s568 + $0x2c0] sm:$0xff]
                  %659 = vst [vmem:[%s569 + $0x160] sm:$0xff] %v658
                  %v660 = vld [vmem:[%s568 + $0x2d0] sm:$0xff]
                  %661 = vst [vmem:[%s569 + $0x168] sm:$0xff] %v660
                  %v662 = vld [vmem:[%s568 + $0x2e0] sm:$0xff]
                  %663 = vst [vmem:[%s569 + $0x170] sm:$0xff] %v662
                  %v664 = vld [vmem:[%s568 + $0x2f0] sm:$0xff]
                  %665 = vst [vmem:[%s569 + $0x178] sm:$0xff] %v664
                  %v666 = vld [vmem:[%s568 + $0x300] sm:$0xff]
                  %667 = vst [vmem:[%s569 + $0x180] sm:$0xff] %v666
                  %v668 = vld [vmem:[%s568 + $0x310] sm:$0xff]
                  %669 = vst [vmem:[%s569 + $0x188] sm:$0xff] %v668
                  %v670 = vld [vmem:[%s568 + $0x320] sm:$0xff]
                  %671 = vst [vmem:[%s569 + $0x190] sm:$0xff] %v670
                  %v672 = vld [vmem:[%s568 + $0x330] sm:$0xff]
                  %673 = vst [vmem:[%s569 + $0x198] sm:$0xff] %v672
                  %v674 = vld [vmem:[%s568 + $0x340] sm:$0xff]
                  %675 = vst [vmem:[%s569 + $0x1a0] sm:$0xff] %v674
                  %v676 = vld [vmem:[%s568 + $0x350] sm:$0xff]
                  %677 = vst [vmem:[%s569 + $0x1a8] sm:$0xff] %v676
                  %v678 = vld [vmem:[%s568 + $0x360] sm:$0xff]
                  %679 = vst [vmem:[%s569 + $0x1b0] sm:$0xff] %v678
                  %v680 = vld [vmem:[%s568 + $0x370] sm:$0xff]
                  %681 = vst [vmem:[%s569 + $0x1b8] sm:$0xff] %v680
                  %v682 = vld [vmem:[%s568 + $0x380] sm:$0xff]
                  %683 = vst [vmem:[%s569 + $0x1c0] sm:$0xff] %v682
                  %v684 = vld [vmem:[%s568 + $0x390] sm:$0xff]
                  %685 = vst [vmem:[%s569 + $0x1c8] sm:$0xff] %v684
                  %v686 = vld [vmem:[%s568 + $0x3a0] sm:$0xff]
                  %687 = vst [vmem:[%s569 + $0x1d0] sm:$0xff] %v686
                  %v688 = vld [vmem:[%s568 + $0x3b0] sm:$0xff]
                  %689 = vst [vmem:[%s569 + $0x1d8] sm:$0xff] %v688
                  %v690 = vld [vmem:[%s568 + $0x3c0] sm:$0xff]
                  %691 = vst [vmem:[%s569 + $0x1e0] sm:$0xff] %v690
                  %v692 = vld [vmem:[%s568 + $0x3d0] sm:$0xff]
                  %693 = vst [vmem:[%s569 + $0x1e8] sm:$0xff] %v692
                  %v694 = vld [vmem:[%s568 + $0x3e0] sm:$0xff]
                  %695 = vst [vmem:[%s569 + $0x1f0] sm:$0xff] %v694
                  %v696 = vld [vmem:[%s568 + $0x3f0] sm:$0xff]
                  %697 = vst [vmem:[%s569 + $0x1f8] sm:$0xff] %v696
                  %v698 = vld [vmem:[%s568 + $0x400] sm:$0xff]
                  %699 = vst [vmem:[%s569 + $0x200] sm:$0xff] %v698
                  %v700 = vld [vmem:[%s568 + $0x410] sm:$0xff]
                  %701 = vst [vmem:[%s569 + $0x208] sm:$0xff] %v700
                  %v702 = vld [vmem:[%s568 + $0x420] sm:$0xff]
                  %703 = vst [vmem:[%s569 + $0x210] sm:$0xff] %v702
                  %v704 = vld [vmem:[%s568 + $0x430] sm:$0xff]
                  %705 = vst [vmem:[%s569 + $0x218] sm:$0xff] %v704
                  %v706 = vld [vmem:[%s568 + $0x440] sm:$0xff]
                  %707 = vst [vmem:[%s569 + $0x220] sm:$0xff] %v706
                  %v708 = vld [vmem:[%s568 + $0x450] sm:$0xff]
                  %709 = vst [vmem:[%s569 + $0x228] sm:$0xff] %v708
                  %v710 = vld [vmem:[%s568 + $0x460] sm:$0xff]
                  %711 = vst [vmem:[%s569 + $0x230] sm:$0xff] %v710
                  %v712 = vld [vmem:[%s568 + $0x470] sm:$0xff]
                  %713 = vst [vmem:[%s569 + $0x238] sm:$0xff] %v712
                  %v714 = vld [vmem:[%s568 + $0x480] sm:$0xff]
                  %715 = vst [vmem:[%s569 + $0x240] sm:$0xff] %v714
                  %v716 = vld [vmem:[%s568 + $0x490] sm:$0xff]
                  %717 = vst [vmem:[%s569 + $0x248] sm:$0xff] %v716
                  %v718 = vld [vmem:[%s568 + $0x4a0] sm:$0xff]
                  %719 = vst [vmem:[%s569 + $0x250] sm:$0xff] %v718
                  %v720 = vld [vmem:[%s568 + $0x4b0] sm:$0xff]
                  %721 = vst [vmem:[%s569 + $0x258] sm:$0xff] %v720
                  %v722 = vld [vmem:[%s568 + $0x4c0] sm:$0xff]
                  %723 = vst [vmem:[%s569 + $0x260] sm:$0xff] %v722
                  %v724 = vld [vmem:[%s568 + $0x4d0] sm:$0xff]
                  %725 = vst [vmem:[%s569 + $0x268] sm:$0xff] %v724
                  %v726 = vld [vmem:[%s568 + $0x4e0] sm:$0xff]
                  %727 = vst [vmem:[%s569 + $0x270] sm:$0xff] %v726
                  %v728 = vld [vmem:[%s568 + $0x4f0] sm:$0xff]
                  %729 = vst [vmem:[%s569 + $0x278] sm:$0xff] %v728
                  %v730 = vld [vmem:[%s568 + $0x500] sm:$0xff]
                  %731 = vst [vmem:[%s569 + $0x280] sm:$0xff] %v730
                  %v732 = vld [vmem:[%s568 + $0x510] sm:$0xff]
                  %733 = vst [vmem:[%s569 + $0x288] sm:$0xff] %v732
                  %v734 = vld [vmem:[%s568 + $0x520] sm:$0xff]
                  %735 = vst [vmem:[%s569 + $0x290] sm:$0xff] %v734
                  %v736 = vld [vmem:[%s568 + $0x530] sm:$0xff]
                  %737 = vst [vmem:[%s569 + $0x298] sm:$0xff] %v736
                  %v738 = vld [vmem:[%s568 + $0x540] sm:$0xff]
                  %739 = vst [vmem:[%s569 + $0x2a0] sm:$0xff] %v738
                  %v740 = vld [vmem:[%s568 + $0x550] sm:$0xff]
                  %741 = vst [vmem:[%s569 + $0x2a8] sm:$0xff] %v740
                  %v742 = vld [vmem:[%s568 + $0x560] sm:$0xff]
                  %743 = vst [vmem:[%s569 + $0x2b0] sm:$0xff] %v742
                  %v744 = vld [vmem:[%s568 + $0x570] sm:$0xff]
                  %745 = vst [vmem:[%s569 + $0x2b8] sm:$0xff] %v744
                  %v746 = vld [vmem:[%s568 + $0x580] sm:$0xff]
                  %747 = vst [vmem:[%s569 + $0x2c0] sm:$0xff] %v746
                  %v748 = vld [vmem:[%s568 + $0x590] sm:$0xff]
                  %749 = vst [vmem:[%s569 + $0x2c8] sm:$0xff] %v748
                  %v750 = vld [vmem:[%s568 + $0x5a0] sm:$0xff]
                  %751 = vst [vmem:[%s569 + $0x2d0] sm:$0xff] %v750
                  %v752 = vld [vmem:[%s568 + $0x5b0] sm:$0xff]
                  %753 = vst [vmem:[%s569 + $0x2d8] sm:$0xff] %v752
                  %v754 = vld [vmem:[%s568 + $0x5c0] sm:$0xff]
                  %755 = vst [vmem:[%s569 + $0x2e0] sm:$0xff] %v754
                  %v756 = vld [vmem:[%s568 + $0x5d0] sm:$0xff]
                  %757 = vst [vmem:[%s569 + $0x2e8] sm:$0xff] %v756
                  %v758 = vld [vmem:[%s568 + $0x5e0] sm:$0xff]
                  %759 = vst [vmem:[%s569 + $0x2f0] sm:$0xff] %v758
                  %v760 = vld [vmem:[%s568 + $0x5f0] sm:$0xff]
                  %761 = vst [vmem:[%s569 + $0x2f8] sm:$0xff] %v760
                  %v762 = vld [vmem:[%s568 + $0x600] sm:$0xff]
                  %763 = vst [vmem:[%s569 + $0x300] sm:$0xff] %v762
                  %v764 = vld [vmem:[%s568 + $0x610] sm:$0xff]
                  %765 = vst [vmem:[%s569 + $0x308] sm:$0xff] %v764
                  %v766 = vld [vmem:[%s568 + $0x620] sm:$0xff]
                  %767 = vst [vmem:[%s569 + $0x310] sm:$0xff] %v766
                  %v768 = vld [vmem:[%s568 + $0x630] sm:$0xff]
                  %769 = vst [vmem:[%s569 + $0x318] sm:$0xff] %v768
                  %v770 = vld [vmem:[%s568 + $0x640] sm:$0xff]
                  %771 = vst [vmem:[%s569 + $0x320] sm:$0xff] %v770
                  %v772 = vld [vmem:[%s568 + $0x650] sm:$0xff]
                  %773 = vst [vmem:[%s569 + $0x328] sm:$0xff] %v772
                  %v774 = vld [vmem:[%s568 + $0x660] sm:$0xff]
                  %775 = vst [vmem:[%s569 + $0x330] sm:$0xff] %v774
                  %v776 = vld [vmem:[%s568 + $0x670] sm:$0xff]
                  %777 = vst [vmem:[%s569 + $0x338] sm:$0xff] %v776
                  %v778 = vld [vmem:[%s568 + $0x680] sm:$0xff]
                  %779 = vst [vmem:[%s569 + $0x340] sm:$0xff] %v778
                  %v780 = vld [vmem:[%s568 + $0x690] sm:$0xff]
                  %781 = vst [vmem:[%s569 + $0x348] sm:$0xff] %v780
                  %v782 = vld [vmem:[%s568 + $0x6a0] sm:$0xff]
                  %783 = vst [vmem:[%s569 + $0x350] sm:$0xff] %v782
                  %v784 = vld [vmem:[%s568 + $0x6b0] sm:$0xff]
                  %785 = vst [vmem:[%s569 + $0x358] sm:$0xff] %v784
                  %v786 = vld [vmem:[%s568 + $0x6c0] sm:$0xff]
                  %787 = vst [vmem:[%s569 + $0x360] sm:$0xff] %v786
                  %v788 = vld [vmem:[%s568 + $0x6d0] sm:$0xff]
                  %789 = vst [vmem:[%s569 + $0x368] sm:$0xff] %v788
                  %v790 = vld [vmem:[%s568 + $0x6e0] sm:$0xff]
                  %791 = vst [vmem:[%s569 + $0x370] sm:$0xff] %v790
                  %v792 = vld [vmem:[%s568 + $0x6f0] sm:$0xff]
                  %793 = vst [vmem:[%s569 + $0x378] sm:$0xff] %v792
                  %v794 = vld [vmem:[%s568 + $0x700] sm:$0xff]
                  %795 = vst [vmem:[%s569 + $0x380] sm:$0xff] %v794
                  %v796 = vld [vmem:[%s568 + $0x710] sm:$0xff]
                  %797 = vst [vmem:[%s569 + $0x388] sm:$0xff] %v796
                  %v798 = vld [vmem:[%s568 + $0x720] sm:$0xff]
                  %799 = vst [vmem:[%s569 + $0x390] sm:$0xff] %v798
                  %v800 = vld [vmem:[%s568 + $0x730] sm:$0xff]
                  %801 = vst [vmem:[%s569 + $0x398] sm:$0xff] %v800
                  %v802 = vld [vmem:[%s568 + $0x740] sm:$0xff]
                  %803 = vst [vmem:[%s569 + $0x3a0] sm:$0xff] %v802
                  %v804 = vld [vmem:[%s568 + $0x750] sm:$0xff]
                  %805 = vst [vmem:[%s569 + $0x3a8] sm:$0xff] %v804
                  %v806 = vld [vmem:[%s568 + $0x760] sm:$0xff]
                  %807 = vst [vmem:[%s569 + $0x3b0] sm:$0xff] %v806
                  %v808 = vld [vmem:[%s568 + $0x770] sm:$0xff]
                  %809 = vst [vmem:[%s569 + $0x3b8] sm:$0xff] %v808
                $region80: #{rot_green_forward.1} parent=74 // loop_footer
                  %s567 = sadd.s32 1, %s563
                $region81: #{rot_green_forward.1} parent=74 // loop_footer_branch
                  %562 = sbr.rel target = $region77
                $region82: #{rot_green_forward.1} parent=74 // loop_exit
                  _
              $region75: #{rot_green_forward.1} parent=59 // pred_fallthru
                _
              // Predicated region
              $region83: #{rot_green_forward.1} parent=59 // pred_check
                _
              $region84: #{rot_green_forward.1} parent=59 // pred_check_branch
                %811 = sbr.rel target = $region86
              $region85: #{rot_green_forward.1} parent=59 // pred_region
                _
              $region86: #{rot_green_forward.1} parent=59 // pred_fallthru
                _
            $region60: #{rot_green_forward.1} parent=55 // pred_fallthru
              _
            // Predicated region
            $region61: #{rot_green_forward.1} parent=55 // pred_check
              _
            $region62: #{rot_green_forward.1} parent=55 // pred_check_branch
              %310 = sbr.rel target = $region64
            $region63: #{rot_green_forward.1} parent=55 // pred_region
              loop: start=0, step=1, limit=1
              $region65: #{rot_green_forward.1} parent=63 // loop_pre_header
                _
              $region66: #{rot_green_forward.1} parent=63 // loop_header
                %s313 = sphi 0, %s317
                %p314 = scmp.ge.s32.totalorder %s313, 1
                %s318 = sphi %s304, %s304
                %s319 = sphi %s300, %s300
              $region67: #{rot_green_forward.1} parent=63 // loop_header_branch
                %316 = sbr.rel (%p314) target = $region71
              $region68: #{rot_green_forward.1} parent=63 // loop_body
                %v320 = vld [vmem:[%s318] sm:$0xff]
                %321 = vst [vmem:[%s319] sm:$0xff] %v320
                %v322 = vld [vmem:[%s318 + $0x10] sm:$0xff]
                %323 = vst [vmem:[%s319 + $0x8] sm:$0xff] %v322
                %v324 = vld [vmem:[%s318 + $0x20] sm:$0xff]
                %325 = vst [vmem:[%s319 + $0x10] sm:$0xff] %v324
                %v326 = vld [vmem:[%s318 + $0x30] sm:$0xff]
                %327 = vst [vmem:[%s319 + $0x18] sm:$0xff] %v326
                %v328 = vld [vmem:[%s318 + $0x40] sm:$0xff]
                %329 = vst [vmem:[%s319 + $0x20] sm:$0xff] %v328
                %v330 = vld [vmem:[%s318 + $0x50] sm:$0xff]
                %331 = vst [vmem:[%s319 + $0x28] sm:$0xff] %v330
                %v332 = vld [vmem:[%s318 + $0x60] sm:$0xff]
                %333 = vst [vmem:[%s319 + $0x30] sm:$0xff] %v332
                %v334 = vld [vmem:[%s318 + $0x70] sm:$0xff]
                %335 = vst [vmem:[%s319 + $0x38] sm:$0xff] %v334
                %v336 = vld [vmem:[%s318 + $0x80] sm:$0xff]
                %337 = vst [vmem:[%s319 + $0x40] sm:$0xff] %v336
                %v338 = vld [vmem:[%s318 + $0x90] sm:$0xff]
                %339 = vst [vmem:[%s319 + $0x48] sm:$0xff] %v338
                %v340 = vld [vmem:[%s318 + $0xa0] sm:$0xff]
                %341 = vst [vmem:[%s319 + $0x50] sm:$0xff] %v340
                %v342 = vld [vmem:[%s318 + $0xb0] sm:$0xff]
                %343 = vst [vmem:[%s319 + $0x58] sm:$0xff] %v342
                %v344 = vld [vmem:[%s318 + $0xc0] sm:$0xff]
                %345 = vst [vmem:[%s319 + $0x60] sm:$0xff] %v344
                %v346 = vld [vmem:[%s318 + $0xd0] sm:$0xff]
                %347 = vst [vmem:[%s319 + $0x68] sm:$0xff] %v346
                %v348 = vld [vmem:[%s318 + $0xe0] sm:$0xff]
                %349 = vst [vmem:[%s319 + $0x70] sm:$0xff] %v348
                %v350 = vld [vmem:[%s318 + $0xf0] sm:$0xff]
                %351 = vst [vmem:[%s319 + $0x78] sm:$0xff] %v350
                %v352 = vld [vmem:[%s318 + $0x100] sm:$0xff]
                %353 = vst [vmem:[%s319 + $0x80] sm:$0xff] %v352
                %v354 = vld [vmem:[%s318 + $0x110] sm:$0xff]
                %355 = vst [vmem:[%s319 + $0x88] sm:$0xff] %v354
                %v356 = vld [vmem:[%s318 + $0x120] sm:$0xff]
                %357 = vst [vmem:[%s319 + $0x90] sm:$0xff] %v356
                %v358 = vld [vmem:[%s318 + $0x130] sm:$0xff]
                %359 = vst [vmem:[%s319 + $0x98] sm:$0xff] %v358
                %v360 = vld [vmem:[%s318 + $0x140] sm:$0xff]
                %361 = vst [vmem:[%s319 + $0xa0] sm:$0xff] %v360
                %v362 = vld [vmem:[%s318 + $0x150] sm:$0xff]
                %363 = vst [vmem:[%s319 + $0xa8] sm:$0xff] %v362
                %v364 = vld [vmem:[%s318 + $0x160] sm:$0xff]
                %365 = vst [vmem:[%s319 + $0xb0] sm:$0xff] %v364
                %v366 = vld [vmem:[%s318 + $0x170] sm:$0xff]
                %367 = vst [vmem:[%s319 + $0xb8] sm:$0xff] %v366
                %v368 = vld [vmem:[%s318 + $0x180] sm:$0xff]
                %369 = vst [vmem:[%s319 + $0xc0] sm:$0xff] %v368
                %v370 = vld [vmem:[%s318 + $0x190] sm:$0xff]
                %371 = vst [vmem:[%s319 + $0xc8] sm:$0xff] %v370
                %v372 = vld [vmem:[%s318 + $0x1a0] sm:$0xff]
                %373 = vst [vmem:[%s319 + $0xd0] sm:$0xff] %v372
                %v374 = vld [vmem:[%s318 + $0x1b0] sm:$0xff]
                %375 = vst [vmem:[%s319 + $0xd8] sm:$0xff] %v374
                %v376 = vld [vmem:[%s318 + $0x1c0] sm:$0xff]
                %377 = vst [vmem:[%s319 + $0xe0] sm:$0xff] %v376
                %v378 = vld [vmem:[%s318 + $0x1d0] sm:$0xff]
                %379 = vst [vmem:[%s319 + $0xe8] sm:$0xff] %v378
                %v380 = vld [vmem:[%s318 + $0x1e0] sm:$0xff]
                %381 = vst [vmem:[%s319 + $0xf0] sm:$0xff] %v380
                %v382 = vld [vmem:[%s318 + $0x1f0] sm:$0xff]
                %383 = vst [vmem:[%s319 + $0xf8] sm:$0xff] %v382
                %v384 = vld [vmem:[%s318 + $0x200] sm:$0xff]
                %385 = vst [vmem:[%s319 + $0x100] sm:$0xff] %v384
                %v386 = vld [vmem:[%s318 + $0x210] sm:$0xff]
                %387 = vst [vmem:[%s319 + $0x108] sm:$0xff] %v386
                %v388 = vld [vmem:[%s318 + $0x220] sm:$0xff]
                %389 = vst [vmem:[%s319 + $0x110] sm:$0xff] %v388
                %v390 = vld [vmem:[%s318 + $0x230] sm:$0xff]
                %391 = vst [vmem:[%s319 + $0x118] sm:$0xff] %v390
                %v392 = vld [vmem:[%s318 + $0x240] sm:$0xff]
                %393 = vst [vmem:[%s319 + $0x120] sm:$0xff] %v392
                %v394 = vld [vmem:[%s318 + $0x250] sm:$0xff]
                %395 = vst [vmem:[%s319 + $0x128] sm:$0xff] %v394
                %v396 = vld [vmem:[%s318 + $0x260] sm:$0xff]
                %397 = vst [vmem:[%s319 + $0x130] sm:$0xff] %v396
                %v398 = vld [vmem:[%s318 + $0x270] sm:$0xff]
                %399 = vst [vmem:[%s319 + $0x138] sm:$0xff] %v398
                %v400 = vld [vmem:[%s318 + $0x280] sm:$0xff]
                %401 = vst [vmem:[%s319 + $0x140] sm:$0xff] %v400
                %v402 = vld [vmem:[%s318 + $0x290] sm:$0xff]
                %403 = vst [vmem:[%s319 + $0x148] sm:$0xff] %v402
                %v404 = vld [vmem:[%s318 + $0x2a0] sm:$0xff]
                %405 = vst [vmem:[%s319 + $0x150] sm:$0xff] %v404
                %v406 = vld [vmem:[%s318 + $0x2b0] sm:$0xff]
                %407 = vst [vmem:[%s319 + $0x158] sm:$0xff] %v406
                %v408 = vld [vmem:[%s318 + $0x2c0] sm:$0xff]
                %409 = vst [vmem:[%s319 + $0x160] sm:$0xff] %v408
                %v410 = vld [vmem:[%s318 + $0x2d0] sm:$0xff]
                %411 = vst [vmem:[%s319 + $0x168] sm:$0xff] %v410
                %v412 = vld [vmem:[%s318 + $0x2e0] sm:$0xff]
                %413 = vst [vmem:[%s319 + $0x170] sm:$0xff] %v412
                %v414 = vld [vmem:[%s318 + $0x2f0] sm:$0xff]
                %415 = vst [vmem:[%s319 + $0x178] sm:$0xff] %v414
                %v416 = vld [vmem:[%s318 + $0x300] sm:$0xff]
                %417 = vst [vmem:[%s319 + $0x180] sm:$0xff] %v416
                %v418 = vld [vmem:[%s318 + $0x310] sm:$0xff]
                %419 = vst [vmem:[%s319 + $0x188] sm:$0xff] %v418
                %v420 = vld [vmem:[%s318 + $0x320] sm:$0xff]
                %421 = vst [vmem:[%s319 + $0x190] sm:$0xff] %v420
                %v422 = vld [vmem:[%s318 + $0x330] sm:$0xff]
                %423 = vst [vmem:[%s319 + $0x198] sm:$0xff] %v422
                %v424 = vld [vmem:[%s318 + $0x340] sm:$0xff]
                %425 = vst [vmem:[%s319 + $0x1a0] sm:$0xff] %v424
                %v426 = vld [vmem:[%s318 + $0x350] sm:$0xff]
                %427 = vst [vmem:[%s319 + $0x1a8] sm:$0xff] %v426
                %v428 = vld [vmem:[%s318 + $0x360] sm:$0xff]
                %429 = vst [vmem:[%s319 + $0x1b0] sm:$0xff] %v428
                %v430 = vld [vmem:[%s318 + $0x370] sm:$0xff]
                %431 = vst [vmem:[%s319 + $0x1b8] sm:$0xff] %v430
                %v432 = vld [vmem:[%s318 + $0x380] sm:$0xff]
                %433 = vst [vmem:[%s319 + $0x1c0] sm:$0xff] %v432
                %v434 = vld [vmem:[%s318 + $0x390] sm:$0xff]
                %435 = vst [vmem:[%s319 + $0x1c8] sm:$0xff] %v434
                %v436 = vld [vmem:[%s318 + $0x3a0] sm:$0xff]
                %437 = vst [vmem:[%s319 + $0x1d0] sm:$0xff] %v436
                %v438 = vld [vmem:[%s318 + $0x3b0] sm:$0xff]
                %439 = vst [vmem:[%s319 + $0x1d8] sm:$0xff] %v438
                %v440 = vld [vmem:[%s318 + $0x3c0] sm:$0xff]
                %441 = vst [vmem:[%s319 + $0x1e0] sm:$0xff] %v440
                %v442 = vld [vmem:[%s318 + $0x3d0] sm:$0xff]
                %443 = vst [vmem:[%s319 + $0x1e8] sm:$0xff] %v442
                %v444 = vld [vmem:[%s318 + $0x3e0] sm:$0xff]
                %445 = vst [vmem:[%s319 + $0x1f0] sm:$0xff] %v444
                %v446 = vld [vmem:[%s318 + $0x3f0] sm:$0xff]
                %447 = vst [vmem:[%s319 + $0x1f8] sm:$0xff] %v446
                %v448 = vld [vmem:[%s318 + $0x400] sm:$0xff]
                %449 = vst [vmem:[%s319 + $0x200] sm:$0xff] %v448
                %v450 = vld [vmem:[%s318 + $0x410] sm:$0xff]
                %451 = vst [vmem:[%s319 + $0x208] sm:$0xff] %v450
                %v452 = vld [vmem:[%s318 + $0x420] sm:$0xff]
                %453 = vst [vmem:[%s319 + $0x210] sm:$0xff] %v452
                %v454 = vld [vmem:[%s318 + $0x430] sm:$0xff]
                %455 = vst [vmem:[%s319 + $0x218] sm:$0xff] %v454
                %v456 = vld [vmem:[%s318 + $0x440] sm:$0xff]
                %457 = vst [vmem:[%s319 + $0x220] sm:$0xff] %v456
                %v458 = vld [vmem:[%s318 + $0x450] sm:$0xff]
                %459 = vst [vmem:[%s319 + $0x228] sm:$0xff] %v458
                %v460 = vld [vmem:[%s318 + $0x460] sm:$0xff]
                %461 = vst [vmem:[%s319 + $0x230] sm:$0xff] %v460
                %v462 = vld [vmem:[%s318 + $0x470] sm:$0xff]
                %463 = vst [vmem:[%s319 + $0x238] sm:$0xff] %v462
                %v464 = vld [vmem:[%s318 + $0x480] sm:$0xff]
                %465 = vst [vmem:[%s319 + $0x240] sm:$0xff] %v464
                %v466 = vld [vmem:[%s318 + $0x490] sm:$0xff]
                %467 = vst [vmem:[%s319 + $0x248] sm:$0xff] %v466
                %v468 = vld [vmem:[%s318 + $0x4a0] sm:$0xff]
                %469 = vst [vmem:[%s319 + $0x250] sm:$0xff] %v468
                %v470 = vld [vmem:[%s318 + $0x4b0] sm:$0xff]
                %471 = vst [vmem:[%s319 + $0x258] sm:$0xff] %v470
                %v472 = vld [vmem:[%s318 + $0x4c0] sm:$0xff]
                %473 = vst [vmem:[%s319 + $0x260] sm:$0xff] %v472
                %v474 = vld [vmem:[%s318 + $0x4d0] sm:$0xff]
                %475 = vst [vmem:[%s319 + $0x268] sm:$0xff] %v474
                %v476 = vld [vmem:[%s318 + $0x4e0] sm:$0xff]
                %477 = vst [vmem:[%s319 + $0x270] sm:$0xff] %v476
                %v478 = vld [vmem:[%s318 + $0x4f0] sm:$0xff]
                %479 = vst [vmem:[%s319 + $0x278] sm:$0xff] %v478
                %v480 = vld [vmem:[%s318 + $0x500] sm:$0xff]
                %481 = vst [vmem:[%s319 + $0x280] sm:$0xff] %v480
                %v482 = vld [vmem:[%s318 + $0x510] sm:$0xff]
                %483 = vst [vmem:[%s319 + $0x288] sm:$0xff] %v482
                %v484 = vld [vmem:[%s318 + $0x520] sm:$0xff]
                %485 = vst [vmem:[%s319 + $0x290] sm:$0xff] %v484
                %v486 = vld [vmem:[%s318 + $0x530] sm:$0xff]
                %487 = vst [vmem:[%s319 + $0x298] sm:$0xff] %v486
                %v488 = vld [vmem:[%s318 + $0x540] sm:$0xff]
                %489 = vst [vmem:[%s319 + $0x2a0] sm:$0xff] %v488
                %v490 = vld [vmem:[%s318 + $0x550] sm:$0xff]
                %491 = vst [vmem:[%s319 + $0x2a8] sm:$0xff] %v490
                %v492 = vld [vmem:[%s318 + $0x560] sm:$0xff]
                %493 = vst [vmem:[%s319 + $0x2b0] sm:$0xff] %v492
                %v494 = vld [vmem:[%s318 + $0x570] sm:$0xff]
                %495 = vst [vmem:[%s319 + $0x2b8] sm:$0xff] %v494
                %v496 = vld [vmem:[%s318 + $0x580] sm:$0xff]
                %497 = vst [vmem:[%s319 + $0x2c0] sm:$0xff] %v496
                %v498 = vld [vmem:[%s318 + $0x590] sm:$0xff]
                %499 = vst [vmem:[%s319 + $0x2c8] sm:$0xff] %v498
                %v500 = vld [vmem:[%s318 + $0x5a0] sm:$0xff]
                %501 = vst [vmem:[%s319 + $0x2d0] sm:$0xff] %v500
                %v502 = vld [vmem:[%s318 + $0x5b0] sm:$0xff]
                %503 = vst [vmem:[%s319 + $0x2d8] sm:$0xff] %v502
                %v504 = vld [vmem:[%s318 + $0x5c0] sm:$0xff]
                %505 = vst [vmem:[%s319 + $0x2e0] sm:$0xff] %v504
                %v506 = vld [vmem:[%s318 + $0x5d0] sm:$0xff]
                %507 = vst [vmem:[%s319 + $0x2e8] sm:$0xff] %v506
                %v508 = vld [vmem:[%s318 + $0x5e0] sm:$0xff]
                %509 = vst [vmem:[%s319 + $0x2f0] sm:$0xff] %v508
                %v510 = vld [vmem:[%s318 + $0x5f0] sm:$0xff]
                %511 = vst [vmem:[%s319 + $0x2f8] sm:$0xff] %v510
                %v512 = vld [vmem:[%s318 + $0x600] sm:$0xff]
                %513 = vst [vmem:[%s319 + $0x300] sm:$0xff] %v512
                %v514 = vld [vmem:[%s318 + $0x610] sm:$0xff]
                %515 = vst [vmem:[%s319 + $0x308] sm:$0xff] %v514
                %v516 = vld [vmem:[%s318 + $0x620] sm:$0xff]
                %517 = vst [vmem:[%s319 + $0x310] sm:$0xff] %v516
                %v518 = vld [vmem:[%s318 + $0x630] sm:$0xff]
                %519 = vst [vmem:[%s319 + $0x318] sm:$0xff] %v518
                %v520 = vld [vmem:[%s318 + $0x640] sm:$0xff]
                %521 = vst [vmem:[%s319 + $0x320] sm:$0xff] %v520
                %v522 = vld [vmem:[%s318 + $0x650] sm:$0xff]
                %523 = vst [vmem:[%s319 + $0x328] sm:$0xff] %v522
                %v524 = vld [vmem:[%s318 + $0x660] sm:$0xff]
                %525 = vst [vmem:[%s319 + $0x330] sm:$0xff] %v524
                %v526 = vld [vmem:[%s318 + $0x670] sm:$0xff]
                %527 = vst [vmem:[%s319 + $0x338] sm:$0xff] %v526
                %v528 = vld [vmem:[%s318 + $0x680] sm:$0xff]
                %529 = vst [vmem:[%s319 + $0x340] sm:$0xff] %v528
                %v530 = vld [vmem:[%s318 + $0x690] sm:$0xff]
                %531 = vst [vmem:[%s319 + $0x348] sm:$0xff] %v530
                %v532 = vld [vmem:[%s318 + $0x6a0] sm:$0xff]
                %533 = vst [vmem:[%s319 + $0x350] sm:$0xff] %v532
                %v534 = vld [vmem:[%s318 + $0x6b0] sm:$0xff]
                %535 = vst [vmem:[%s319 + $0x358] sm:$0xff] %v534
                %v536 = vld [vmem:[%s318 + $0x6c0] sm:$0xff]
                %537 = vst [vmem:[%s319 + $0x360] sm:$0xff] %v536
                %v538 = vld [vmem:[%s318 + $0x6d0] sm:$0xff]
                %539 = vst [vmem:[%s319 + $0x368] sm:$0xff] %v538
                %v540 = vld [vmem:[%s318 + $0x6e0] sm:$0xff]
                %541 = vst [vmem:[%s319 + $0x370] sm:$0xff] %v540
                %v542 = vld [vmem:[%s318 + $0x6f0] sm:$0xff]
                %543 = vst [vmem:[%s319 + $0x378] sm:$0xff] %v542
                %v544 = vld [vmem:[%s318 + $0x700] sm:$0xff]
                %545 = vst [vmem:[%s319 + $0x380] sm:$0xff] %v544
                %v546 = vld [vmem:[%s318 + $0x710] sm:$0xff]
                %547 = vst [vmem:[%s319 + $0x388] sm:$0xff] %v546
                %v548 = vld [vmem:[%s318 + $0x720] sm:$0xff]
                %549 = vst [vmem:[%s319 + $0x390] sm:$0xff] %v548
                %v550 = vld [vmem:[%s318 + $0x730] sm:$0xff]
                %551 = vst [vmem:[%s319 + $0x398] sm:$0xff] %v550
                %v552 = vld [vmem:[%s318 + $0x740] sm:$0xff]
                %553 = vst [vmem:[%s319 + $0x3a0] sm:$0xff] %v552
                %v554 = vld [vmem:[%s318 + $0x750] sm:$0xff]
                %555 = vst [vmem:[%s319 + $0x3a8] sm:$0xff] %v554
                %v556 = vld [vmem:[%s318 + $0x760] sm:$0xff]
                %557 = vst [vmem:[%s319 + $0x3b0] sm:$0xff] %v556
                %v558 = vld [vmem:[%s318 + $0x770] sm:$0xff]
                %559 = vst [vmem:[%s319 + $0x3b8] sm:$0xff] %v558
              $region69: #{rot_green_forward.1} parent=63 // loop_footer
                %s317 = sadd.s32 1, %s313
              $region70: #{rot_green_forward.1} parent=63 // loop_footer_branch
                %312 = sbr.rel target = $region66
              $region71: #{rot_green_forward.1} parent=63 // loop_exit
                _
            $region64: #{rot_green_forward.1} parent=55 // pred_fallthru
              _
          $region56: #{rot_green_forward.1} parent=51 // pred_fallthru
            _
          %812 = vnop
        $region52: #{rot_green_forward.1} parent=47 // pred_fallthru
          _
      $region48: #{rot_green_forward.1} parent=5 // pred_fallthru
        _
      %p813 = scmp.le.s32.totalorder 1, %s15
      %p814 = scmp.lt.s32.totalorder %s15, 5
      %p815 = pnand %p813, %p814
      %p816 = pneg %p815
      // Predicated region
      $region87: #{rot_green_forward.1} parent=5 // pred_check
        _
      $region88: #{rot_green_forward.1} parent=5 // pred_check_branch
        %818 = sbr.rel (%p815) target = $region90
      $region89: #{rot_green_forward.1} parent=5 // pred_region
        %s819 = ssub.s32 %s15, 1
        %s820 = sand.u32 %s42, 1
        %s821 = sand.u32 %s42, 1
        %s822 = smul.addr %s821, 960
        %s823 = scalar_lea.vmem [#allocation2], %s822
        // Predicated region
        $region91: #{rot_green_forward.1} parent=89 // pred_check
          %p824 = pneg %p55
        $region92: #{rot_green_forward.1} parent=89 // pred_check_branch
          %826 = sbr.rel (%p824) target = $region94
        $region93: #{rot_green_forward.1} parent=89 // pred_region
          _
        $region94: #{rot_green_forward.1} parent=89 // pred_fallthru
          _
        %s827 = sand.u32 %s42, 1
        %s828 = sand.u32 %s42, 1
        %s829 = smul.addr %s828, 960
        %s830 = scalar_lea.vmem [#allocation2], %s829
        %p831 = pneg %p55
        %p832 = pneg %p52
        %p833 = pneg %p76
        %p834 = pneg %p73
        %p835 = pneg %p97
        %p836 = pneg %p94
        %p837 = pneg %p118
        %p838 = pneg %p115
        %p839 = pneg %p139
        %p840 = pneg %p136
        %p841 = pneg %p160
        %p842 = pneg %p157
        %p843 = pneg %p181
        %p844 = pneg %p178
        %p845 = pneg %p202
        %p846 = pneg %p199
        %p847 = pneg %p223
        %p848 = pneg %p220
        %p849 = pneg %p251
        %p850 = pneg %p248
        %p851 = scmp.lt.s32.totalorder %s24, 1
        %s852 = scalar_select %p851, %s24, 1
        %p853 = scmp.lt.s32.totalorder %s25, 1
        %s854 = scalar_select %p853, %s25, 1
        %s855 = smul.addr %s852, 2
        %s856 = sadd.s32 %s854, %s855
        %s857 = smul.addr %s856, 4
        %s858 = scalar_lea.vmem %s9, %s857
        %p859 = scmp.lt.s32.totalorder %s24, 1
        %s860 = scalar_select %p859, %s24, 1
        %p861 = scmp.lt.s32.totalorder %s25, 1
        %s862 = scalar_select %p861, %s25, 1
        %s863 = smul.addr %s860, 2
        %s864 = sadd.s32 %s862, %s863
        %s865 = smul.addr %s864, 4
        %s866 = scalar_lea.vmem %s9, %s865
        %v868 = vld [vmem:[%s823] sm:$0xff]
        %v869 = vld [vmem:[%s823 + $0x8] sm:$0xff]
        %v870 = vld [vmem:[%s823 + $0x10] sm:$0xff]
        %v871 = vld [vmem:[%s823 + $0x18] sm:$0xff]
        %v872 = vld [vmem:[%s823 + $0x20] sm:$0xff]
        %v873 = vld [vmem:[%s823 + $0x28] sm:$0xff]
        %v874 = vld [vmem:[%s823 + $0x30] sm:$0xff]
        %v875 = vld [vmem:[%s823 + $0x38] sm:$0xff]
        %v876 = vld [vmem:[%s823 + $0x40] sm:$0xff]
        %v877 = vld [vmem:[%s823 + $0x48] sm:$0xff]
        %v878 = vld [vmem:[%s823 + $0x50] sm:$0xff]
        %v879 = vld [vmem:[%s823 + $0x58] sm:$0xff]
        %v880 = vld [vmem:[%s823 + $0x60] sm:$0xff]
        %v881 = vld [vmem:[%s823 + $0x68] sm:$0xff]
        %v882 = vld [vmem:[%s823 + $0x70] sm:$0xff]
        %v883 = vld [vmem:[%s823 + $0x78] sm:$0xff]
        %v884 = vld [vmem:[%s823 + $0x80] sm:$0xff]
        %v885 = vld [vmem:[%s823 + $0x88] sm:$0xff]
        %v886 = vld [vmem:[%s823 + $0x90] sm:$0xff]
        %v887 = vld [vmem:[%s823 + $0x98] sm:$0xff]
        %v888 = vld [vmem:[%s823 + $0xa0] sm:$0xff]
        %v889 = vld [vmem:[%s823 + $0xa8] sm:$0xff]
        %v890 = vld [vmem:[%s823 + $0xb0] sm:$0xff]
        %v891 = vld [vmem:[%s823 + $0xb8] sm:$0xff]
        %v892 = vld [vmem:[%s823 + $0xc0] sm:$0xff]
        %v893 = vld [vmem:[%s823 + $0xc8] sm:$0xff]
        %v894 = vld [vmem:[%s823 + $0xd0] sm:$0xff]
        %v895 = vld [vmem:[%s823 + $0xd8] sm:$0xff]
        %v896 = vld [vmem:[%s823 + $0xe0] sm:$0xff]
        %v897 = vld [vmem:[%s823 + $0xe8] sm:$0xff]
        %v898 = vld [vmem:[%s823 + $0xf0] sm:$0xff]
        %v899 = vld [vmem:[%s823 + $0xf8] sm:$0xff]
        %v900 = vld [vmem:[%s823 + $0x100] sm:$0xff]
        %v901 = vld [vmem:[%s823 + $0x108] sm:$0xff]
        %v902 = vld [vmem:[%s823 + $0x110] sm:$0xff]
        %v903 = vld [vmem:[%s823 + $0x118] sm:$0xff]
        %v904 = vld [vmem:[%s823 + $0x120] sm:$0xff]
        %v905 = vld [vmem:[%s823 + $0x128] sm:$0xff]
        %v906 = vld [vmem:[%s823 + $0x130] sm:$0xff]
        %v907 = vld [vmem:[%s823 + $0x138] sm:$0xff]
        %v908 = vld [vmem:[%s823 + $0x140] sm:$0xff]
        %v909 = vld [vmem:[%s823 + $0x148] sm:$0xff]
        %v910 = vld [vmem:[%s823 + $0x150] sm:$0xff]
        %v911 = vld [vmem:[%s823 + $0x158] sm:$0xff]
        %v912 = vld [vmem:[%s823 + $0x160] sm:$0xff]
        %v913 = vld [vmem:[%s823 + $0x168] sm:$0xff]
        %v914 = vld [vmem:[%s823 + $0x170] sm:$0xff]
        %v915 = vld [vmem:[%s823 + $0x178] sm:$0xff]
        %v916 = vld [vmem:[%s823 + $0x180] sm:$0xff]
        %v917 = vld [vmem:[%s823 + $0x188] sm:$0xff]
        %v918 = vld [vmem:[%s823 + $0x190] sm:$0xff]
        %v919 = vld [vmem:[%s823 + $0x198] sm:$0xff]
        %v920 = vld [vmem:[%s823 + $0x1a0] sm:$0xff]
        %v921 = vld [vmem:[%s823 + $0x1a8] sm:$0xff]
        %v922 = vld [vmem:[%s823 + $0x1b0] sm:$0xff]
        %v923 = vld [vmem:[%s823 + $0x1b8] sm:$0xff]
        %v924 = vld [vmem:[%s823 + $0x1c0] sm:$0xff]
        %v925 = vld [vmem:[%s823 + $0x1c8] sm:$0xff]
        %v926 = vld [vmem:[%s823 + $0x1d0] sm:$0xff]
        %v927 = vld [vmem:[%s823 + $0x1d8] sm:$0xff]
        %v928 = vld [vmem:[%s823 + $0x1e0] sm:$0xff]
        %v929 = vld [vmem:[%s823 + $0x1e8] sm:$0xff]
        %v930 = vld [vmem:[%s823 + $0x1f0] sm:$0xff]
        %v931 = vld [vmem:[%s823 + $0x1f8] sm:$0xff]
        %v932 = vld [vmem:[%s823 + $0x200] sm:$0xff]
        %v933 = vld [vmem:[%s823 + $0x208] sm:$0xff]
        %v934 = vld [vmem:[%s823 + $0x210] sm:$0xff]
        %v935 = vld [vmem:[%s823 + $0x218] sm:$0xff]
        %v936 = vld [vmem:[%s823 + $0x220] sm:$0xff]
        %v937 = vld [vmem:[%s823 + $0x228] sm:$0xff]
        %v938 = vld [vmem:[%s823 + $0x230] sm:$0xff]
        %v939 = vld [vmem:[%s823 + $0x238] sm:$0xff]
        %v940 = vld [vmem:[%s823 + $0x240] sm:$0xff]
        %v941 = vld [vmem:[%s823 + $0x248] sm:$0xff]
        %v942 = vld [vmem:[%s823 + $0x250] sm:$0xff]
        %v943 = vld [vmem:[%s823 + $0x258] sm:$0xff]
        %v944 = vld [vmem:[%s823 + $0x260] sm:$0xff]
        %v945 = vld [vmem:[%s823 + $0x268] sm:$0xff]
        %v946 = vld [vmem:[%s823 + $0x270] sm:$0xff]
        %v947 = vld [vmem:[%s823 + $0x278] sm:$0xff]
        %v948 = vld [vmem:[%s823 + $0x280] sm:$0xff]
        %v949 = vld [vmem:[%s823 + $0x288] sm:$0xff]
        %v950 = vld [vmem:[%s823 + $0x290] sm:$0xff]
        %v951 = vld [vmem:[%s823 + $0x298] sm:$0xff]
        %v952 = vld [vmem:[%s823 + $0x2a0] sm:$0xff]
        %v953 = vld [vmem:[%s823 + $0x2a8] sm:$0xff]
        %v954 = vld [vmem:[%s823 + $0x2b0] sm:$0xff]
        %v955 = vld [vmem:[%s823 + $0x2b8] sm:$0xff]
        %v956 = vld [vmem:[%s823 + $0x2c0] sm:$0xff]
        %v957 = vld [vmem:[%s823 + $0x2c8] sm:$0xff]
        %v958 = vld [vmem:[%s823 + $0x2d0] sm:$0xff]
        %v959 = vld [vmem:[%s823 + $0x2d8] sm:$0xff]
        %v960 = vld [vmem:[%s823 + $0x2e0] sm:$0xff]
        %v961 = vld [vmem:[%s823 + $0x2e8] sm:$0xff]
        %v962 = vld [vmem:[%s823 + $0x2f0] sm:$0xff]
        %v963 = vld [vmem:[%s823 + $0x2f8] sm:$0xff]
        %v964 = vld [vmem:[%s823 + $0x300] sm:$0xff]
        %v965 = vld [vmem:[%s823 + $0x308] sm:$0xff]
        %v966 = vld [vmem:[%s823 + $0x310] sm:$0xff]
        %v967 = vld [vmem:[%s823 + $0x318] sm:$0xff]
        %v968 = vld [vmem:[%s823 + $0x320] sm:$0xff]
        %v969 = vld [vmem:[%s823 + $0x328] sm:$0xff]
        %v970 = vld [vmem:[%s823 + $0x330] sm:$0xff]
        %v971 = vld [vmem:[%s823 + $0x338] sm:$0xff]
        %v972 = vld [vmem:[%s823 + $0x340] sm:$0xff]
        %v973 = vld [vmem:[%s823 + $0x348] sm:$0xff]
        %v974 = vld [vmem:[%s823 + $0x350] sm:$0xff]
        %v975 = vld [vmem:[%s823 + $0x358] sm:$0xff]
        %v976 = vld [vmem:[%s823 + $0x360] sm:$0xff]
        %v977 = vld [vmem:[%s823 + $0x368] sm:$0xff]
        %v978 = vld [vmem:[%s823 + $0x370] sm:$0xff]
        %v979 = vld [vmem:[%s823 + $0x378] sm:$0xff]
        %v980 = vld [vmem:[%s823 + $0x380] sm:$0xff]
        %v981 = vld [vmem:[%s823 + $0x388] sm:$0xff]
        %v982 = vld [vmem:[%s823 + $0x390] sm:$0xff]
        %v983 = vld [vmem:[%s823 + $0x398] sm:$0xff]
        %v984 = vld [vmem:[%s823 + $0x3a0] sm:$0xff]
        %v985 = vld [vmem:[%s823 + $0x3a8] sm:$0xff]
        %v986 = vld [vmem:[%s823 + $0x3b0] sm:$0xff]
        %v987 = vld [vmem:[%s823 + $0x3b8] sm:$0xff]
        %v988 = vpack.c.bf16 %v869, %v868
        %v989 = vpack.c.bf16 %v871, %v870
        %v990 = vpack.c.bf16 %v873, %v872
        %v991 = vpack.c.bf16 %v875, %v874
        %v992 = vpack.c.bf16 %v877, %v876
        %v993 = vpack.c.bf16 %v879, %v878
        %v994 = vpack.c.bf16 %v881, %v880
        %v995 = vpack.c.bf16 %v883, %v882
        %v996 = vpack.c.bf16 %v885, %v884
        %v997 = vpack.c.bf16 %v887, %v886
        %v998 = vpack.c.bf16 %v889, %v888
        %v999 = vpack.c.bf16 %v891, %v890
        %v1000 = vpack.c.bf16 %v893, %v892
        %v1001 = vpack.c.bf16 %v895, %v894
        %v1002 = vpack.c.bf16 %v897, %v896
        %v1003 = vpack.c.bf16 %v899, %v898
        %v1004 = vpack.c.bf16 %v901, %v900
        %v1005 = vpack.c.bf16 %v903, %v902
        %v1006 = vpack.c.bf16 %v905, %v904
        %v1007 = vpack.c.bf16 %v907, %v906
        %v1008 = vpack.c.bf16 %v909, %v908
        %v1009 = vpack.c.bf16 %v911, %v910
        %v1010 = vpack.c.bf16 %v913, %v912
        %v1011 = vpack.c.bf16 %v915, %v914
        %v1012 = vpack.c.bf16 %v917, %v916
        %v1013 = vpack.c.bf16 %v919, %v918
        %v1014 = vpack.c.bf16 %v921, %v920
        %v1015 = vpack.c.bf16 %v923, %v922
        %v1016 = vpack.c.bf16 %v925, %v924
        %v1017 = vpack.c.bf16 %v927, %v926
        %v1018 = vpack.c.bf16 %v929, %v928
        %v1019 = vpack.c.bf16 %v931, %v930
        %v1020 = vpack.c.bf16 %v933, %v932
        %v1021 = vpack.c.bf16 %v935, %v934
        %v1022 = vpack.c.bf16 %v937, %v936
        %v1023 = vpack.c.bf16 %v939, %v938
        %v1024 = vpack.c.bf16 %v941, %v940
        %v1025 = vpack.c.bf16 %v943, %v942
        %v1026 = vpack.c.bf16 %v945, %v944
        %v1027 = vpack.c.bf16 %v947, %v946
        %v1028 = vpack.c.bf16 %v949, %v948
        %v1029 = vpack.c.bf16 %v951, %v950
        %v1030 = vpack.c.bf16 %v953, %v952
        %v1031 = vpack.c.bf16 %v955, %v954
        %v1032 = vpack.c.bf16 %v957, %v956
        %v1033 = vpack.c.bf16 %v959, %v958
        %v1034 = vpack.c.bf16 %v961, %v960
        %v1035 = vpack.c.bf16 %v963, %v962
        %v1036 = vpack.c.bf16 %v965, %v964
        %v1037 = vpack.c.bf16 %v967, %v966
        %v1038 = vpack.c.bf16 %v969, %v968
        %v1039 = vpack.c.bf16 %v971, %v970
        %v1040 = vpack.c.bf16 %v973, %v972
        %v1041 = vpack.c.bf16 %v975, %v974
        %v1042 = vpack.c.bf16 %v977, %v976
        %v1043 = vpack.c.bf16 %v979, %v978
        %v1044 = vpack.c.bf16 %v981, %v980
        %v1045 = vpack.c.bf16 %v983, %v982
        %v1046 = vpack.c.bf16 %v985, %v984
        %v1047 = vpack.c.bf16 %v987, %v986
        %v1048 = vld [vmem:[%s1] sm:$0xff]
        %v1049 = vld [vmem:[%s1 + $0x8] sm:$0xff]
        %v1050 = vld [vmem:[%s1 + $0x10] sm:$0xff]
        %v1051 = vld [vmem:[%s1 + $0x18] sm:$0xff]
        %v1052 = vld [vmem:[%s1 + $0x20] sm:$0xff]
        %v1053 = vld [vmem:[%s1 + $0x28] sm:$0xff]
        %v1054 = vld [vmem:[%s1 + $0x30] sm:$0xff]
        %v1055 = vld [vmem:[%s1 + $0x38] sm:$0xff]
        %v1056 = vld [vmem:[%s1 + $0x40] sm:$0xff]
        %v1057 = vld [vmem:[%s1 + $0x48] sm:$0xff]
        %v1058 = vld [vmem:[%s1 + $0x50] sm:$0xff]
        %v1059 = vld [vmem:[%s1 + $0x58] sm:$0xff]
        %v1060 = vld [vmem:[%s1 + $0x60] sm:$0xff]
        %v1061 = vld [vmem:[%s1 + $0x68] sm:$0xff]
        %v1062 = vld [vmem:[%s1 + $0x70] sm:$0xff]
        %v1063 = vld [vmem:[%s1 + $0x78] sm:$0xff]
        %v1064 = vld [vmem:[%s1 + $0x80] sm:$0xff]
        %v1065 = vld [vmem:[%s1 + $0x88] sm:$0xff]
        %v1066 = vld [vmem:[%s1 + $0x90] sm:$0xff]
        %v1067 = vld [vmem:[%s1 + $0x98] sm:$0xff]
        %v1068 = vld [vmem:[%s1 + $0xa0] sm:$0xff]
        %v1069 = vld [vmem:[%s1 + $0xa8] sm:$0xff]
        %v1070 = vld [vmem:[%s1 + $0xb0] sm:$0xff]
        %v1071 = vld [vmem:[%s1 + $0xb8] sm:$0xff]
        %v1072 = vld [vmem:[%s1 + $0xc0] sm:$0xff]
        %v1073 = vld [vmem:[%s1 + $0xc8] sm:$0xff]
        %v1074 = vld [vmem:[%s1 + $0xd0] sm:$0xff]
        %v1075 = vld [vmem:[%s1 + $0xd8] sm:$0xff]
        %v1076 = vld [vmem:[%s1 + $0xe0] sm:$0xff]
        %v1077 = vld [vmem:[%s1 + $0xe8] sm:$0xff]
        %v1078 = vld [vmem:[%s1 + $0xf0] sm:$0xff]
        %v1079 = vld [vmem:[%s1 + $0xf8] sm:$0xff]
        %v1080 = vld [vmem:[%s1 + $0x100] sm:$0xff]
        %v1081 = vld [vmem:[%s1 + $0x108] sm:$0xff]
        %v1082 = vld [vmem:[%s1 + $0x110] sm:$0xff]
        %v1083 = vld [vmem:[%s1 + $0x118] sm:$0xff]
        %v1084 = vld [vmem:[%s1 + $0x120] sm:$0xff]
        %v1085 = vld [vmem:[%s1 + $0x128] sm:$0xff]
        %v1086 = vld [vmem:[%s1 + $0x130] sm:$0xff]
        %v1087 = vld [vmem:[%s1 + $0x138] sm:$0xff]
        %v1088 = vld [vmem:[%s1 + $0x140] sm:$0xff]
        %v1089 = vld [vmem:[%s1 + $0x148] sm:$0xff]
        %v1090 = vld [vmem:[%s1 + $0x150] sm:$0xff]
        %v1091 = vld [vmem:[%s1 + $0x158] sm:$0xff]
        %v1092 = vld [vmem:[%s1 + $0x160] sm:$0xff]
        %v1093 = vld [vmem:[%s1 + $0x168] sm:$0xff]
        %v1094 = vld [vmem:[%s1 + $0x170] sm:$0xff]
        %v1095 = vld [vmem:[%s1 + $0x178] sm:$0xff]
        %v1096 = vld [vmem:[%s1 + $0x180] sm:$0xff]
        %v1097 = vld [vmem:[%s1 + $0x188] sm:$0xff]
        %v1098 = vld [vmem:[%s1 + $0x190] sm:$0xff]
        %v1099 = vld [vmem:[%s1 + $0x198] sm:$0xff]
        %v1100 = vld [vmem:[%s1 + $0x1a0] sm:$0xff]
        %v1101 = vld [vmem:[%s1 + $0x1a8] sm:$0xff]
        %v1102 = vld [vmem:[%s1 + $0x1b0] sm:$0xff]
        %v1103 = vld [vmem:[%s1 + $0x1b8] sm:$0xff]
        %v1104 = vld [vmem:[%s1 + $0x1c0] sm:$0xff]
        %v1105 = vld [vmem:[%s1 + $0x1c8] sm:$0xff]
        %v1106 = vld [vmem:[%s1 + $0x1d0] sm:$0xff]
        %v1107 = vld [vmem:[%s1 + $0x1d8] sm:$0xff]
        %v1108 = vld [vmem:[%s1 + $0x1e0] sm:$0xff]
        %v1109 = vld [vmem:[%s1 + $0x1e8] sm:$0xff]
        %v1110 = vld [vmem:[%s1 + $0x1f0] sm:$0xff]
        %v1111 = vld [vmem:[%s1 + $0x1f8] sm:$0xff]
        %v1112 = vld [vmem:[%s1 + $0x200] sm:$0xff]
        %v1113 = vld [vmem:[%s1 + $0x208] sm:$0xff]
        %v1114 = vld [vmem:[%s1 + $0x210] sm:$0xff]
        %v1115 = vld [vmem:[%s1 + $0x218] sm:$0xff]
        %v1116 = vld [vmem:[%s1 + $0x220] sm:$0xff]
        %v1117 = vld [vmem:[%s1 + $0x228] sm:$0xff]
        %v1118 = vld [vmem:[%s1 + $0x230] sm:$0xff]
        %v1119 = vld [vmem:[%s1 + $0x238] sm:$0xff]
        %v1120 = vld [vmem:[%s1 + $0x240] sm:$0xff]
        %v1121 = vld [vmem:[%s1 + $0x248] sm:$0xff]
        %v1122 = vld [vmem:[%s1 + $0x250] sm:$0xff]
        %v1123 = vld [vmem:[%s1 + $0x258] sm:$0xff]
        %v1124 = vld [vmem:[%s1 + $0x260] sm:$0xff]
        %v1125 = vld [vmem:[%s1 + $0x268] sm:$0xff]
        %v1126 = vld [vmem:[%s1 + $0x270] sm:$0xff]
        %v1127 = vld [vmem:[%s1 + $0x278] sm:$0xff]
        %v1128 = vld [vmem:[%s1 + $0x280] sm:$0xff]
        %v1129 = vld [vmem:[%s1 + $0x288] sm:$0xff]
        %v1130 = vld [vmem:[%s1 + $0x290] sm:$0xff]
        %v1131 = vld [vmem:[%s1 + $0x298] sm:$0xff]
        %v1132 = vld [vmem:[%s1 + $0x2a0] sm:$0xff]
        %v1133 = vld [vmem:[%s1 + $0x2a8] sm:$0xff]
        %v1134 = vld [vmem:[%s1 + $0x2b0] sm:$0xff]
        %v1135 = vld [vmem:[%s1 + $0x2b8] sm:$0xff]
        %v1136 = vld [vmem:[%s1 + $0x2c0] sm:$0xff]
        %v1137 = vld [vmem:[%s1 + $0x2c8] sm:$0xff]
        %v1138 = vld [vmem:[%s1 + $0x2d0] sm:$0xff]
        %v1139 = vld [vmem:[%s1 + $0x2d8] sm:$0xff]
        %v1140 = vld [vmem:[%s1 + $0x2e0] sm:$0xff]
        %v1141 = vld [vmem:[%s1 + $0x2e8] sm:$0xff]
        %v1142 = vld [vmem:[%s1 + $0x2f0] sm:$0xff]
        %v1143 = vld [vmem:[%s1 + $0x2f8] sm:$0xff]
        %v1144 = vld [vmem:[%s1 + $0x300] sm:$0xff]
        %v1145 = vld [vmem:[%s1 + $0x308] sm:$0xff]
        %v1146 = vld [vmem:[%s1 + $0x310] sm:$0xff]
        %v1147 = vld [vmem:[%s1 + $0x318] sm:$0xff]
        %v1148 = vld [vmem:[%s1 + $0x320] sm:$0xff]
        %v1149 = vld [vmem:[%s1 + $0x328] sm:$0xff]
        %v1150 = vld [vmem:[%s1 + $0x330] sm:$0xff]
        %v1151 = vld [vmem:[%s1 + $0x338] sm:$0xff]
        %v1152 = vld [vmem:[%s1 + $0x340] sm:$0xff]
        %v1153 = vld [vmem:[%s1 + $0x348] sm:$0xff]
        %v1154 = vld [vmem:[%s1 + $0x350] sm:$0xff]
        %v1155 = vld [vmem:[%s1 + $0x358] sm:$0xff]
        %v1156 = vld [vmem:[%s1 + $0x360] sm:$0xff]
        %v1157 = vld [vmem:[%s1 + $0x368] sm:$0xff]
        %v1158 = vld [vmem:[%s1 + $0x370] sm:$0xff]
        %v1159 = vld [vmem:[%s1 + $0x378] sm:$0xff]
        %v1160 = vld [vmem:[%s1 + $0x380] sm:$0xff]
        %v1161 = vld [vmem:[%s1 + $0x388] sm:$0xff]
        %v1162 = vld [vmem:[%s1 + $0x390] sm:$0xff]
        %v1163 = vld [vmem:[%s1 + $0x398] sm:$0xff]
        %v1164 = vld [vmem:[%s1 + $0x3a0] sm:$0xff]
        %v1165 = vld [vmem:[%s1 + $0x3a8] sm:$0xff]
        %v1166 = vld [vmem:[%s1 + $0x3b0] sm:$0xff]
        %v1167 = vld [vmem:[%s1 + $0x3b8] sm:$0xff]
        %v1168 = vld [vmem:[%s1 + $0x3c0] sm:$0xff]
        %v1169 = vld [vmem:[%s1 + $0x3c8] sm:$0xff]
        %v1170 = vld [vmem:[%s1 + $0x3d0] sm:$0xff]
        %v1171 = vld [vmem:[%s1 + $0x3d8] sm:$0xff]
        %v1172 = vld [vmem:[%s1 + $0x3e0] sm:$0xff]
        %v1173 = vld [vmem:[%s1 + $0x3e8] sm:$0xff]
        %v1174 = vld [vmem:[%s1 + $0x3f0] sm:$0xff]
        %v1175 = vld [vmem:[%s1 + $0x3f8] sm:$0xff]
        %v1176 = vld [vmem:[%s1 + $0x400] sm:$0xff]
        %v1177 = vld [vmem:[%s1 + $0x408] sm:$0xff]
        %v1178 = vld [vmem:[%s1 + $0x410] sm:$0xff]
        %v1179 = vld [vmem:[%s1 + $0x418] sm:$0xff]
        %v1180 = vld [vmem:[%s1 + $0x420] sm:$0xff]
        %v1181 = vld [vmem:[%s1 + $0x428] sm:$0xff]
        %v1182 = vld [vmem:[%s1 + $0x430] sm:$0xff]
        %v1183 = vld [vmem:[%s1 + $0x438] sm:$0xff]
        %v1184 = vld [vmem:[%s1 + $0x440] sm:$0xff]
        %v1185 = vld [vmem:[%s1 + $0x448] sm:$0xff]
        %v1186 = vld [vmem:[%s1 + $0x450] sm:$0xff]
        %v1187 = vld [vmem:[%s1 + $0x458] sm:$0xff]
        %v1188 = vld [vmem:[%s1 + $0x460] sm:$0xff]
        %v1189 = vld [vmem:[%s1 + $0x468] sm:$0xff]
        %v1190 = vld [vmem:[%s1 + $0x470] sm:$0xff]
        %v1191 = vld [vmem:[%s1 + $0x478] sm:$0xff]
        %v1192 = vld [vmem:[%s1 + $0x480] sm:$0xff]
        %v1193 = vld [vmem:[%s1 + $0x488] sm:$0xff]
        %v1194 = vld [vmem:[%s1 + $0x490] sm:$0xff]
        %v1195 = vld [vmem:[%s1 + $0x498] sm:$0xff]
        %v1196 = vld [vmem:[%s1 + $0x4a0] sm:$0xff]
        %v1197 = vld [vmem:[%s1 + $0x4a8] sm:$0xff]
        %v1198 = vld [vmem:[%s1 + $0x4b0] sm:$0xff]
        %v1199 = vld [vmem:[%s1 + $0x4b8] sm:$0xff]
        %v1200 = vld [vmem:[%s1 + $0x4c0] sm:$0xff]
        %v1201 = vld [vmem:[%s1 + $0x4c8] sm:$0xff]
        %v1202 = vld [vmem:[%s1 + $0x4d0] sm:$0xff]
        %v1203 = vld [vmem:[%s1 + $0x4d8] sm:$0xff]
        %v1204 = vld [vmem:[%s1 + $0x4e0] sm:$0xff]
        %v1205 = vld [vmem:[%s1 + $0x4e8] sm:$0xff]
        %v1206 = vld [vmem:[%s1 + $0x4f0] sm:$0xff]
        %v1207 = vld [vmem:[%s1 + $0x4f8] sm:$0xff]
        %v1208 = vld [vmem:[%s1 + $0x500] sm:$0xff]
        %v1209 = vld [vmem:[%s1 + $0x508] sm:$0xff]
        %v1210 = vld [vmem:[%s1 + $0x510] sm:$0xff]
        %v1211 = vld [vmem:[%s1 + $0x518] sm:$0xff]
        %v1212 = vld [vmem:[%s1 + $0x520] sm:$0xff]
        %v1213 = vld [vmem:[%s1 + $0x528] sm:$0xff]
        %v1214 = vld [vmem:[%s1 + $0x530] sm:$0xff]
        %v1215 = vld [vmem:[%s1 + $0x538] sm:$0xff]
        %v1216 = vld [vmem:[%s1 + $0x540] sm:$0xff]
        %v1217 = vld [vmem:[%s1 + $0x548] sm:$0xff]
        %v1218 = vld [vmem:[%s1 + $0x550] sm:$0xff]
        %v1219 = vld [vmem:[%s1 + $0x558] sm:$0xff]
        %v1220 = vld [vmem:[%s1 + $0x560] sm:$0xff]
        %v1221 = vld [vmem:[%s1 + $0x568] sm:$0xff]
        %v1222 = vld [vmem:[%s1 + $0x570] sm:$0xff]
        %v1223 = vld [vmem:[%s1 + $0x578] sm:$0xff]
        %v1224 = vld [vmem:[%s1 + $0x580] sm:$0xff]
        %v1225 = vld [vmem:[%s1 + $0x588] sm:$0xff]
        %v1226 = vld [vmem:[%s1 + $0x590] sm:$0xff]
        %v1227 = vld [vmem:[%s1 + $0x598] sm:$0xff]
        %v1228 = vld [vmem:[%s1 + $0x5a0] sm:$0xff]
        %v1229 = vld [vmem:[%s1 + $0x5a8] sm:$0xff]
        %v1230 = vld [vmem:[%s1 + $0x5b0] sm:$0xff]
        %v1231 = vld [vmem:[%s1 + $0x5b8] sm:$0xff]
        %v1232 = vld [vmem:[%s1 + $0x5c0] sm:$0xff]
        %v1233 = vld [vmem:[%s1 + $0x5c8] sm:$0xff]
        %v1234 = vld [vmem:[%s1 + $0x5d0] sm:$0xff]
        %v1235 = vld [vmem:[%s1 + $0x5d8] sm:$0xff]
        %v1236 = vld [vmem:[%s1 + $0x5e0] sm:$0xff]
        %v1237 = vld [vmem:[%s1 + $0x5e8] sm:$0xff]
        %v1238 = vld [vmem:[%s1 + $0x5f0] sm:$0xff]
        %v1239 = vld [vmem:[%s1 + $0x5f8] sm:$0xff]
        %v1240 = vld [vmem:[%s1 + $0x600] sm:$0xff]
        %v1241 = vld [vmem:[%s1 + $0x608] sm:$0xff]
        %v1242 = vld [vmem:[%s1 + $0x610] sm:$0xff]
        %v1243 = vld [vmem:[%s1 + $0x618] sm:$0xff]
        %v1244 = vld [vmem:[%s1 + $0x620] sm:$0xff]
        %v1245 = vld [vmem:[%s1 + $0x628] sm:$0xff]
        %v1246 = vld [vmem:[%s1 + $0x630] sm:$0xff]
        %v1247 = vld [vmem:[%s1 + $0x638] sm:$0xff]
        %v1248 = vld [vmem:[%s1 + $0x640] sm:$0xff]
        %v1249 = vld [vmem:[%s1 + $0x648] sm:$0xff]
        %v1250 = vld [vmem:[%s1 + $0x650] sm:$0xff]
        %v1251 = vld [vmem:[%s1 + $0x658] sm:$0xff]
        %v1252 = vld [vmem:[%s1 + $0x660] sm:$0xff]
        %v1253 = vld [vmem:[%s1 + $0x668] sm:$0xff]
        %v1254 = vld [vmem:[%s1 + $0x670] sm:$0xff]
        %v1255 = vld [vmem:[%s1 + $0x678] sm:$0xff]
        %v1256 = vld [vmem:[%s1 + $0x680] sm:$0xff]
        %v1257 = vld [vmem:[%s1 + $0x688] sm:$0xff]
        %v1258 = vld [vmem:[%s1 + $0x690] sm:$0xff]
        %v1259 = vld [vmem:[%s1 + $0x698] sm:$0xff]
        %v1260 = vld [vmem:[%s1 + $0x6a0] sm:$0xff]
        %v1261 = vld [vmem:[%s1 + $0x6a8] sm:$0xff]
        %v1262 = vld [vmem:[%s1 + $0x6b0] sm:$0xff]
        %v1263 = vld [vmem:[%s1 + $0x6b8] sm:$0xff]
        %v1264 = vld [vmem:[%s1 + $0x6c0] sm:$0xff]
        %v1265 = vld [vmem:[%s1 + $0x6c8] sm:$0xff]
        %v1266 = vld [vmem:[%s1 + $0x6d0] sm:$0xff]
        %v1267 = vld [vmem:[%s1 + $0x6d8] sm:$0xff]
        %v1268 = vld [vmem:[%s1 + $0x6e0] sm:$0xff]
        %v1269 = vld [vmem:[%s1 + $0x6e8] sm:$0xff]
        %v1270 = vld [vmem:[%s1 + $0x6f0] sm:$0xff]
        %v1271 = vld [vmem:[%s1 + $0x6f8] sm:$0xff]
        %v1272 = vld [vmem:[%s1 + $0x700] sm:$0xff]
        %v1273 = vld [vmem:[%s1 + $0x708] sm:$0xff]
        %v1274 = vld [vmem:[%s1 + $0x710] sm:$0xff]
        %v1275 = vld [vmem:[%s1 + $0x718] sm:$0xff]
        %v1276 = vld [vmem:[%s1 + $0x720] sm:$0xff]
        %v1277 = vld [vmem:[%s1 + $0x728] sm:$0xff]
        %v1278 = vld [vmem:[%s1 + $0x730] sm:$0xff]
        %v1279 = vld [vmem:[%s1 + $0x738] sm:$0xff]
        %v1280 = vld [vmem:[%s1 + $0x740] sm:$0xff]
        %v1281 = vld [vmem:[%s1 + $0x748] sm:$0xff]
        %v1282 = vld [vmem:[%s1 + $0x750] sm:$0xff]
        %v1283 = vld [vmem:[%s1 + $0x758] sm:$0xff]
        %v1284 = vld [vmem:[%s1 + $0x760] sm:$0xff]
        %v1285 = vld [vmem:[%s1 + $0x768] sm:$0xff]
        %v1286 = vld [vmem:[%s1 + $0x770] sm:$0xff]
        %v1287 = vld [vmem:[%s1 + $0x778] sm:$0xff]
        %v1288 = vld [vmem:[%s1 + $0x780] sm:$0xff]
        %v1289 = vld [vmem:[%s1 + $0x788] sm:$0xff]
        %v1290 = vld [vmem:[%s1 + $0x790] sm:$0xff]
        %v1291 = vld [vmem:[%s1 + $0x798] sm:$0xff]
        %v1292 = vld [vmem:[%s1 + $0x7a0] sm:$0xff]
        %v1293 = vld [vmem:[%s1 + $0x7a8] sm:$0xff]
        %v1294 = vld [vmem:[%s1 + $0x7b0] sm:$0xff]
        %v1295 = vld [vmem:[%s1 + $0x7b8] sm:$0xff]
        %v1296 = vld [vmem:[%s1 + $0x7c0] sm:$0xff]
        %v1297 = vld [vmem:[%s1 + $0x7c8] sm:$0xff]
        %v1298 = vld [vmem:[%s1 + $0x7d0] sm:$0xff]
        %v1299 = vld [vmem:[%s1 + $0x7d8] sm:$0xff]
        %v1300 = vld [vmem:[%s1 + $0x7e0] sm:$0xff]
        %v1301 = vld [vmem:[%s1 + $0x7e8] sm:$0xff]
        %v1302 = vld [vmem:[%s1 + $0x7f0] sm:$0xff]
        %v1303 = vld [vmem:[%s1 + $0x7f8] sm:$0xff]
        %v1304 = vld [vmem:[%s5] sm:$0xff]
        %v1305 = vld [vmem:[%s5 + $0x8] sm:$0xff]
        %v1306 = vld [vmem:[%s5 + $0x10] sm:$0xff]
        %v1307 = vld [vmem:[%s5 + $0x18] sm:$0xff]
        %v1308 = vld [vmem:[%s5 + $0x20] sm:$0xff]
        %v1309 = vld [vmem:[%s5 + $0x28] sm:$0xff]
        %v1310 = vld [vmem:[%s5 + $0x30] sm:$0xff]
        %v1311 = vld [vmem:[%s5 + $0x38] sm:$0xff]
        %v1312 = vld [vmem:[%s5 + $0x40] sm:$0xff]
        %v1313 = vld [vmem:[%s5 + $0x48] sm:$0xff]
        %v1314 = vld [vmem:[%s5 + $0x50] sm:$0xff]
        %v1315 = vld [vmem:[%s5 + $0x58] sm:$0xff]
        %v1316 = vld [vmem:[%s5 + $0x60] sm:$0xff]
        %v1317 = vld [vmem:[%s5 + $0x68] sm:$0xff]
        %v1318 = vld [vmem:[%s5 + $0x70] sm:$0xff]
        %v1319 = vld [vmem:[%s5 + $0x78] sm:$0xff]
        %v1320 = vld [vmem:[%s5 + $0x80] sm:$0xff]
        %v1321 = vld [vmem:[%s5 + $0x88] sm:$0xff]
        %v1322 = vld [vmem:[%s5 + $0x90] sm:$0xff]
        %v1323 = vld [vmem:[%s5 + $0x98] sm:$0xff]
        %v1324 = vld [vmem:[%s5 + $0xa0] sm:$0xff]
        %v1325 = vld [vmem:[%s5 + $0xa8] sm:$0xff]
        %v1326 = vld [vmem:[%s5 + $0xb0] sm:$0xff]
        %v1327 = vld [vmem:[%s5 + $0xb8] sm:$0xff]
        %v1328 = vld [vmem:[%s5 + $0xc0] sm:$0xff]
        %v1329 = vld [vmem:[%s5 + $0xc8] sm:$0xff]
        %v1330 = vld [vmem:[%s5 + $0xd0] sm:$0xff]
        %v1331 = vld [vmem:[%s5 + $0xd8] sm:$0xff]
        %v1332 = vld [vmem:[%s5 + $0xe0] sm:$0xff]
        %v1333 = vld [vmem:[%s5 + $0xe8] sm:$0xff]
        %v1334 = vld [vmem:[%s5 + $0xf0] sm:$0xff]
        %v1335 = vld [vmem:[%s5 + $0xf8] sm:$0xff]
        %v1336 = vld [vmem:[%s5 + $0x100] sm:$0xff]
        %v1337 = vld [vmem:[%s5 + $0x108] sm:$0xff]
        %v1338 = vld [vmem:[%s5 + $0x110] sm:$0xff]
        %v1339 = vld [vmem:[%s5 + $0x118] sm:$0xff]
        %v1340 = vld [vmem:[%s5 + $0x120] sm:$0xff]
        %v1341 = vld [vmem:[%s5 + $0x128] sm:$0xff]
        %v1342 = vld [vmem:[%s5 + $0x130] sm:$0xff]
        %v1343 = vld [vmem:[%s5 + $0x138] sm:$0xff]
        %v1344 = vld [vmem:[%s5 + $0x140] sm:$0xff]
        %v1345 = vld [vmem:[%s5 + $0x148] sm:$0xff]
        %v1346 = vld [vmem:[%s5 + $0x150] sm:$0xff]
        %v1347 = vld [vmem:[%s5 + $0x158] sm:$0xff]
        %v1348 = vld [vmem:[%s5 + $0x160] sm:$0xff]
        %v1349 = vld [vmem:[%s5 + $0x168] sm:$0xff]
        %v1350 = vld [vmem:[%s5 + $0x170] sm:$0xff]
        %v1351 = vld [vmem:[%s5 + $0x178] sm:$0xff]
        %v1352 = vld [vmem:[%s5 + $0x180] sm:$0xff]
        %v1353 = vld [vmem:[%s5 + $0x188] sm:$0xff]
        %v1354 = vld [vmem:[%s5 + $0x190] sm:$0xff]
        %v1355 = vld [vmem:[%s5 + $0x198] sm:$0xff]
        %v1356 = vld [vmem:[%s5 + $0x1a0] sm:$0xff]
        %v1357 = vld [vmem:[%s5 + $0x1a8] sm:$0xff]
        %v1358 = vld [vmem:[%s5 + $0x1b0] sm:$0xff]
        %v1359 = vld [vmem:[%s5 + $0x1b8] sm:$0xff]
        %v1360 = vld [vmem:[%s5 + $0x1c0] sm:$0xff]
        %v1361 = vld [vmem:[%s5 + $0x1c8] sm:$0xff]
        %v1362 = vld [vmem:[%s5 + $0x1d0] sm:$0xff]
        %v1363 = vld [vmem:[%s5 + $0x1d8] sm:$0xff]
        %v1364 = vld [vmem:[%s5 + $0x1e0] sm:$0xff]
        %v1365 = vld [vmem:[%s5 + $0x1e8] sm:$0xff]
        %v1366 = vld [vmem:[%s5 + $0x1f0] sm:$0xff]
        %v1367 = vld [vmem:[%s5 + $0x1f8] sm:$0xff]
        %1369 = vset.pattern.permute.xlu0 0
        %1370 = vperm.xlu0 %1369, %v1304
        %v1371 = vpop.permute.xlu0 %1370
        %1374 = vset.pattern.permute.xlu0 0
        %1375 = vperm.xlu0 %1374, %v1305
        %v1376 = vpop.permute.xlu0 %1375
        %1379 = vset.pattern.permute.xlu0 0
        %1380 = vperm.xlu0 %1379, %v1306
        %v1381 = vpop.permute.xlu0 %1380
        %1384 = vset.pattern.permute.xlu0 0
        %1385 = vperm.xlu0 %1384, %v1307
        %v1386 = vpop.permute.xlu0 %1385
        %1389 = vset.pattern.permute.xlu0 0
        %1390 = vperm.xlu0 %1389, %v1308
        %v1391 = vpop.permute.xlu0 %1390
        %1394 = vset.pattern.permute.xlu0 0
        %1395 = vperm.xlu0 %1394, %v1309
        %v1396 = vpop.permute.xlu0 %1395
        %1399 = vset.pattern.permute.xlu0 0
        %1400 = vperm.xlu0 %1399, %v1310
        %v1401 = vpop.permute.xlu0 %1400
        %1404 = vset.pattern.permute.xlu0 0
        %1405 = vperm.xlu0 %1404, %v1311
        %v1406 = vpop.permute.xlu0 %1405
        %1409 = vset.pattern.permute.xlu0 0
        %1410 = vperm.xlu0 %1409, %v1312
        %v1411 = vpop.permute.xlu0 %1410
        %1414 = vset.pattern.permute.xlu0 0
        %1415 = vperm.xlu0 %1414, %v1313
        %v1416 = vpop.permute.xlu0 %1415
        %1419 = vset.pattern.permute.xlu0 0
        %1420 = vperm.xlu0 %1419, %v1314
        %v1421 = vpop.permute.xlu0 %1420
        %1424 = vset.pattern.permute.xlu0 0
        %1425 = vperm.xlu0 %1424, %v1315
        %v1426 = vpop.permute.xlu0 %1425
        %1429 = vset.pattern.permute.xlu0 0
        %1430 = vperm.xlu0 %1429, %v1316
        %v1431 = vpop.permute.xlu0 %1430
        %1434 = vset.pattern.permute.xlu0 0
        %1435 = vperm.xlu0 %1434, %v1317
        %v1436 = vpop.permute.xlu0 %1435
        %1439 = vset.pattern.permute.xlu0 0
        %1440 = vperm.xlu0 %1439, %v1318
        %v1441 = vpop.permute.xlu0 %1440
        %1444 = vset.pattern.permute.xlu0 0
        %1445 = vperm.xlu0 %1444, %v1319
        %v1446 = vpop.permute.xlu0 %1445
        %1449 = vset.pattern.permute.xlu0 0
        %1450 = vperm.xlu0 %1449, %v1320
        %v1451 = vpop.permute.xlu0 %1450
        %1454 = vset.pattern.permute.xlu0 0
        %1455 = vperm.xlu0 %1454, %v1321
        %v1456 = vpop.permute.xlu0 %1455
        %1459 = vset.pattern.permute.xlu0 0
        %1460 = vperm.xlu0 %1459, %v1322
        %v1461 = vpop.permute.xlu0 %1460
        %1464 = vset.pattern.permute.xlu0 0
        %1465 = vperm.xlu0 %1464, %v1323
        %v1466 = vpop.permute.xlu0 %1465
        %1469 = vset.pattern.permute.xlu0 0
        %1470 = vperm.xlu0 %1469, %v1324
        %v1471 = vpop.permute.xlu0 %1470
        %1474 = vset.pattern.permute.xlu0 0
        %1475 = vperm.xlu0 %1474, %v1325
        %v1476 = vpop.permute.xlu0 %1475
        %1479 = vset.pattern.permute.xlu0 0
        %1480 = vperm.xlu0 %1479, %v1326
        %v1481 = vpop.permute.xlu0 %1480
        %1484 = vset.pattern.permute.xlu0 0
        %1485 = vperm.xlu0 %1484, %v1327
        %v1486 = vpop.permute.xlu0 %1485
        %1489 = vset.pattern.permute.xlu0 0
        %1490 = vperm.xlu0 %1489, %v1328
        %v1491 = vpop.permute.xlu0 %1490
        %1494 = vset.pattern.permute.xlu0 0
        %1495 = vperm.xlu0 %1494, %v1329
        %v1496 = vpop.permute.xlu0 %1495
        %1499 = vset.pattern.permute.xlu0 0
        %1500 = vperm.xlu0 %1499, %v1330
        %v1501 = vpop.permute.xlu0 %1500
        %1504 = vset.pattern.permute.xlu0 0
        %1505 = vperm.xlu0 %1504, %v1331
        %v1506 = vpop.permute.xlu0 %1505
        %1509 = vset.pattern.permute.xlu0 0
        %1510 = vperm.xlu0 %1509, %v1332
        %v1511 = vpop.permute.xlu0 %1510
        %1514 = vset.pattern.permute.xlu0 0
        %1515 = vperm.xlu0 %1514, %v1333
        %v1516 = vpop.permute.xlu0 %1515
        %1519 = vset.pattern.permute.xlu0 0
        %1520 = vperm.xlu0 %1519, %v1334
        %v1521 = vpop.permute.xlu0 %1520
        %1524 = vset.pattern.permute.xlu0 0
        %1525 = vperm.xlu0 %1524, %v1335
        %v1526 = vpop.permute.xlu0 %1525
        %1529 = vset.pattern.permute.xlu0 0
        %1530 = vperm.xlu0 %1529, %v1336
        %v1531 = vpop.permute.xlu0 %1530
        %1534 = vset.pattern.permute.xlu0 0
        %1535 = vperm.xlu0 %1534, %v1337
        %v1536 = vpop.permute.xlu0 %1535
        %1539 = vset.pattern.permute.xlu0 0
        %1540 = vperm.xlu0 %1539, %v1338
        %v1541 = vpop.permute.xlu0 %1540
        %1544 = vset.pattern.permute.xlu0 0
        %1545 = vperm.xlu0 %1544, %v1339
        %v1546 = vpop.permute.xlu0 %1545
        %1549 = vset.pattern.permute.xlu0 0
        %1550 = vperm.xlu0 %1549, %v1340
        %v1551 = vpop.permute.xlu0 %1550
        %1554 = vset.pattern.permute.xlu0 0
        %1555 = vperm.xlu0 %1554, %v1341
        %v1556 = vpop.permute.xlu0 %1555
        %1559 = vset.pattern.permute.xlu0 0
        %1560 = vperm.xlu0 %1559, %v1342
        %v1561 = vpop.permute.xlu0 %1560
        %1564 = vset.pattern.permute.xlu0 0
        %1565 = vperm.xlu0 %1564, %v1343
        %v1566 = vpop.permute.xlu0 %1565
        %1569 = vset.pattern.permute.xlu0 0
        %1570 = vperm.xlu0 %1569, %v1344
        %v1571 = vpop.permute.xlu0 %1570
        %1574 = vset.pattern.permute.xlu0 0
        %1575 = vperm.xlu0 %1574, %v1345
        %v1576 = vpop.permute.xlu0 %1575
        %1579 = vset.pattern.permute.xlu0 0
        %1580 = vperm.xlu0 %1579, %v1346
        %v1581 = vpop.permute.xlu0 %1580
        %1584 = vset.pattern.permute.xlu0 0
        %1585 = vperm.xlu0 %1584, %v1347
        %v1586 = vpop.permute.xlu0 %1585
        %1589 = vset.pattern.permute.xlu0 0
        %1590 = vperm.xlu0 %1589, %v1348
        %v1591 = vpop.permute.xlu0 %1590
        %1594 = vset.pattern.permute.xlu0 0
        %1595 = vperm.xlu0 %1594, %v1349
        %v1596 = vpop.permute.xlu0 %1595
        %1599 = vset.pattern.permute.xlu0 0
        %1600 = vperm.xlu0 %1599, %v1350
        %v1601 = vpop.permute.xlu0 %1600
        %1604 = vset.pattern.permute.xlu0 0
        %1605 = vperm.xlu0 %1604, %v1351
        %v1606 = vpop.permute.xlu0 %1605
        %1609 = vset.pattern.permute.xlu0 0
        %1610 = vperm.xlu0 %1609, %v1352
        %v1611 = vpop.permute.xlu0 %1610
        %1614 = vset.pattern.permute.xlu0 0
        %1615 = vperm.xlu0 %1614, %v1353
        %v1616 = vpop.permute.xlu0 %1615
        %1619 = vset.pattern.permute.xlu0 0
        %1620 = vperm.xlu0 %1619, %v1354
        %v1621 = vpop.permute.xlu0 %1620
        %1624 = vset.pattern.permute.xlu0 0
        %1625 = vperm.xlu0 %1624, %v1355
        %v1626 = vpop.permute.xlu0 %1625
        %1629 = vset.pattern.permute.xlu0 0
        %1630 = vperm.xlu0 %1629, %v1356
        %v1631 = vpop.permute.xlu0 %1630
        %1634 = vset.pattern.permute.xlu0 0
        %1635 = vperm.xlu0 %1634, %v1357
        %v1636 = vpop.permute.xlu0 %1635
        %1639 = vset.pattern.permute.xlu0 0
        %1640 = vperm.xlu0 %1639, %v1358
        %v1641 = vpop.permute.xlu0 %1640
        %1644 = vset.pattern.permute.xlu0 0
        %1645 = vperm.xlu0 %1644, %v1359
        %v1646 = vpop.permute.xlu0 %1645
        %1649 = vset.pattern.permute.xlu0 0
        %1650 = vperm.xlu0 %1649, %v1360
        %v1651 = vpop.permute.xlu0 %1650
        %1654 = vset.pattern.permute.xlu0 0
        %1655 = vperm.xlu0 %1654, %v1361
        %v1656 = vpop.permute.xlu0 %1655
        %1659 = vset.pattern.permute.xlu0 0
        %1660 = vperm.xlu0 %1659, %v1362
        %v1661 = vpop.permute.xlu0 %1660
        %1664 = vset.pattern.permute.xlu0 0
        %1665 = vperm.xlu0 %1664, %v1363
        %v1666 = vpop.permute.xlu0 %1665
        %1669 = vset.pattern.permute.xlu0 0
        %1670 = vperm.xlu0 %1669, %v1364
        %v1671 = vpop.permute.xlu0 %1670
        %1674 = vset.pattern.permute.xlu0 0
        %1675 = vperm.xlu0 %1674, %v1365
        %v1676 = vpop.permute.xlu0 %1675
        %1679 = vset.pattern.permute.xlu0 0
        %1680 = vperm.xlu0 %1679, %v1366
        %v1681 = vpop.permute.xlu0 %1680
        %1684 = vset.pattern.permute.xlu0 0
        %1685 = vperm.xlu0 %1684, %v1367
        %v1686 = vpop.permute.xlu0 %1685
        %v1944 = vunpack.c.l.b16 %v1048
        %v1945 = vunpack.c.h.b16 %v1048
        %v1946 = vunpack.c.l.b16 %v1049
        %v1947 = vunpack.c.h.b16 %v1049
        %v1948 = vunpack.c.l.b16 %v1050
        %v1949 = vunpack.c.h.b16 %v1050
        %v1950 = vunpack.c.l.b16 %v1051
        %v1951 = vunpack.c.h.b16 %v1051
        %v1952 = vunpack.c.l.b16 %v1052
        %v1953 = vunpack.c.h.b16 %v1052
        %v1954 = vunpack.c.l.b16 %v1053
        %v1955 = vunpack.c.h.b16 %v1053
        %v1956 = vunpack.c.l.b16 %v1054
        %v1957 = vunpack.c.h.b16 %v1054
        %v1958 = vunpack.c.l.b16 %v1055
        %v1959 = vunpack.c.h.b16 %v1055
        %v1960 = vunpack.c.l.b16 %v1056
        %v1961 = vunpack.c.h.b16 %v1056
        %v1962 = vunpack.c.l.b16 %v1057
        %v1963 = vunpack.c.h.b16 %v1057
        %v1964 = vunpack.c.l.b16 %v1058
        %v1965 = vunpack.c.h.b16 %v1058
        %v1966 = vunpack.c.l.b16 %v1059
        %v1967 = vunpack.c.h.b16 %v1059
        %v1968 = vunpack.c.l.b16 %v1060
        %v1969 = vunpack.c.h.b16 %v1060
        %v1970 = vunpack.c.l.b16 %v1061
        %v1971 = vunpack.c.h.b16 %v1061
        %v1972 = vunpack.c.l.b16 %v1062
        %v1973 = vunpack.c.h.b16 %v1062
        %v1974 = vunpack.c.l.b16 %v1063
        %v1975 = vunpack.c.h.b16 %v1063
        %v1976 = vunpack.c.l.b16 %v1064
        %v1977 = vunpack.c.h.b16 %v1064
        %v1978 = vunpack.c.l.b16 %v1065
        %v1979 = vunpack.c.h.b16 %v1065
        %v1980 = vunpack.c.l.b16 %v1066
        %v1981 = vunpack.c.h.b16 %v1066
        %v1982 = vunpack.c.l.b16 %v1067
        %v1983 = vunpack.c.h.b16 %v1067
        %v1984 = vunpack.c.l.b16 %v1068
        %v1985 = vunpack.c.h.b16 %v1068
        %v1986 = vunpack.c.l.b16 %v1069
        %v1987 = vunpack.c.h.b16 %v1069
        %v1988 = vunpack.c.l.b16 %v1070
        %v1989 = vunpack.c.h.b16 %v1070
        %v1990 = vunpack.c.l.b16 %v1071
        %v1991 = vunpack.c.h.b16 %v1071
        %v1992 = vunpack.c.l.b16 %v1072
        %v1993 = vunpack.c.h.b16 %v1072
        %v1994 = vunpack.c.l.b16 %v1073
        %v1995 = vunpack.c.h.b16 %v1073
        %v1996 = vunpack.c.l.b16 %v1074
        %v1997 = vunpack.c.h.b16 %v1074
        %v1998 = vunpack.c.l.b16 %v1075
        %v1999 = vunpack.c.h.b16 %v1075
        %v2000 = vunpack.c.l.b16 %v1076
        %v2001 = vunpack.c.h.b16 %v1076
        %v2002 = vunpack.c.l.b16 %v1077
        %v2003 = vunpack.c.h.b16 %v1077
        %v2004 = vunpack.c.l.b16 %v1078
        %v2005 = vunpack.c.h.b16 %v1078
        %v2006 = vunpack.c.l.b16 %v1079
        %v2007 = vunpack.c.h.b16 %v1079
        %v2008 = vunpack.c.l.b16 %v1080
        %v2009 = vunpack.c.h.b16 %v1080
        %v2010 = vunpack.c.l.b16 %v1081
        %v2011 = vunpack.c.h.b16 %v1081
        %v2012 = vunpack.c.l.b16 %v1082
        %v2013 = vunpack.c.h.b16 %v1082
        %v2014 = vunpack.c.l.b16 %v1083
        %v2015 = vunpack.c.h.b16 %v1083
        %v2016 = vunpack.c.l.b16 %v1084
        %v2017 = vunpack.c.h.b16 %v1084
        %v2018 = vunpack.c.l.b16 %v1085
        %v2019 = vunpack.c.h.b16 %v1085
        %v2020 = vunpack.c.l.b16 %v1086
        %v2021 = vunpack.c.h.b16 %v1086
        %v2022 = vunpack.c.l.b16 %v1087
        %v2023 = vunpack.c.h.b16 %v1087
        %v2024 = vunpack.c.l.b16 %v1088
        %v2025 = vunpack.c.h.b16 %v1088
        %v2026 = vunpack.c.l.b16 %v1089
        %v2027 = vunpack.c.h.b16 %v1089
        %v2028 = vunpack.c.l.b16 %v1090
        %v2029 = vunpack.c.h.b16 %v1090
        %v2030 = vunpack.c.l.b16 %v1091
        %v2031 = vunpack.c.h.b16 %v1091
        %v2032 = vunpack.c.l.b16 %v1092
        %v2033 = vunpack.c.h.b16 %v1092
        %v2034 = vunpack.c.l.b16 %v1093
        %v2035 = vunpack.c.h.b16 %v1093
        %v2036 = vunpack.c.l.b16 %v1094
        %v2037 = vunpack.c.h.b16 %v1094
        %v2038 = vunpack.c.l.b16 %v1095
        %v2039 = vunpack.c.h.b16 %v1095
        %v2040 = vunpack.c.l.b16 %v1096
        %v2041 = vunpack.c.h.b16 %v1096
        %v2042 = vunpack.c.l.b16 %v1097
        %v2043 = vunpack.c.h.b16 %v1097
        %v2044 = vunpack.c.l.b16 %v1098
        %v2045 = vunpack.c.h.b16 %v1098
        %v2046 = vunpack.c.l.b16 %v1099
        %v2047 = vunpack.c.h.b16 %v1099
        %v2048 = vunpack.c.l.b16 %v1100
        %v2049 = vunpack.c.h.b16 %v1100
        %v2050 = vunpack.c.l.b16 %v1101
        %v2051 = vunpack.c.h.b16 %v1101
        %v2052 = vunpack.c.l.b16 %v1102
        %v2053 = vunpack.c.h.b16 %v1102
        %v2054 = vunpack.c.l.b16 %v1103
        %v2055 = vunpack.c.h.b16 %v1103
        %v2056 = vunpack.c.l.b16 %v1104
        %v2057 = vunpack.c.h.b16 %v1104
        %v2058 = vunpack.c.l.b16 %v1105
        %v2059 = vunpack.c.h.b16 %v1105
        %v2060 = vunpack.c.l.b16 %v1106
        %v2061 = vunpack.c.h.b16 %v1106
        %v2062 = vunpack.c.l.b16 %v1107
        %v2063 = vunpack.c.h.b16 %v1107
        %v2064 = vunpack.c.l.b16 %v1108
        %v2065 = vunpack.c.h.b16 %v1108
        %v2066 = vunpack.c.l.b16 %v1109
        %v2067 = vunpack.c.h.b16 %v1109
        %v2068 = vunpack.c.l.b16 %v1110
        %v2069 = vunpack.c.h.b16 %v1110
        %v2070 = vunpack.c.l.b16 %v1111
        %v2071 = vunpack.c.h.b16 %v1111
        %v2072 = vunpack.c.l.b16 %v1112
        %v2073 = vunpack.c.h.b16 %v1112
        %v2074 = vunpack.c.l.b16 %v1113
        %v2075 = vunpack.c.h.b16 %v1113
        %v2076 = vunpack.c.l.b16 %v1114
        %v2077 = vunpack.c.h.b16 %v1114
        %v2078 = vunpack.c.l.b16 %v1115
        %v2079 = vunpack.c.h.b16 %v1115
        %v2080 = vunpack.c.l.b16 %v1116
        %v2081 = vunpack.c.h.b16 %v1116
        %v2082 = vunpack.c.l.b16 %v1117
        %v2083 = vunpack.c.h.b16 %v1117
        %v2084 = vunpack.c.l.b16 %v1118
        %v2085 = vunpack.c.h.b16 %v1118
        %v2086 = vunpack.c.l.b16 %v1119
        %v2087 = vunpack.c.h.b16 %v1119
        %v2088 = vunpack.c.l.b16 %v1120
        %v2089 = vunpack.c.h.b16 %v1120
        %v2090 = vunpack.c.l.b16 %v1121
        %v2091 = vunpack.c.h.b16 %v1121
        %v2092 = vunpack.c.l.b16 %v1122
        %v2093 = vunpack.c.h.b16 %v1122
        %v2094 = vunpack.c.l.b16 %v1123
        %v2095 = vunpack.c.h.b16 %v1123
        %v2096 = vunpack.c.l.b16 %v1124
        %v2097 = vunpack.c.h.b16 %v1124
        %v2098 = vunpack.c.l.b16 %v1125
        %v2099 = vunpack.c.h.b16 %v1125
        %v2100 = vunpack.c.l.b16 %v1126
        %v2101 = vunpack.c.h.b16 %v1126
        %v2102 = vunpack.c.l.b16 %v1127
        %v2103 = vunpack.c.h.b16 %v1127
        %v2104 = vunpack.c.l.b16 %v1128
        %v2105 = vunpack.c.h.b16 %v1128
        %v2106 = vunpack.c.l.b16 %v1129
        %v2107 = vunpack.c.h.b16 %v1129
        %v2108 = vunpack.c.l.b16 %v1130
        %v2109 = vunpack.c.h.b16 %v1130
        %v2110 = vunpack.c.l.b16 %v1131
        %v2111 = vunpack.c.h.b16 %v1131
        %v2112 = vunpack.c.l.b16 %v1132
        %v2113 = vunpack.c.h.b16 %v1132
        %v2114 = vunpack.c.l.b16 %v1133
        %v2115 = vunpack.c.h.b16 %v1133
        %v2116 = vunpack.c.l.b16 %v1134
        %v2117 = vunpack.c.h.b16 %v1134
        %v2118 = vunpack.c.l.b16 %v1135
        %v2119 = vunpack.c.h.b16 %v1135
        %v2120 = vunpack.c.l.b16 %v1136
        %v2121 = vunpack.c.h.b16 %v1136
        %v2122 = vunpack.c.l.b16 %v1137
        %v2123 = vunpack.c.h.b16 %v1137
        %v2124 = vunpack.c.l.b16 %v1138
        %v2125 = vunpack.c.h.b16 %v1138
        %v2126 = vunpack.c.l.b16 %v1139
        %v2127 = vunpack.c.h.b16 %v1139
        %v2128 = vunpack.c.l.b16 %v1140
        %v2129 = vunpack.c.h.b16 %v1140
        %v2130 = vunpack.c.l.b16 %v1141
        %v2131 = vunpack.c.h.b16 %v1141
        %v2132 = vunpack.c.l.b16 %v1142
        %v2133 = vunpack.c.h.b16 %v1142
        %v2134 = vunpack.c.l.b16 %v1143
        %v2135 = vunpack.c.h.b16 %v1143
        %v2136 = vunpack.c.l.b16 %v1144
        %v2137 = vunpack.c.h.b16 %v1144
        %v2138 = vunpack.c.l.b16 %v1145
        %v2139 = vunpack.c.h.b16 %v1145
        %v2140 = vunpack.c.l.b16 %v1146
        %v2141 = vunpack.c.h.b16 %v1146
        %v2142 = vunpack.c.l.b16 %v1147
        %v2143 = vunpack.c.h.b16 %v1147
        %v2144 = vunpack.c.l.b16 %v1148
        %v2145 = vunpack.c.h.b16 %v1148
        %v2146 = vunpack.c.l.b16 %v1149
        %v2147 = vunpack.c.h.b16 %v1149
        %v2148 = vunpack.c.l.b16 %v1150
        %v2149 = vunpack.c.h.b16 %v1150
        %v2150 = vunpack.c.l.b16 %v1151
        %v2151 = vunpack.c.h.b16 %v1151
        %v2152 = vunpack.c.l.b16 %v1152
        %v2153 = vunpack.c.h.b16 %v1152
        %v2154 = vunpack.c.l.b16 %v1153
        %v2155 = vunpack.c.h.b16 %v1153
        %v2156 = vunpack.c.l.b16 %v1154
        %v2157 = vunpack.c.h.b16 %v1154
        %v2158 = vunpack.c.l.b16 %v1155
        %v2159 = vunpack.c.h.b16 %v1155
        %v2160 = vunpack.c.l.b16 %v1156
        %v2161 = vunpack.c.h.b16 %v1156
        %v2162 = vunpack.c.l.b16 %v1157
        %v2163 = vunpack.c.h.b16 %v1157
        %v2164 = vunpack.c.l.b16 %v1158
        %v2165 = vunpack.c.h.b16 %v1158
        %v2166 = vunpack.c.l.b16 %v1159
        %v2167 = vunpack.c.h.b16 %v1159
        %v2168 = vunpack.c.l.b16 %v1160
        %v2169 = vunpack.c.h.b16 %v1160
        %v2170 = vunpack.c.l.b16 %v1161
        %v2171 = vunpack.c.h.b16 %v1161
        %v2172 = vunpack.c.l.b16 %v1162
        %v2173 = vunpack.c.h.b16 %v1162
        %v2174 = vunpack.c.l.b16 %v1163
        %v2175 = vunpack.c.h.b16 %v1163
        %v2176 = vunpack.c.l.b16 %v1164
        %v2177 = vunpack.c.h.b16 %v1164
        %v2178 = vunpack.c.l.b16 %v1165
        %v2179 = vunpack.c.h.b16 %v1165
        %v2180 = vunpack.c.l.b16 %v1166
        %v2181 = vunpack.c.h.b16 %v1166
        %v2182 = vunpack.c.l.b16 %v1167
        %v2183 = vunpack.c.h.b16 %v1167
        %v2184 = vunpack.c.l.b16 %v1168
        %v2185 = vunpack.c.h.b16 %v1168
        %v2186 = vunpack.c.l.b16 %v1169
        %v2187 = vunpack.c.h.b16 %v1169
        %v2188 = vunpack.c.l.b16 %v1170
        %v2189 = vunpack.c.h.b16 %v1170
        %v2190 = vunpack.c.l.b16 %v1171
        %v2191 = vunpack.c.h.b16 %v1171
        %v2192 = vunpack.c.l.b16 %v1172
        %v2193 = vunpack.c.h.b16 %v1172
        %v2194 = vunpack.c.l.b16 %v1173
        %v2195 = vunpack.c.h.b16 %v1173
        %v2196 = vunpack.c.l.b16 %v1174
        %v2197 = vunpack.c.h.b16 %v1174
        %v2198 = vunpack.c.l.b16 %v1175
        %v2199 = vunpack.c.h.b16 %v1175
        %v2200 = vunpack.c.l.b16 %v1176
        %v2201 = vunpack.c.h.b16 %v1176
        %v2202 = vunpack.c.l.b16 %v1177
        %v2203 = vunpack.c.h.b16 %v1177
        %v2204 = vunpack.c.l.b16 %v1178
        %v2205 = vunpack.c.h.b16 %v1178
        %v2206 = vunpack.c.l.b16 %v1179
        %v2207 = vunpack.c.h.b16 %v1179
        %v2208 = vunpack.c.l.b16 %v1180
        %v2209 = vunpack.c.h.b16 %v1180
        %v2210 = vunpack.c.l.b16 %v1181
        %v2211 = vunpack.c.h.b16 %v1181
        %v2212 = vunpack.c.l.b16 %v1182
        %v2213 = vunpack.c.h.b16 %v1182
        %v2214 = vunpack.c.l.b16 %v1183
        %v2215 = vunpack.c.h.b16 %v1183
        %v2216 = vunpack.c.l.b16 %v1184
        %v2217 = vunpack.c.h.b16 %v1184
        %v2218 = vunpack.c.l.b16 %v1185
        %v2219 = vunpack.c.h.b16 %v1185
        %v2220 = vunpack.c.l.b16 %v1186
        %v2221 = vunpack.c.h.b16 %v1186
        %v2222 = vunpack.c.l.b16 %v1187
        %v2223 = vunpack.c.h.b16 %v1187
        %v2224 = vunpack.c.l.b16 %v1188
        %v2225 = vunpack.c.h.b16 %v1188
        %v2226 = vunpack.c.l.b16 %v1189
        %v2227 = vunpack.c.h.b16 %v1189
        %v2228 = vunpack.c.l.b16 %v1190
        %v2229 = vunpack.c.h.b16 %v1190
        %v2230 = vunpack.c.l.b16 %v1191
        %v2231 = vunpack.c.h.b16 %v1191
        %v2232 = vunpack.c.l.b16 %v1192
        %v2233 = vunpack.c.h.b16 %v1192
        %v2234 = vunpack.c.l.b16 %v1193
        %v2235 = vunpack.c.h.b16 %v1193
        %v2236 = vunpack.c.l.b16 %v1194
        %v2237 = vunpack.c.h.b16 %v1194
        %v2238 = vunpack.c.l.b16 %v1195
        %v2239 = vunpack.c.h.b16 %v1195
        %v2240 = vunpack.c.l.b16 %v1196
        %v2241 = vunpack.c.h.b16 %v1196
        %v2242 = vunpack.c.l.b16 %v1197
        %v2243 = vunpack.c.h.b16 %v1197
        %v2244 = vunpack.c.l.b16 %v1198
        %v2245 = vunpack.c.h.b16 %v1198
        %v2246 = vunpack.c.l.b16 %v1199
        %v2247 = vunpack.c.h.b16 %v1199
        %v2248 = vunpack.c.l.b16 %v1200
        %v2249 = vunpack.c.h.b16 %v1200
        %v2250 = vunpack.c.l.b16 %v1201
        %v2251 = vunpack.c.h.b16 %v1201
        %v2252 = vunpack.c.l.b16 %v1202
        %v2253 = vunpack.c.h.b16 %v1202
        %v2254 = vunpack.c.l.b16 %v1203
        %v2255 = vunpack.c.h.b16 %v1203
        %v2256 = vunpack.c.l.b16 %v1204
        %v2257 = vunpack.c.h.b16 %v1204
        %v2258 = vunpack.c.l.b16 %v1205
        %v2259 = vunpack.c.h.b16 %v1205
        %v2260 = vunpack.c.l.b16 %v1206
        %v2261 = vunpack.c.h.b16 %v1206
        %v2262 = vunpack.c.l.b16 %v1207
        %v2263 = vunpack.c.h.b16 %v1207
        %v2264 = vunpack.c.l.b16 %v1208
        %v2265 = vunpack.c.h.b16 %v1208
        %v2266 = vunpack.c.l.b16 %v1209
        %v2267 = vunpack.c.h.b16 %v1209
        %v2268 = vunpack.c.l.b16 %v1210
        %v2269 = vunpack.c.h.b16 %v1210
        %v2270 = vunpack.c.l.b16 %v1211
        %v2271 = vunpack.c.h.b16 %v1211
        %v2272 = vunpack.c.l.b16 %v1212
        %v2273 = vunpack.c.h.b16 %v1212
        %v2274 = vunpack.c.l.b16 %v1213
        %v2275 = vunpack.c.h.b16 %v1213
        %v2276 = vunpack.c.l.b16 %v1214
        %v2277 = vunpack.c.h.b16 %v1214
        %v2278 = vunpack.c.l.b16 %v1215
        %v2279 = vunpack.c.h.b16 %v1215
        %v2280 = vunpack.c.l.b16 %v1216
        %v2281 = vunpack.c.h.b16 %v1216
        %v2282 = vunpack.c.l.b16 %v1217
        %v2283 = vunpack.c.h.b16 %v1217
        %v2284 = vunpack.c.l.b16 %v1218
        %v2285 = vunpack.c.h.b16 %v1218
        %v2286 = vunpack.c.l.b16 %v1219
        %v2287 = vunpack.c.h.b16 %v1219
        %v2288 = vunpack.c.l.b16 %v1220
        %v2289 = vunpack.c.h.b16 %v1220
        %v2290 = vunpack.c.l.b16 %v1221
        %v2291 = vunpack.c.h.b16 %v1221
        %v2292 = vunpack.c.l.b16 %v1222
        %v2293 = vunpack.c.h.b16 %v1222
        %v2294 = vunpack.c.l.b16 %v1223
        %v2295 = vunpack.c.h.b16 %v1223
        %v2296 = vunpack.c.l.b16 %v1224
        %v2297 = vunpack.c.h.b16 %v1224
        %v2298 = vunpack.c.l.b16 %v1225
        %v2299 = vunpack.c.h.b16 %v1225
        %v2300 = vunpack.c.l.b16 %v1226
        %v2301 = vunpack.c.h.b16 %v1226
        %v2302 = vunpack.c.l.b16 %v1227
        %v2303 = vunpack.c.h.b16 %v1227
        %v2304 = vunpack.c.l.b16 %v1228
        %v2305 = vunpack.c.h.b16 %v1228
        %v2306 = vunpack.c.l.b16 %v1229
        %v2307 = vunpack.c.h.b16 %v1229
        %v2308 = vunpack.c.l.b16 %v1230
        %v2309 = vunpack.c.h.b16 %v1230
        %v2310 = vunpack.c.l.b16 %v1231
        %v2311 = vunpack.c.h.b16 %v1231
        %v2312 = vunpack.c.l.b16 %v1232
        %v2313 = vunpack.c.h.b16 %v1232
        %v2314 = vunpack.c.l.b16 %v1233
        %v2315 = vunpack.c.h.b16 %v1233
        %v2316 = vunpack.c.l.b16 %v1234
        %v2317 = vunpack.c.h.b16 %v1234
        %v2318 = vunpack.c.l.b16 %v1235
        %v2319 = vunpack.c.h.b16 %v1235
        %v2320 = vunpack.c.l.b16 %v1236
        %v2321 = vunpack.c.h.b16 %v1236
        %v2322 = vunpack.c.l.b16 %v1237
        %v2323 = vunpack.c.h.b16 %v1237
        %v2324 = vunpack.c.l.b16 %v1238
        %v2325 = vunpack.c.h.b16 %v1238
        %v2326 = vunpack.c.l.b16 %v1239
        %v2327 = vunpack.c.h.b16 %v1239
        %v2328 = vunpack.c.l.b16 %v1240
        %v2329 = vunpack.c.h.b16 %v1240
        %v2330 = vunpack.c.l.b16 %v1241
        %v2331 = vunpack.c.h.b16 %v1241
        %v2332 = vunpack.c.l.b16 %v1242
        %v2333 = vunpack.c.h.b16 %v1242
        %v2334 = vunpack.c.l.b16 %v1243
        %v2335 = vunpack.c.h.b16 %v1243
        %v2336 = vunpack.c.l.b16 %v1244
        %v2337 = vunpack.c.h.b16 %v1244
        %v2338 = vunpack.c.l.b16 %v1245
        %v2339 = vunpack.c.h.b16 %v1245
        %v2340 = vunpack.c.l.b16 %v1246
        %v2341 = vunpack.c.h.b16 %v1246
        %v2342 = vunpack.c.l.b16 %v1247
        %v2343 = vunpack.c.h.b16 %v1247
        %v2344 = vunpack.c.l.b16 %v1248
        %v2345 = vunpack.c.h.b16 %v1248
        %v2346 = vunpack.c.l.b16 %v1249
        %v2347 = vunpack.c.h.b16 %v1249
        %v2348 = vunpack.c.l.b16 %v1250
        %v2349 = vunpack.c.h.b16 %v1250
        %v2350 = vunpack.c.l.b16 %v1251
        %v2351 = vunpack.c.h.b16 %v1251
        %v2352 = vunpack.c.l.b16 %v1252
        %v2353 = vunpack.c.h.b16 %v1252
        %v2354 = vunpack.c.l.b16 %v1253
        %v2355 = vunpack.c.h.b16 %v1253
        %v2356 = vunpack.c.l.b16 %v1254
        %v2357 = vunpack.c.h.b16 %v1254
        %v2358 = vunpack.c.l.b16 %v1255
        %v2359 = vunpack.c.h.b16 %v1255
        %v2360 = vunpack.c.l.b16 %v1256
        %v2361 = vunpack.c.h.b16 %v1256
        %v2362 = vunpack.c.l.b16 %v1257
        %v2363 = vunpack.c.h.b16 %v1257
        %v2364 = vunpack.c.l.b16 %v1258
        %v2365 = vunpack.c.h.b16 %v1258
        %v2366 = vunpack.c.l.b16 %v1259
        %v2367 = vunpack.c.h.b16 %v1259
        %v2368 = vunpack.c.l.b16 %v1260
        %v2369 = vunpack.c.h.b16 %v1260
        %v2370 = vunpack.c.l.b16 %v1261
        %v2371 = vunpack.c.h.b16 %v1261
        %v2372 = vunpack.c.l.b16 %v1262
        %v2373 = vunpack.c.h.b16 %v1262
        %v2374 = vunpack.c.l.b16 %v1263
        %v2375 = vunpack.c.h.b16 %v1263
        %v2376 = vunpack.c.l.b16 %v1264
        %v2377 = vunpack.c.h.b16 %v1264
        %v2378 = vunpack.c.l.b16 %v1265
        %v2379 = vunpack.c.h.b16 %v1265
        %v2380 = vunpack.c.l.b16 %v1266
        %v2381 = vunpack.c.h.b16 %v1266
        %v2382 = vunpack.c.l.b16 %v1267
        %v2383 = vunpack.c.h.b16 %v1267
        %v2384 = vunpack.c.l.b16 %v1268
        %v2385 = vunpack.c.h.b16 %v1268
        %v2386 = vunpack.c.l.b16 %v1269
        %v2387 = vunpack.c.h.b16 %v1269
        %v2388 = vunpack.c.l.b16 %v1270
        %v2389 = vunpack.c.h.b16 %v1270
        %v2390 = vunpack.c.l.b16 %v1271
        %v2391 = vunpack.c.h.b16 %v1271
        %v2392 = vunpack.c.l.b16 %v1272
        %v2393 = vunpack.c.h.b16 %v1272
        %v2394 = vunpack.c.l.b16 %v1273
        %v2395 = vunpack.c.h.b16 %v1273
        %v2396 = vunpack.c.l.b16 %v1274
        %v2397 = vunpack.c.h.b16 %v1274
        %v2398 = vunpack.c.l.b16 %v1275
        %v2399 = vunpack.c.h.b16 %v1275
        %v2400 = vunpack.c.l.b16 %v1276
        %v2401 = vunpack.c.h.b16 %v1276
        %v2402 = vunpack.c.l.b16 %v1277
        %v2403 = vunpack.c.h.b16 %v1277
        %v2404 = vunpack.c.l.b16 %v1278
        %v2405 = vunpack.c.h.b16 %v1278
        %v2406 = vunpack.c.l.b16 %v1279
        %v2407 = vunpack.c.h.b16 %v1279
        %v2408 = vunpack.c.l.b16 %v1280
        %v2409 = vunpack.c.h.b16 %v1280
        %v2410 = vunpack.c.l.b16 %v1281
        %v2411 = vunpack.c.h.b16 %v1281
        %v2412 = vunpack.c.l.b16 %v1282
        %v2413 = vunpack.c.h.b16 %v1282
        %v2414 = vunpack.c.l.b16 %v1283
        %v2415 = vunpack.c.h.b16 %v1283
        %v2416 = vunpack.c.l.b16 %v1284
        %v2417 = vunpack.c.h.b16 %v1284
        %v2418 = vunpack.c.l.b16 %v1285
        %v2419 = vunpack.c.h.b16 %v1285
        %v2420 = vunpack.c.l.b16 %v1286
        %v2421 = vunpack.c.h.b16 %v1286
        %v2422 = vunpack.c.l.b16 %v1287
        %v2423 = vunpack.c.h.b16 %v1287
        %v2424 = vunpack.c.l.b16 %v1288
        %v2425 = vunpack.c.h.b16 %v1288
        %v2426 = vunpack.c.l.b16 %v1289
        %v2427 = vunpack.c.h.b16 %v1289
        %v2428 = vunpack.c.l.b16 %v1290
        %v2429 = vunpack.c.h.b16 %v1290
        %v2430 = vunpack.c.l.b16 %v1291
        %v2431 = vunpack.c.h.b16 %v1291
        %v2432 = vunpack.c.l.b16 %v1292
        %v2433 = vunpack.c.h.b16 %v1292
        %v2434 = vunpack.c.l.b16 %v1293
        %v2435 = vunpack.c.h.b16 %v1293
        %v2436 = vunpack.c.l.b16 %v1294
        %v2437 = vunpack.c.h.b16 %v1294
        %v2438 = vunpack.c.l.b16 %v1295
        %v2439 = vunpack.c.h.b16 %v1295
        %v2440 = vunpack.c.l.b16 %v1296
        %v2441 = vunpack.c.h.b16 %v1296
        %v2442 = vunpack.c.l.b16 %v1297
        %v2443 = vunpack.c.h.b16 %v1297
        %v2444 = vunpack.c.l.b16 %v1298
        %v2445 = vunpack.c.h.b16 %v1298
        %v2446 = vunpack.c.l.b16 %v1299
        %v2447 = vunpack.c.h.b16 %v1299
        %v2448 = vunpack.c.l.b16 %v1300
        %v2449 = vunpack.c.h.b16 %v1300
        %v2450 = vunpack.c.l.b16 %v1301
        %v2451 = vunpack.c.h.b16 %v1301
        %v2452 = vunpack.c.l.b16 %v1302
        %v2453 = vunpack.c.h.b16 %v1302
        %v2454 = vunpack.c.l.b16 %v1303
        %v2455 = vunpack.c.h.b16 %v1303
        %v2456 = vpack.c.b16 %v1952, %v1944
        %v2457 = vpack.c.b16 %v1953, %v1945
        %v2458 = vpack.c.b16 %v1954, %v1946
        %v2459 = vpack.c.b16 %v1955, %v1947
        %v2460 = vpack.c.b16 %v1956, %v1948
        %v2461 = vpack.c.b16 %v1957, %v1949
        %v2462 = vpack.c.b16 %v1958, %v1950
        %v2463 = vpack.c.b16 %v1959, %v1951
        %v2464 = vpack.c.b16 %v1968, %v1960
        %v2465 = vpack.c.b16 %v1969, %v1961
        %v2466 = vpack.c.b16 %v1970, %v1962
        %v2467 = vpack.c.b16 %v1971, %v1963
        %v2468 = vpack.c.b16 %v1972, %v1964
        %v2469 = vpack.c.b16 %v1973, %v1965
        %v2470 = vpack.c.b16 %v1974, %v1966
        %v2471 = vpack.c.b16 %v1975, %v1967
        %v2472 = vpack.c.b16 %v1984, %v1976
        %v2473 = vpack.c.b16 %v1985, %v1977
        %v2474 = vpack.c.b16 %v1986, %v1978
        %v2475 = vpack.c.b16 %v1987, %v1979
        %v2476 = vpack.c.b16 %v1988, %v1980
        %v2477 = vpack.c.b16 %v1989, %v1981
        %v2478 = vpack.c.b16 %v1990, %v1982
        %v2479 = vpack.c.b16 %v1991, %v1983
        %v2480 = vpack.c.b16 %v2000, %v1992
        %v2481 = vpack.c.b16 %v2001, %v1993
        %v2482 = vpack.c.b16 %v2002, %v1994
        %v2483 = vpack.c.b16 %v2003, %v1995
        %v2484 = vpack.c.b16 %v2004, %v1996
        %v2485 = vpack.c.b16 %v2005, %v1997
        %v2486 = vpack.c.b16 %v2006, %v1998
        %v2487 = vpack.c.b16 %v2007, %v1999
        %v2488 = vpack.c.b16 %v2016, %v2008
        %v2489 = vpack.c.b16 %v2017, %v2009
        %v2490 = vpack.c.b16 %v2018, %v2010
        %v2491 = vpack.c.b16 %v2019, %v2011
        %v2492 = vpack.c.b16 %v2020, %v2012
        %v2493 = vpack.c.b16 %v2021, %v2013
        %v2494 = vpack.c.b16 %v2022, %v2014
        %v2495 = vpack.c.b16 %v2023, %v2015
        %v2496 = vpack.c.b16 %v2032, %v2024
        %v2497 = vpack.c.b16 %v2033, %v2025
        %v2498 = vpack.c.b16 %v2034, %v2026
        %v2499 = vpack.c.b16 %v2035, %v2027
        %v2500 = vpack.c.b16 %v2036, %v2028
        %v2501 = vpack.c.b16 %v2037, %v2029
        %v2502 = vpack.c.b16 %v2038, %v2030
        %v2503 = vpack.c.b16 %v2039, %v2031
        %v2504 = vpack.c.b16 %v2048, %v2040
        %v2505 = vpack.c.b16 %v2049, %v2041
        %v2506 = vpack.c.b16 %v2050, %v2042
        %v2507 = vpack.c.b16 %v2051, %v2043
        %v2508 = vpack.c.b16 %v2052, %v2044
        %v2509 = vpack.c.b16 %v2053, %v2045
        %v2510 = vpack.c.b16 %v2054, %v2046
        %v2511 = vpack.c.b16 %v2055, %v2047
        %v2512 = vpack.c.b16 %v2064, %v2056
        %v2513 = vpack.c.b16 %v2065, %v2057
        %v2514 = vpack.c.b16 %v2066, %v2058
        %v2515 = vpack.c.b16 %v2067, %v2059
        %v2516 = vpack.c.b16 %v2068, %v2060
        %v2517 = vpack.c.b16 %v2069, %v2061
        %v2518 = vpack.c.b16 %v2070, %v2062
        %v2519 = vpack.c.b16 %v2071, %v2063
        %v2520 = vpack.c.b16 %v2080, %v2072
        %v2521 = vpack.c.b16 %v2081, %v2073
        %v2522 = vpack.c.b16 %v2082, %v2074
        %v2523 = vpack.c.b16 %v2083, %v2075
        %v2524 = vpack.c.b16 %v2084, %v2076
        %v2525 = vpack.c.b16 %v2085, %v2077
        %v2526 = vpack.c.b16 %v2086, %v2078
        %v2527 = vpack.c.b16 %v2087, %v2079
        %v2528 = vpack.c.b16 %v2096, %v2088
        %v2529 = vpack.c.b16 %v2097, %v2089
        %v2530 = vpack.c.b16 %v2098, %v2090
        %v2531 = vpack.c.b16 %v2099, %v2091
        %v2532 = vpack.c.b16 %v2100, %v2092
        %v2533 = vpack.c.b16 %v2101, %v2093
        %v2534 = vpack.c.b16 %v2102, %v2094
        %v2535 = vpack.c.b16 %v2103, %v2095
        %v2536 = vpack.c.b16 %v2112, %v2104
        %v2537 = vpack.c.b16 %v2113, %v2105
        %v2538 = vpack.c.b16 %v2114, %v2106
        %v2539 = vpack.c.b16 %v2115, %v2107
        %v2540 = vpack.c.b16 %v2116, %v2108
        %v2541 = vpack.c.b16 %v2117, %v2109
        %v2542 = vpack.c.b16 %v2118, %v2110
        %v2543 = vpack.c.b16 %v2119, %v2111
        %v2544 = vpack.c.b16 %v2128, %v2120
        %v2545 = vpack.c.b16 %v2129, %v2121
        %v2546 = vpack.c.b16 %v2130, %v2122
        %v2547 = vpack.c.b16 %v2131, %v2123
        %v2548 = vpack.c.b16 %v2132, %v2124
        %v2549 = vpack.c.b16 %v2133, %v2125
        %v2550 = vpack.c.b16 %v2134, %v2126
        %v2551 = vpack.c.b16 %v2135, %v2127
        %v2552 = vpack.c.b16 %v2144, %v2136
        %v2553 = vpack.c.b16 %v2145, %v2137
        %v2554 = vpack.c.b16 %v2146, %v2138
        %v2555 = vpack.c.b16 %v2147, %v2139
        %v2556 = vpack.c.b16 %v2148, %v2140
        %v2557 = vpack.c.b16 %v2149, %v2141
        %v2558 = vpack.c.b16 %v2150, %v2142
        %v2559 = vpack.c.b16 %v2151, %v2143
        %v2560 = vpack.c.b16 %v2160, %v2152
        %v2561 = vpack.c.b16 %v2161, %v2153
        %v2562 = vpack.c.b16 %v2162, %v2154
        %v2563 = vpack.c.b16 %v2163, %v2155
        %v2564 = vpack.c.b16 %v2164, %v2156
        %v2565 = vpack.c.b16 %v2165, %v2157
        %v2566 = vpack.c.b16 %v2166, %v2158
        %v2567 = vpack.c.b16 %v2167, %v2159
        %v2568 = vpack.c.b16 %v2176, %v2168
        %v2569 = vpack.c.b16 %v2177, %v2169
        %v2570 = vpack.c.b16 %v2178, %v2170
        %v2571 = vpack.c.b16 %v2179, %v2171
        %v2572 = vpack.c.b16 %v2180, %v2172
        %v2573 = vpack.c.b16 %v2181, %v2173
        %v2574 = vpack.c.b16 %v2182, %v2174
        %v2575 = vpack.c.b16 %v2183, %v2175
        %v2576 = vpack.c.b16 %v2192, %v2184
        %v2577 = vpack.c.b16 %v2193, %v2185
        %v2578 = vpack.c.b16 %v2194, %v2186
        %v2579 = vpack.c.b16 %v2195, %v2187
        %v2580 = vpack.c.b16 %v2196, %v2188
        %v2581 = vpack.c.b16 %v2197, %v2189
        %v2582 = vpack.c.b16 %v2198, %v2190
        %v2583 = vpack.c.b16 %v2199, %v2191
        %v2584 = vpack.c.b16 %v2208, %v2200
        %v2585 = vpack.c.b16 %v2209, %v2201
        %v2586 = vpack.c.b16 %v2210, %v2202
        %v2587 = vpack.c.b16 %v2211, %v2203
        %v2588 = vpack.c.b16 %v2212, %v2204
        %v2589 = vpack.c.b16 %v2213, %v2205
        %v2590 = vpack.c.b16 %v2214, %v2206
        %v2591 = vpack.c.b16 %v2215, %v2207
        %v2592 = vpack.c.b16 %v2224, %v2216
        %v2593 = vpack.c.b16 %v2225, %v2217
        %v2594 = vpack.c.b16 %v2226, %v2218
        %v2595 = vpack.c.b16 %v2227, %v2219
        %v2596 = vpack.c.b16 %v2228, %v2220
        %v2597 = vpack.c.b16 %v2229, %v2221
        %v2598 = vpack.c.b16 %v2230, %v2222
        %v2599 = vpack.c.b16 %v2231, %v2223
        %v2600 = vpack.c.b16 %v2240, %v2232
        %v2601 = vpack.c.b16 %v2241, %v2233
        %v2602 = vpack.c.b16 %v2242, %v2234
        %v2603 = vpack.c.b16 %v2243, %v2235
        %v2604 = vpack.c.b16 %v2244, %v2236
        %v2605 = vpack.c.b16 %v2245, %v2237
        %v2606 = vpack.c.b16 %v2246, %v2238
        %v2607 = vpack.c.b16 %v2247, %v2239
        %v2608 = vpack.c.b16 %v2256, %v2248
        %v2609 = vpack.c.b16 %v2257, %v2249
        %v2610 = vpack.c.b16 %v2258, %v2250
        %v2611 = vpack.c.b16 %v2259, %v2251
        %v2612 = vpack.c.b16 %v2260, %v2252
        %v2613 = vpack.c.b16 %v2261, %v2253
        %v2614 = vpack.c.b16 %v2262, %v2254
        %v2615 = vpack.c.b16 %v2263, %v2255
        %v2616 = vpack.c.b16 %v2272, %v2264
        %v2617 = vpack.c.b16 %v2273, %v2265
        %v2618 = vpack.c.b16 %v2274, %v2266
        %v2619 = vpack.c.b16 %v2275, %v2267
        %v2620 = vpack.c.b16 %v2276, %v2268
        %v2621 = vpack.c.b16 %v2277, %v2269
        %v2622 = vpack.c.b16 %v2278, %v2270
        %v2623 = vpack.c.b16 %v2279, %v2271
        %v2624 = vpack.c.b16 %v2288, %v2280
        %v2625 = vpack.c.b16 %v2289, %v2281
        %v2626 = vpack.c.b16 %v2290, %v2282
        %v2627 = vpack.c.b16 %v2291, %v2283
        %v2628 = vpack.c.b16 %v2292, %v2284
        %v2629 = vpack.c.b16 %v2293, %v2285
        %v2630 = vpack.c.b16 %v2294, %v2286
        %v2631 = vpack.c.b16 %v2295, %v2287
        %v2632 = vpack.c.b16 %v2304, %v2296
        %v2633 = vpack.c.b16 %v2305, %v2297
        %v2634 = vpack.c.b16 %v2306, %v2298
        %v2635 = vpack.c.b16 %v2307, %v2299
        %v2636 = vpack.c.b16 %v2308, %v2300
        %v2637 = vpack.c.b16 %v2309, %v2301
        %v2638 = vpack.c.b16 %v2310, %v2302
        %v2639 = vpack.c.b16 %v2311, %v2303
        %v2640 = vpack.c.b16 %v2320, %v2312
        %v2641 = vpack.c.b16 %v2321, %v2313
        %v2642 = vpack.c.b16 %v2322, %v2314
        %v2643 = vpack.c.b16 %v2323, %v2315
        %v2644 = vpack.c.b16 %v2324, %v2316
        %v2645 = vpack.c.b16 %v2325, %v2317
        %v2646 = vpack.c.b16 %v2326, %v2318
        %v2647 = vpack.c.b16 %v2327, %v2319
        %v2648 = vpack.c.b16 %v2336, %v2328
        %v2649 = vpack.c.b16 %v2337, %v2329
        %v2650 = vpack.c.b16 %v2338, %v2330
        %v2651 = vpack.c.b16 %v2339, %v2331
        %v2652 = vpack.c.b16 %v2340, %v2332
        %v2653 = vpack.c.b16 %v2341, %v2333
        %v2654 = vpack.c.b16 %v2342, %v2334
        %v2655 = vpack.c.b16 %v2343, %v2335
        %v2656 = vpack.c.b16 %v2352, %v2344
        %v2657 = vpack.c.b16 %v2353, %v2345
        %v2658 = vpack.c.b16 %v2354, %v2346
        %v2659 = vpack.c.b16 %v2355, %v2347
        %v2660 = vpack.c.b16 %v2356, %v2348
        %v2661 = vpack.c.b16 %v2357, %v2349
        %v2662 = vpack.c.b16 %v2358, %v2350
        %v2663 = vpack.c.b16 %v2359, %v2351
        %v2664 = vpack.c.b16 %v2368, %v2360
        %v2665 = vpack.c.b16 %v2369, %v2361
        %v2666 = vpack.c.b16 %v2370, %v2362
        %v2667 = vpack.c.b16 %v2371, %v2363
        %v2668 = vpack.c.b16 %v2372, %v2364
        %v2669 = vpack.c.b16 %v2373, %v2365
        %v2670 = vpack.c.b16 %v2374, %v2366
        %v2671 = vpack.c.b16 %v2375, %v2367
        %v2672 = vpack.c.b16 %v2384, %v2376
        %v2673 = vpack.c.b16 %v2385, %v2377
        %v2674 = vpack.c.b16 %v2386, %v2378
        %v2675 = vpack.c.b16 %v2387, %v2379
        %v2676 = vpack.c.b16 %v2388, %v2380
        %v2677 = vpack.c.b16 %v2389, %v2381
        %v2678 = vpack.c.b16 %v2390, %v2382
        %v2679 = vpack.c.b16 %v2391, %v2383
        %v2680 = vpack.c.b16 %v2400, %v2392
        %v2681 = vpack.c.b16 %v2401, %v2393
        %v2682 = vpack.c.b16 %v2402, %v2394
        %v2683 = vpack.c.b16 %v2403, %v2395
        %v2684 = vpack.c.b16 %v2404, %v2396
        %v2685 = vpack.c.b16 %v2405, %v2397
        %v2686 = vpack.c.b16 %v2406, %v2398
        %v2687 = vpack.c.b16 %v2407, %v2399
        %v2688 = vpack.c.b16 %v2416, %v2408
        %v2689 = vpack.c.b16 %v2417, %v2409
        %v2690 = vpack.c.b16 %v2418, %v2410
        %v2691 = vpack.c.b16 %v2419, %v2411
        %v2692 = vpack.c.b16 %v2420, %v2412
        %v2693 = vpack.c.b16 %v2421, %v2413
        %v2694 = vpack.c.b16 %v2422, %v2414
        %v2695 = vpack.c.b16 %v2423, %v2415
        %v2696 = vpack.c.b16 %v2432, %v2424
        %v2697 = vpack.c.b16 %v2433, %v2425
        %v2698 = vpack.c.b16 %v2434, %v2426
        %v2699 = vpack.c.b16 %v2435, %v2427
        %v2700 = vpack.c.b16 %v2436, %v2428
        %v2701 = vpack.c.b16 %v2437, %v2429
        %v2702 = vpack.c.b16 %v2438, %v2430
        %v2703 = vpack.c.b16 %v2439, %v2431
        %v2704 = vpack.c.b16 %v2448, %v2440
        %v2705 = vpack.c.b16 %v2449, %v2441
        %v2706 = vpack.c.b16 %v2450, %v2442
        %v2707 = vpack.c.b16 %v2451, %v2443
        %v2708 = vpack.c.b16 %v2452, %v2444
        %v2709 = vpack.c.b16 %v2453, %v2445
        %v2710 = vpack.c.b16 %v2454, %v2446
        %v2711 = vpack.c.b16 %v2455, %v2447
        %vm2936 = vcmask 523264
        %v2938 = vsel %vm2936, %v2463, 0
        %v2941 = vsel %vm2936, %v2471, 0
        %v2944 = vsel %vm2936, %v2479, 0
        %v2947 = vsel %vm2936, %v2487, 0
        %v2950 = vsel %vm2936, %v2495, 0
        %v2953 = vsel %vm2936, %v2503, 0
        %v2956 = vsel %vm2936, %v2511, 0
        %v2959 = vsel %vm2936, %v2519, 0
        %v2962 = vsel %vm2936, %v2527, 0
        %v2965 = vsel %vm2936, %v2535, 0
        %v2968 = vsel %vm2936, %v2543, 0
        %v2971 = vsel %vm2936, %v2551, 0
        %v2974 = vsel %vm2936, %v2559, 0
        %v2977 = vsel %vm2936, %v2567, 0
        %v2980 = vsel %vm2936, %v2575, 0
        %v2983 = vsel %vm2936, %v2583, 0
        %v2986 = vsel %vm2936, %v2591, 0
        %v2989 = vsel %vm2936, %v2599, 0
        %v2992 = vsel %vm2936, %v2607, 0
        %v2995 = vsel %vm2936, %v2615, 0
        %v2998 = vsel %vm2936, %v2623, 0
        %v3001 = vsel %vm2936, %v2631, 0
        %v3004 = vsel %vm2936, %v2639, 0
        %v3007 = vsel %vm2936, %v2647, 0
        %v3010 = vsel %vm2936, %v2655, 0
        %v3013 = vsel %vm2936, %v2663, 0
        %v3016 = vsel %vm2936, %v2671, 0
        %v3019 = vsel %vm2936, %v2679, 0
        %v3022 = vsel %vm2936, %v2687, 0
        %v3025 = vsel %vm2936, %v2695, 0
        %v3028 = vsel %vm2936, %v2703, 0
        %v3031 = vsel %vm2936, %v2711, 0
        %3033 = vmatprep.subr.bf16.mxu0 0
        %3034 = vmatpush1.bf16.msra.mxu0 %v988
        %3035 = vmatprep.subr.bf16.mxu0 0
        %3036 = vmatpush1.bf16.msra.mxu0 %v989
        %3037 = vmatprep.subr.bf16.mxu0 0
        %3038 = vmatpush1.bf16.msra.mxu0 %v990
        %3039 = vmatprep.subr.bf16.mxu0 0
        %3040 = vmatpush1.bf16.msra.mxu0 %v991
        %3041 = vmatprep.subr.bf16.mxu0 0
        %3042 = vmatpush1.bf16.msra.mxu0 %v992
        %3043 = vmatprep.subr.bf16.mxu0 0
        %3044 = vmatpush1.bf16.msra.mxu0 %v993
        %3045 = vmatprep.subr.bf16.mxu0 0
        %3046 = vmatpush1.bf16.msra.mxu0 %v994
        %3047 = vmatprep.subr.bf16.mxu0 0
        %3048 = vmatpush1.bf16.msra.mxu0 %v995
        %3049 = vmatprep.subr.bf16.mxu0 0
        %3050 = vmatpush1.bf16.msra.mxu0 %v996
        %3051 = vmatprep.subr.bf16.mxu0 0
        %3052 = vmatpush1.bf16.msra.mxu0 %v997
        %3053 = vmatprep.subr.bf16.mxu0 0
        %3054 = vmatpush1.bf16.msra.mxu0 %v998
        %3055 = vmatprep.subr.bf16.mxu0 0
        %3056 = vmatpush1.bf16.msra.mxu0 %v999
        %3057 = vmatprep.subr.bf16.mxu0 0
        %3058 = vmatpush1.bf16.msra.mxu0 %v1000
        %3059 = vmatprep.subr.bf16.mxu0 0
        %3060 = vmatpush1.bf16.msra.mxu0 %v1001
        %3061 = vmatprep.subr.bf16.mxu0 0
        %3062 = vmatpush1.bf16.msra.mxu0 %v1002
        %3063 = vmatprep.subr.bf16.mxu0 0
        %3064 = vmatpush1.bf16.msra.mxu0 %v1003
        %3065 = vmatprep.mubr.bf16.mxu0 %v2457
        %3066 = vmatmul.mubr.bf16.gmra.mrb[0].mxu0 %v2456
        %v3067 = vpop.f32.mrb[0].mxu0
        %v3068 = vadd.f32 %v1371, %v3067
        %v3069 = vpop.f32.mrb[0].mxu0
        %v3070 = vpop.f32.mrb[0].mxu0
        %v3071 = vadd.f32 %v1376, %v3070
        %v3072 = vpop.f32.mrb[0].mxu0
        %3073 = vmatprep.mubr.bf16.mxu0 %v2465
        %3074 = vmatmul.mubr.bf16.gmra.mrb[0].mxu0 %v2464
        %v3075 = vpop.f32.mrb[0].mxu0
        %v3076 = vadd.f32 %v1381, %v3075
        %v3077 = vpop.f32.mrb[0].mxu0
        %v3078 = vpop.f32.mrb[0].mxu0
        %v3079 = vadd.f32 %v1386, %v3078
        %v3080 = vpop.f32.mrb[0].mxu0
        %3081 = vmatprep.mubr.bf16.mxu0 %v2473
        %3082 = vmatmul.mubr.bf16.gmra.mrb[0].mxu0 %v2472
        %v3083 = vpop.f32.mrb[0].mxu0
        %v3084 = vadd.f32 %v1391, %v3083
        %v3085 = vpop.f32.mrb[0].mxu0
        %v3086 = vpop.f32.mrb[0].mxu0
        %v3087 = vadd.f32 %v1396, %v3086
        %v3088 = vpop.f32.mrb[0].mxu0
        %3089 = vmatprep.mubr.bf16.mxu0 %v2481
        %3090 = vmatmul.mubr.bf16.gmra.mrb[0].mxu0 %v2480
        %v3091 = vpop.f32.mrb[0].mxu0
        %v3092 = vadd.f32 %v1401, %v3091
        %v3093 = vpop.f32.mrb[0].mxu0
        %v3094 = vpop.f32.mrb[0].mxu0
        %v3095 = vadd.f32 %v1406, %v3094
        %v3096 = vpop.f32.mrb[0].mxu0
        %3097 = vmatprep.mubr.bf16.mxu0 %v2489
        %3098 = vmatmul.mubr.bf16.gmra.mrb[0].mxu0 %v2488
        %v3099 = vpop.f32.mrb[0].mxu0
        %v3100 = vadd.f32 %v1411, %v3099
        %v3101 = vpop.f32.mrb[0].mxu0
        %v3102 = vpop.f32.mrb[0].mxu0
        %v3103 = vadd.f32 %v1416, %v3102
        %v3104 = vpop.f32.mrb[0].mxu0
        %3105 = vmatprep.mubr.bf16.mxu0 %v2497
        %3106 = vmatmul.mubr.bf16.gmra.mrb[0].mxu0 %v2496
        %v3107 = vpop.f32.mrb[0].mxu0
        %v3108 = vadd.f32 %v1421, %v3107
        %v3109 = vpop.f32.mrb[0].mxu0
        %v3110 = vpop.f32.mrb[0].mxu0
        %v3111 = vadd.f32 %v1426, %v3110
        %v3112 = vpop.f32.mrb[0].mxu0
        %3113 = vmatprep.mubr.bf16.mxu0 %v2505
        %3114 = vmatmul.mubr.bf16.gmra.mrb[0].mxu0 %v2504
        %v3115 = vpop.f32.mrb[0].mxu0
        %v3116 = vadd.f32 %v1431, %v3115
        %v3117 = vpop.f32.mrb[0].mxu0
        %v3118 = vpop.f32.mrb[0].mxu0
        %v3119 = vadd.f32 %v1436, %v3118
        %v3120 = vpop.f32.mrb[0].mxu0
        %3121 = vmatprep.mubr.bf16.mxu0 %v2513
        %3122 = vmatmul.mubr.bf16.gmra.mrb[0].mxu0 %v2512
        %v3123 = vpop.f32.mrb[0].mxu0
        %v3124 = vadd.f32 %v1441, %v3123
        %v3125 = vpop.f32.mrb[0].mxu0
        %v3126 = vpop.f32.mrb[0].mxu0
        %v3127 = vadd.f32 %v1446, %v3126
        %v3128 = vpop.f32.mrb[0].mxu0
        %3129 = vmatprep.mubr.bf16.mxu0 %v2521
        %3130 = vmatmul.mubr.bf16.gmra.mrb[0].mxu0 %v2520
        %v3131 = vpop.f32.mrb[0].mxu0
        %v3132 = vadd.f32 %v1451, %v3131
        %v3133 = vpop.f32.mrb[0].mxu0
        %v3134 = vpop.f32.mrb[0].mxu0
        %v3135 = vadd.f32 %v1456, %v3134
        %v3136 = vpop.f32.mrb[0].mxu0
        %3137 = vmatprep.mubr.bf16.mxu0 %v2529
        %3138 = vmatmul.mubr.bf16.gmra.mrb[0].mxu0 %v2528
        %v3139 = vpop.f32.mrb[0].mxu0
        %v3140 = vadd.f32 %v1461, %v3139
        %v3141 = vpop.f32.mrb[0].mxu0
        %v3142 = vpop.f32.mrb[0].mxu0
        %v3143 = vadd.f32 %v1466, %v3142
        %v3144 = vpop.f32.mrb[0].mxu0
        %3145 = vmatprep.mubr.bf16.mxu0 %v2537
        %3146 = vmatmul.mubr.bf16.gmra.mrb[0].mxu0 %v2536
        %v3147 = vpop.f32.mrb[0].mxu0
        %v3148 = vadd.f32 %v1471, %v3147
        %v3149 = vpop.f32.mrb[0].mxu0
        %v3150 = vpop.f32.mrb[0].mxu0
        %v3151 = vadd.f32 %v1476, %v3150
        %v3152 = vpop.f32.mrb[0].mxu0
        %3153 = vmatprep.mubr.bf16.mxu0 %v2545
        %3154 = vmatmul.mubr.bf16.gmra.mrb[0].mxu0 %v2544
        %v3155 = vpop.f32.mrb[0].mxu0
        %v3156 = vadd.f32 %v1481, %v3155
        %v3157 = vpop.f32.mrb[0].mxu0
        %v3158 = vpop.f32.mrb[0].mxu0
        %v3159 = vadd.f32 %v1486, %v3158
        %v3160 = vpop.f32.mrb[0].mxu0
        %3161 = vmatprep.mubr.bf16.mxu0 %v2553
        %3162 = vmatmul.mubr.bf16.gmra.mrb[0].mxu0 %v2552
        %v3163 = vpop.f32.mrb[0].mxu0
        %v3164 = vadd.f32 %v1491, %v3163
        %v3165 = vpop.f32.mrb[0].mxu0
        %v3166 = vpop.f32.mrb[0].mxu0
        %v3167 = vadd.f32 %v1496, %v3166
        %v3168 = vpop.f32.mrb[0].mxu0
        %3169 = vmatprep.mubr.bf16.mxu0 %v2561
        %3170 = vmatmul.mubr.bf16.gmra.mrb[0].mxu0 %v2560
        %v3171 = vpop.f32.mrb[0].mxu0
        %v3172 = vadd.f32 %v1501, %v3171
        %v3173 = vpop.f32.mrb[0].mxu0
        %v3174 = vpop.f32.mrb[0].mxu0
        %v3175 = vadd.f32 %v1506, %v3174
        %v3176 = vpop.f32.mrb[0].mxu0
        %3177 = vmatprep.mubr.bf16.mxu0 %v2569
        %3178 = vmatmul.mubr.bf16.gmra.mrb[0].mxu0 %v2568
        %v3179 = vpop.f32.mrb[0].mxu0
        %v3180 = vadd.f32 %v1511, %v3179
        %v3181 = vpop.f32.mrb[0].mxu0
        %v3182 = vpop.f32.mrb[0].mxu0
        %v3183 = vadd.f32 %v1516, %v3182
        %v3184 = vpop.f32.mrb[0].mxu0
        %3185 = vmatprep.mubr.bf16.mxu0 %v2577
        %3186 = vmatmul.mubr.bf16.gmra.mrb[0].mxu0 %v2576
        %v3187 = vpop.f32.mrb[0].mxu0
        %v3188 = vadd.f32 %v1521, %v3187
        %v3189 = vpop.f32.mrb[0].mxu0
        %v3190 = vpop.f32.mrb[0].mxu0
        %v3191 = vadd.f32 %v1526, %v3190
        %v3192 = vpop.f32.mrb[0].mxu0
        %3193 = vmatprep.mubr.bf16.mxu0 %v2585
        %3194 = vmatmul.mubr.bf16.gmra.mrb[0].mxu0 %v2584
        %v3195 = vpop.f32.mrb[0].mxu0
        %v3196 = vadd.f32 %v1531, %v3195
        %v3197 = vpop.f32.mrb[0].mxu0
        %v3198 = vpop.f32.mrb[0].mxu0
        %v3199 = vadd.f32 %v1536, %v3198
        %v3200 = vpop.f32.mrb[0].mxu0
        %3201 = vmatprep.mubr.bf16.mxu0 %v2593
        %3202 = vmatmul.mubr.bf16.gmra.mrb[0].mxu0 %v2592
        %v3203 = vpop.f32.mrb[0].mxu0
        %v3204 = vadd.f32 %v1541, %v3203
        %v3205 = vpop.f32.mrb[0].mxu0
        %v3206 = vpop.f32.mrb[0].mxu0
        %v3207 = vadd.f32 %v1546, %v3206
        %v3208 = vpop.f32.mrb[0].mxu0
        %3209 = vmatprep.mubr.bf16.mxu0 %v2601
        %3210 = vmatmul.mubr.bf16.gmra.mrb[0].mxu0 %v2600
        %v3211 = vpop.f32.mrb[0].mxu0
        %v3212 = vadd.f32 %v1551, %v3211
        %v3213 = vpop.f32.mrb[0].mxu0
        %v3214 = vpop.f32.mrb[0].mxu0
        %v3215 = vadd.f32 %v1556, %v3214
        %v3216 = vpop.f32.mrb[0].mxu0
        %3217 = vmatprep.mubr.bf16.mxu0 %v2609
        %3218 = vmatmul.mubr.bf16.gmra.mrb[0].mxu0 %v2608
        %v3219 = vpop.f32.mrb[0].mxu0
        %v3220 = vadd.f32 %v1561, %v3219
        %v3221 = vpop.f32.mrb[0].mxu0
        %v3222 = vpop.f32.mrb[0].mxu0
        %v3223 = vadd.f32 %v1566, %v3222
        %v3224 = vpop.f32.mrb[0].mxu0
        %3225 = vmatprep.mubr.bf16.mxu0 %v2617
        %3226 = vmatmul.mubr.bf16.gmra.mrb[0].mxu0 %v2616
        %v3227 = vpop.f32.mrb[0].mxu0
        %v3228 = vadd.f32 %v1571, %v3227
        %v3229 = vpop.f32.mrb[0].mxu0
        %v3230 = vpop.f32.mrb[0].mxu0
        %v3231 = vadd.f32 %v1576, %v3230
        %v3232 = vpop.f32.mrb[0].mxu0
        %3233 = vmatprep.mubr.bf16.mxu0 %v2625
        %3234 = vmatmul.mubr.bf16.gmra.mrb[0].mxu0 %v2624
        %v3235 = vpop.f32.mrb[0].mxu0
        %v3236 = vadd.f32 %v1581, %v3235
        %v3237 = vpop.f32.mrb[0].mxu0
        %v3238 = vpop.f32.mrb[0].mxu0
        %v3239 = vadd.f32 %v1586, %v3238
        %v3240 = vpop.f32.mrb[0].mxu0
        %3241 = vmatprep.mubr.bf16.mxu0 %v2633
        %3242 = vmatmul.mubr.bf16.gmra.mrb[0].mxu0 %v2632
        %v3243 = vpop.f32.mrb[0].mxu0
        %v3244 = vadd.f32 %v1591, %v3243
        %v3245 = vpop.f32.mrb[0].mxu0
        %v3246 = vpop.f32.mrb[0].mxu0
        %v3247 = vadd.f32 %v1596, %v3246
        %v3248 = vpop.f32.mrb[0].mxu0
        %3249 = vmatprep.mubr.bf16.mxu0 %v2641
        %3250 = vmatmul.mubr.bf16.gmra.mrb[0].mxu0 %v2640
        %v3251 = vpop.f32.mrb[0].mxu0
        %v3252 = vadd.f32 %v1601, %v3251
        %v3253 = vpop.f32.mrb[0].mxu0
        %v3254 = vpop.f32.mrb[0].mxu0
        %v3255 = vadd.f32 %v1606, %v3254
        %v3256 = vpop.f32.mrb[0].mxu0
        %3257 = vmatprep.mubr.bf16.mxu0 %v2649
        %3258 = vmatmul.mubr.bf16.gmra.mrb[0].mxu0 %v2648
        %v3259 = vpop.f32.mrb[0].mxu0
        %v3260 = vadd.f32 %v1611, %v3259
        %v3261 = vpop.f32.mrb[0].mxu0
        %v3262 = vpop.f32.mrb[0].mxu0
        %v3263 = vadd.f32 %v1616, %v3262
        %v3264 = vpop.f32.mrb[0].mxu0
        %3265 = vmatprep.mubr.bf16.mxu0 %v2657
        %3266 = vmatmul.mubr.bf16.gmra.mrb[0].mxu0 %v2656
        %v3267 = vpop.f32.mrb[0].mxu0
        %v3268 = vadd.f32 %v1621, %v3267
        %v3269 = vpop.f32.mrb[0].mxu0
        %v3270 = vpop.f32.mrb[0].mxu0
        %v3271 = vadd.f32 %v1626, %v3270
        %v3272 = vpop.f32.mrb[0].mxu0
        %3273 = vmatprep.mubr.bf16.mxu0 %v2665
        %3274 = vmatmul.mubr.bf16.gmra.mrb[0].mxu0 %v2664
        %v3275 = vpop.f32.mrb[0].mxu0
        %v3276 = vadd.f32 %v1631, %v3275
        %v3277 = vpop.f32.mrb[0].mxu0
        %v3278 = vpop.f32.mrb[0].mxu0
        %v3279 = vadd.f32 %v1636, %v3278
        %v3280 = vpop.f32.mrb[0].mxu0
        %3281 = vmatprep.mubr.bf16.mxu0 %v2673
        %3282 = vmatmul.mubr.bf16.gmra.mrb[0].mxu0 %v2672
        %v3283 = vpop.f32.mrb[0].mxu0
        %v3284 = vadd.f32 %v1641, %v3283
        %v3285 = vpop.f32.mrb[0].mxu0
        %v3286 = vpop.f32.mrb[0].mxu0
        %v3287 = vadd.f32 %v1646, %v3286
        %v3288 = vpop.f32.mrb[0].mxu0
        %3289 = vmatprep.mubr.bf16.mxu0 %v2681
        %3290 = vmatmul.mubr.bf16.gmra.mrb[0].mxu0 %v2680
        %v3291 = vpop.f32.mrb[0].mxu0
        %v3292 = vadd.f32 %v1651, %v3291
        %v3293 = vpop.f32.mrb[0].mxu0
        %v3294 = vpop.f32.mrb[0].mxu0
        %v3295 = vadd.f32 %v1656, %v3294
        %v3296 = vpop.f32.mrb[0].mxu0
        %3297 = vmatprep.mubr.bf16.mxu0 %v2689
        %3298 = vmatmul.mubr.bf16.gmra.mrb[0].mxu0 %v2688
        %v3299 = vpop.f32.mrb[0].mxu0
        %v3300 = vadd.f32 %v1661, %v3299
        %v3301 = vpop.f32.mrb[0].mxu0
        %v3302 = vpop.f32.mrb[0].mxu0
        %v3303 = vadd.f32 %v1666, %v3302
        %v3304 = vpop.f32.mrb[0].mxu0
        %3305 = vmatprep.mubr.bf16.mxu0 %v2697
        %3306 = vmatmul.mubr.bf16.gmra.mrb[0].mxu0 %v2696
        %v3307 = vpop.f32.mrb[0].mxu0
        %v3308 = vadd.f32 %v1671, %v3307
        %v3309 = vpop.f32.mrb[0].mxu0
        %v3310 = vpop.f32.mrb[0].mxu0
        %v3311 = vadd.f32 %v1676, %v3310
        %v3312 = vpop.f32.mrb[0].mxu0
        %3313 = vmatprep.mubr.bf16.mxu0 %v2705
        %3314 = vmatmul.mubr.bf16.gmra.mrb[0].mxu0 %v2704
        %v3315 = vpop.f32.mrb[0].mxu0
        %v3316 = vadd.f32 %v1681, %v3315
        %v3317 = vpop.f32.mrb[0].mxu0
        %v3318 = vpop.f32.mrb[0].mxu0
        %v3319 = vadd.f32 %v1686, %v3318
        %v3320 = vpop.f32.mrb[0].mxu0
        %3321 = vdwg.mxu0
        %3322 = vmatprep.subr.bf16.mxu0 0
        %3323 = vmatpush1.bf16.msra.mxu0 %v1004
        %3324 = vmatprep.subr.bf16.mxu0 0
        %3325 = vmatpush1.bf16.msra.mxu0 %v1005
        %3326 = vmatprep.subr.bf16.mxu0 0
        %3327 = vmatpush1.bf16.msra.mxu0 %v1006
        %3328 = vmatprep.subr.bf16.mxu0 0
        %3329 = vmatpush1.bf16.msra.mxu0 %v1007
        %3330 = vmatprep.subr.bf16.mxu0 0
        %3331 = vmatpush1.bf16.msra.mxu0 %v1008
        %3332 = vmatprep.subr.bf16.mxu0 0
        %3333 = vmatpush1.bf16.msra.mxu0 %v1009
        %3334 = vmatprep.subr.bf16.mxu0 0
        %3335 = vmatpush1.bf16.msra.mxu0 %v1010
        %3336 = vmatprep.subr.bf16.mxu0 0
        %3337 = vmatpush1.bf16.msra.mxu0 %v1011
        %3338 = vmatprep.subr.bf16.mxu0 0
        %3339 = vmatpush1.bf16.msra.mxu0 %v1012
        %3340 = vmatprep.subr.bf16.mxu0 0
        %3341 = vmatpush1.bf16.msra.mxu0 %v1013
        %3342 = vmatprep.subr.bf16.mxu0 0
        %3343 = vmatpush1.bf16.msra.mxu0 %v1014
        %3344 = vmatprep.subr.bf16.mxu0 0
        %3345 = vmatpush1.bf16.msra.mxu0 %v1015
        %3346 = vmatprep.subr.bf16.mxu0 0
        %3347 = vmatpush1.bf16.msra.mxu0 %v1016
        %3348 = vmatprep.subr.bf16.mxu0 0
        %3349 = vmatpush1.bf16.msra.mxu0 %v1017
        %3350 = vmatprep.subr.bf16.mxu0 0
        %3351 = vmatpush1.bf16.msra.mxu0 %v1018
        %3352 = vmatprep.subr.bf16.mxu0 0
        %3353 = vmatpush1.bf16.msra.mxu0 %v1019
        %3354 = vmatprep.mubr.bf16.mxu0 %v2459
        %3355 = vmatmul.mubr.bf16.gmra.mrb[0].mxu0 %v2458
        %v3356 = vpop.f32.mrb[0].mxu0
        %v3357 = vadd.f32 %v3068, %v3356
        %v3358 = vpop.f32.mrb[0].mxu0
        %v3359 = vpop.f32.mrb[0].mxu0
        %v3360 = vadd.f32 %v3071, %v3359
        %v3361 = vpop.f32.mrb[0].mxu0
        %3362 = vmatprep.mubr.bf16.mxu0 %v2467
        %3363 = vmatmul.mubr.bf16.gmra.mrb[0].mxu0 %v2466
        %v3364 = vpop.f32.mrb[0].mxu0
        %v3365 = vadd.f32 %v3076, %v3364
        %v3366 = vpop.f32.mrb[0].mxu0
        %v3367 = vpop.f32.mrb[0].mxu0
        %v3368 = vadd.f32 %v3079, %v3367
        %v3369 = vpop.f32.mrb[0].mxu0
        %3370 = vmatprep.mubr.bf16.mxu0 %v2475
        %3371 = vmatmul.mubr.bf16.gmra.mrb[0].mxu0 %v2474
        %v3372 = vpop.f32.mrb[0].mxu0
        %v3373 = vadd.f32 %v3084, %v3372
        %v3374 = vpop.f32.mrb[0].mxu0
        %v3375 = vpop.f32.mrb[0].mxu0
        %v3376 = vadd.f32 %v3087, %v3375
        %v3377 = vpop.f32.mrb[0].mxu0
        %3378 = vmatprep.mubr.bf16.mxu0 %v2483
        %3379 = vmatmul.mubr.bf16.gmra.mrb[0].mxu0 %v2482
        %v3380 = vpop.f32.mrb[0].mxu0
        %v3381 = vadd.f32 %v3092, %v3380
        %v3382 = vpop.f32.mrb[0].mxu0
        %v3383 = vpop.f32.mrb[0].mxu0
        %v3384 = vadd.f32 %v3095, %v3383
        %v3385 = vpop.f32.mrb[0].mxu0
        %3386 = vmatprep.mubr.bf16.mxu0 %v2491
        %3387 = vmatmul.mubr.bf16.gmra.mrb[0].mxu0 %v2490
        %v3388 = vpop.f32.mrb[0].mxu0
        %v3389 = vadd.f32 %v3100, %v3388
        %v3390 = vpop.f32.mrb[0].mxu0
        %v3391 = vpop.f32.mrb[0].mxu0
        %v3392 = vadd.f32 %v3103, %v3391
        %v3393 = vpop.f32.mrb[0].mxu0
        %3394 = vmatprep.mubr.bf16.mxu0 %v2499
        %3395 = vmatmul.mubr.bf16.gmra.mrb[0].mxu0 %v2498
        %v3396 = vpop.f32.mrb[0].mxu0
        %v3397 = vadd.f32 %v3108, %v3396
        %v3398 = vpop.f32.mrb[0].mxu0
        %v3399 = vpop.f32.mrb[0].mxu0
        %v3400 = vadd.f32 %v3111, %v3399
        %v3401 = vpop.f32.mrb[0].mxu0
        %3402 = vmatprep.mubr.bf16.mxu0 %v2507
        %3403 = vmatmul.mubr.bf16.gmra.mrb[0].mxu0 %v2506
        %v3404 = vpop.f32.mrb[0].mxu0
        %v3405 = vadd.f32 %v3116, %v3404
        %v3406 = vpop.f32.mrb[0].mxu0
        %v3407 = vpop.f32.mrb[0].mxu0
        %v3408 = vadd.f32 %v3119, %v3407
        %v3409 = vpop.f32.mrb[0].mxu0
        %3410 = vmatprep.mubr.bf16.mxu0 %v2515
        %3411 = vmatmul.mubr.bf16.gmra.mrb[0].mxu0 %v2514
        %v3412 = vpop.f32.mrb[0].mxu0
        %v3413 = vadd.f32 %v3124, %v3412
        %v3414 = vpop.f32.mrb[0].mxu0
        %v3415 = vpop.f32.mrb[0].mxu0
        %v3416 = vadd.f32 %v3127, %v3415
        %v3417 = vpop.f32.mrb[0].mxu0
        %3418 = vmatprep.mubr.bf16.mxu0 %v2523
        %3419 = vmatmul.mubr.bf16.gmra.mrb[0].mxu0 %v2522
        %v3420 = vpop.f32.mrb[0].mxu0
        %v3421 = vadd.f32 %v3132, %v3420
        %v3422 = vpop.f32.mrb[0].mxu0
        %v3423 = vpop.f32.mrb[0].mxu0
        %v3424 = vadd.f32 %v3135, %v3423
        %v3425 = vpop.f32.mrb[0].mxu0
        %3426 = vmatprep.mubr.bf16.mxu0 %v2531
        %3427 = vmatmul.mubr.bf16.gmra.mrb[0].mxu0 %v2530
        %v3428 = vpop.f32.mrb[0].mxu0
        %v3429 = vadd.f32 %v3140, %v3428
        %v3430 = vpop.f32.mrb[0].mxu0
        %v3431 = vpop.f32.mrb[0].mxu0
        %v3432 = vadd.f32 %v3143, %v3431
        %v3433 = vpop.f32.mrb[0].mxu0
        %3434 = vmatprep.mubr.bf16.mxu0 %v2539
        %3435 = vmatmul.mubr.bf16.gmra.mrb[0].mxu0 %v2538
        %v3436 = vpop.f32.mrb[0].mxu0
        %v3437 = vadd.f32 %v3148, %v3436
        %v3438 = vpop.f32.mrb[0].mxu0
        %v3439 = vpop.f32.mrb[0].mxu0
        %v3440 = vadd.f32 %v3151, %v3439
        %v3441 = vpop.f32.mrb[0].mxu0
        %3442 = vmatprep.mubr.bf16.mxu0 %v2547
        %3443 = vmatmul.mubr.bf16.gmra.mrb[0].mxu0 %v2546
        %v3444 = vpop.f32.mrb[0].mxu0
        %v3445 = vadd.f32 %v3156, %v3444
        %v3446 = vpop.f32.mrb[0].mxu0
        %v3447 = vpop.f32.mrb[0].mxu0
        %v3448 = vadd.f32 %v3159, %v3447
        %v3449 = vpop.f32.mrb[0].mxu0
        %3450 = vmatprep.mubr.bf16.mxu0 %v2555
        %3451 = vmatmul.mubr.bf16.gmra.mrb[0].mxu0 %v2554
        %v3452 = vpop.f32.mrb[0].mxu0
        %v3453 = vadd.f32 %v3164, %v3452
        %v3454 = vpop.f32.mrb[0].mxu0
        %v3455 = vpop.f32.mrb[0].mxu0
        %v3456 = vadd.f32 %v3167, %v3455
        %v3457 = vpop.f32.mrb[0].mxu0
        %3458 = vmatprep.mubr.bf16.mxu0 %v2563
        %3459 = vmatmul.mubr.bf16.gmra.mrb[0].mxu0 %v2562
        %v3460 = vpop.f32.mrb[0].mxu0
        %v3461 = vadd.f32 %v3172, %v3460
        %v3462 = vpop.f32.mrb[0].mxu0
        %v3463 = vpop.f32.mrb[0].mxu0
        %v3464 = vadd.f32 %v3175, %v3463
        %v3465 = vpop.f32.mrb[0].mxu0
        %3466 = vmatprep.mubr.bf16.mxu0 %v2571
        %3467 = vmatmul.mubr.bf16.gmra.mrb[0].mxu0 %v2570
        %v3468 = vpop.f32.mrb[0].mxu0
        %v3469 = vadd.f32 %v3180, %v3468
        %v3470 = vpop.f32.mrb[0].mxu0
        %v3471 = vpop.f32.mrb[0].mxu0
        %v3472 = vadd.f32 %v3183, %v3471
        %v3473 = vpop.f32.mrb[0].mxu0
        %3474 = vmatprep.mubr.bf16.mxu0 %v2579
        %3475 = vmatmul.mubr.bf16.gmra.mrb[0].mxu0 %v2578
        %v3476 = vpop.f32.mrb[0].mxu0
        %v3477 = vadd.f32 %v3188, %v3476
        %v3478 = vpop.f32.mrb[0].mxu0
        %v3479 = vpop.f32.mrb[0].mxu0
        %v3480 = vadd.f32 %v3191, %v3479
        %v3481 = vpop.f32.mrb[0].mxu0
        %3482 = vmatprep.mubr.bf16.mxu0 %v2587
        %3483 = vmatmul.mubr.bf16.gmra.mrb[0].mxu0 %v2586
        %v3484 = vpop.f32.mrb[0].mxu0
        %v3485 = vadd.f32 %v3196, %v3484
        %v3486 = vpop.f32.mrb[0].mxu0
        %v3487 = vpop.f32.mrb[0].mxu0
        %v3488 = vadd.f32 %v3199, %v3487
        %v3489 = vpop.f32.mrb[0].mxu0
        %3490 = vmatprep.mubr.bf16.mxu0 %v2595
        %3491 = vmatmul.mubr.bf16.gmra.mrb[0].mxu0 %v2594
        %v3492 = vpop.f32.mrb[0].mxu0
        %v3493 = vadd.f32 %v3204, %v3492
        %v3494 = vpop.f32.mrb[0].mxu0
        %v3495 = vpop.f32.mrb[0].mxu0
        %v3496 = vadd.f32 %v3207, %v3495
        %v3497 = vpop.f32.mrb[0].mxu0
        %3498 = vmatprep.mubr.bf16.mxu0 %v2603
        %3499 = vmatmul.mubr.bf16.gmra.mrb[0].mxu0 %v2602
        %v3500 = vpop.f32.mrb[0].mxu0
        %v3501 = vadd.f32 %v3212, %v3500
        %v3502 = vpop.f32.mrb[0].mxu0
        %v3503 = vpop.f32.mrb[0].mxu0
        %v3504 = vadd.f32 %v3215, %v3503
        %v3505 = vpop.f32.mrb[0].mxu0
        %3506 = vmatprep.mubr.bf16.mxu0 %v2611
        %3507 = vmatmul.mubr.bf16.gmra.mrb[0].mxu0 %v2610
        %v3508 = vpop.f32.mrb[0].mxu0
        %v3509 = vadd.f32 %v3220, %v3508
        %v3510 = vpop.f32.mrb[0].mxu0
        %v3511 = vpop.f32.mrb[0].mxu0
        %v3512 = vadd.f32 %v3223, %v3511
        %v3513 = vpop.f32.mrb[0].mxu0
        %3514 = vmatprep.mubr.bf16.mxu0 %v2619
        %3515 = vmatmul.mubr.bf16.gmra.mrb[0].mxu0 %v2618
        %v3516 = vpop.f32.mrb[0].mxu0
        %v3517 = vadd.f32 %v3228, %v3516
        %v3518 = vpop.f32.mrb[0].mxu0
        %v3519 = vpop.f32.mrb[0].mxu0
        %v3520 = vadd.f32 %v3231, %v3519
        %v3521 = vpop.f32.mrb[0].mxu0
        %3522 = vmatprep.mubr.bf16.mxu0 %v2627
        %3523 = vmatmul.mubr.bf16.gmra.mrb[0].mxu0 %v2626
        %v3524 = vpop.f32.mrb[0].mxu0
        %v3525 = vadd.f32 %v3236, %v3524
        %v3526 = vpop.f32.mrb[0].mxu0
        %v3527 = vpop.f32.mrb[0].mxu0
        %v3528 = vadd.f32 %v3239, %v3527
        %v3529 = vpop.f32.mrb[0].mxu0
        %3530 = vmatprep.mubr.bf16.mxu0 %v2635
        %3531 = vmatmul.mubr.bf16.gmra.mrb[0].mxu0 %v2634
        %v3532 = vpop.f32.mrb[0].mxu0
        %v3533 = vadd.f32 %v3244, %v3532
        %v3534 = vpop.f32.mrb[0].mxu0
        %v3535 = vpop.f32.mrb[0].mxu0
        %v3536 = vadd.f32 %v3247, %v3535
        %v3537 = vpop.f32.mrb[0].mxu0
        %3538 = vmatprep.mubr.bf16.mxu0 %v2643
        %3539 = vmatmul.mubr.bf16.gmra.mrb[0].mxu0 %v2642
        %v3540 = vpop.f32.mrb[0].mxu0
        %v3541 = vadd.f32 %v3252, %v3540
        %v3542 = vpop.f32.mrb[0].mxu0
        %v3543 = vpop.f32.mrb[0].mxu0
        %v3544 = vadd.f32 %v3255, %v3543
        %v3545 = vpop.f32.mrb[0].mxu0
        %3546 = vmatprep.mubr.bf16.mxu0 %v2651
        %3547 = vmatmul.mubr.bf16.gmra.mrb[0].mxu0 %v2650
        %v3548 = vpop.f32.mrb[0].mxu0
        %v3549 = vadd.f32 %v3260, %v3548
        %v3550 = vpop.f32.mrb[0].mxu0
        %v3551 = vpop.f32.mrb[0].mxu0
        %v3552 = vadd.f32 %v3263, %v3551
        %v3553 = vpop.f32.mrb[0].mxu0
        %3554 = vmatprep.mubr.bf16.mxu0 %v2659
        %3555 = vmatmul.mubr.bf16.gmra.mrb[0].mxu0 %v2658
        %v3556 = vpop.f32.mrb[0].mxu0
        %v3557 = vadd.f32 %v3268, %v3556
        %v3558 = vpop.f32.mrb[0].mxu0
        %v3559 = vpop.f32.mrb[0].mxu0
        %v3560 = vadd.f32 %v3271, %v3559
        %v3561 = vpop.f32.mrb[0].mxu0
        %3562 = vmatprep.mubr.bf16.mxu0 %v2667
        %3563 = vmatmul.mubr.bf16.gmra.mrb[0].mxu0 %v2666
        %v3564 = vpop.f32.mrb[0].mxu0
        %v3565 = vadd.f32 %v3276, %v3564
        %v3566 = vpop.f32.mrb[0].mxu0
        %v3567 = vpop.f32.mrb[0].mxu0
        %v3568 = vadd.f32 %v3279, %v3567
        %v3569 = vpop.f32.mrb[0].mxu0
        %3570 = vmatprep.mubr.bf16.mxu0 %v2675
        %3571 = vmatmul.mubr.bf16.gmra.mrb[0].mxu0 %v2674
        %v3572 = vpop.f32.mrb[0].mxu0
        %v3573 = vadd.f32 %v3284, %v3572
        %v3574 = vpop.f32.mrb[0].mxu0
        %v3575 = vpop.f32.mrb[0].mxu0
        %v3576 = vadd.f32 %v3287, %v3575
        %v3577 = vpop.f32.mrb[0].mxu0
        %3578 = vmatprep.mubr.bf16.mxu0 %v2683
        %3579 = vmatmul.mubr.bf16.gmra.mrb[0].mxu0 %v2682
        %v3580 = vpop.f32.mrb[0].mxu0
        %v3581 = vadd.f32 %v3292, %v3580
        %v3582 = vpop.f32.mrb[0].mxu0
        %v3583 = vpop.f32.mrb[0].mxu0
        %v3584 = vadd.f32 %v3295, %v3583
        %v3585 = vpop.f32.mrb[0].mxu0
        %3586 = vmatprep.mubr.bf16.mxu0 %v2691
        %3587 = vmatmul.mubr.bf16.gmra.mrb[0].mxu0 %v2690
        %v3588 = vpop.f32.mrb[0].mxu0
        %v3589 = vadd.f32 %v3300, %v3588
        %v3590 = vpop.f32.mrb[0].mxu0
        %v3591 = vpop.f32.mrb[0].mxu0
        %v3592 = vadd.f32 %v3303, %v3591
        %v3593 = vpop.f32.mrb[0].mxu0
        %3594 = vmatprep.mubr.bf16.mxu0 %v2699
        %3595 = vmatmul.mubr.bf16.gmra.mrb[0].mxu0 %v2698
        %v3596 = vpop.f32.mrb[0].mxu0
        %v3597 = vadd.f32 %v3308, %v3596
        %v3598 = vpop.f32.mrb[0].mxu0
        %v3599 = vpop.f32.mrb[0].mxu0
        %v3600 = vadd.f32 %v3311, %v3599
        %v3601 = vpop.f32.mrb[0].mxu0
        %3602 = vmatprep.mubr.bf16.mxu0 %v2707
        %3603 = vmatmul.mubr.bf16.gmra.mrb[0].mxu0 %v2706
        %v3604 = vpop.f32.mrb[0].mxu0
        %v3605 = vadd.f32 %v3316, %v3604
        %v3606 = vpop.f32.mrb[0].mxu0
        %v3607 = vpop.f32.mrb[0].mxu0
        %v3608 = vadd.f32 %v3319, %v3607
        %v3609 = vpop.f32.mrb[0].mxu0
        %3610 = vdwg.mxu0
        %3611 = vmatprep.subr.bf16.mxu0 0
        %3612 = vmatpush1.bf16.msra.mxu0 %v1020
        %3613 = vmatprep.subr.bf16.mxu0 0
        %3614 = vmatpush1.bf16.msra.mxu0 %v1021
        %3615 = vmatprep.subr.bf16.mxu0 0
        %3616 = vmatpush1.bf16.msra.mxu0 %v1022
        %3617 = vmatprep.subr.bf16.mxu0 0
        %3618 = vmatpush1.bf16.msra.mxu0 %v1023
        %3619 = vmatprep.subr.bf16.mxu0 0
        %3620 = vmatpush1.bf16.msra.mxu0 %v1024
        %3621 = vmatprep.subr.bf16.mxu0 0
        %3622 = vmatpush1.bf16.msra.mxu0 %v1025
        %3623 = vmatprep.subr.bf16.mxu0 0
        %3624 = vmatpush1.bf16.msra.mxu0 %v1026
        %3625 = vmatprep.subr.bf16.mxu0 0
        %3626 = vmatpush1.bf16.msra.mxu0 %v1027
        %3627 = vmatprep.subr.bf16.mxu0 0
        %3628 = vmatpush1.bf16.msra.mxu0 %v1028
        %3629 = vmatprep.subr.bf16.mxu0 0
        %3630 = vmatpush1.bf16.msra.mxu0 %v1029
        %3631 = vmatprep.subr.bf16.mxu0 0
        %3632 = vmatpush1.bf16.msra.mxu0 %v1030
        %3633 = vmatprep.subr.bf16.mxu0 0
        %3634 = vmatpush1.bf16.msra.mxu0 %v1031
        %3635 = vmatprep.subr.bf16.mxu0 0
        %3636 = vmatpush1.bf16.msra.mxu0 %v1032
        %3637 = vmatprep.subr.bf16.mxu0 0
        %3638 = vmatpush1.bf16.msra.mxu0 %v1033
        %3639 = vmatprep.subr.bf16.mxu0 0
        %3640 = vmatpush1.bf16.msra.mxu0 %v1034
        %3641 = vmatprep.subr.bf16.mxu0 0
        %3642 = vmatpush1.bf16.msra.mxu0 %v1035
        %3643 = vmatprep.mubr.bf16.mxu0 %v2461
        %3644 = vmatmul.mubr.bf16.gmra.mrb[0].mxu0 %v2460
        %v3645 = vpop.f32.mrb[0].mxu0
        %v3646 = vadd.f32 %v3357, %v3645
        %v3647 = vpop.f32.mrb[0].mxu0
        %v3648 = vpop.f32.mrb[0].mxu0
        %v3649 = vadd.f32 %v3360, %v3648
        %v3650 = vpop.f32.mrb[0].mxu0
        %3651 = vmatprep.mubr.bf16.mxu0 %v2469
        %3652 = vmatmul.mubr.bf16.gmra.mrb[0].mxu0 %v2468
        %v3653 = vpop.f32.mrb[0].mxu0
        %v3654 = vadd.f32 %v3365, %v3653
        %v3655 = vpop.f32.mrb[0].mxu0
        %v3656 = vpop.f32.mrb[0].mxu0
        %v3657 = vadd.f32 %v3368, %v3656
        %v3658 = vpop.f32.mrb[0].mxu0
        %3659 = vmatprep.mubr.bf16.mxu0 %v2477
        %3660 = vmatmul.mubr.bf16.gmra.mrb[0].mxu0 %v2476
        %v3661 = vpop.f32.mrb[0].mxu0
        %v3662 = vadd.f32 %v3373, %v3661
        %v3663 = vpop.f32.mrb[0].mxu0
        %v3664 = vpop.f32.mrb[0].mxu0
        %v3665 = vadd.f32 %v3376, %v3664
        %v3666 = vpop.f32.mrb[0].mxu0
        %3667 = vmatprep.mubr.bf16.mxu0 %v2485
        %3668 = vmatmul.mubr.bf16.gmra.mrb[0].mxu0 %v2484
        %v3669 = vpop.f32.mrb[0].mxu0
        %v3670 = vadd.f32 %v3381, %v3669
        %v3671 = vpop.f32.mrb[0].mxu0
        %v3672 = vpop.f32.mrb[0].mxu0
        %v3673 = vadd.f32 %v3384, %v3672
        %v3674 = vpop.f32.mrb[0].mxu0
        %3675 = vmatprep.mubr.bf16.mxu0 %v2493
        %3676 = vmatmul.mubr.bf16.gmra.mrb[0].mxu0 %v2492
        %v3677 = vpop.f32.mrb[0].mxu0
        %v3678 = vadd.f32 %v3389, %v3677
        %v3679 = vpop.f32.mrb[0].mxu0
        %v3680 = vpop.f32.mrb[0].mxu0
        %v3681 = vadd.f32 %v3392, %v3680
        %v3682 = vpop.f32.mrb[0].mxu0
        %3683 = vmatprep.mubr.bf16.mxu0 %v2501
        %3684 = vmatmul.mubr.bf16.gmra.mrb[0].mxu0 %v2500
        %v3685 = vpop.f32.mrb[0].mxu0
        %v3686 = vadd.f32 %v3397, %v3685
        %v3687 = vpop.f32.mrb[0].mxu0
        %v3688 = vpop.f32.mrb[0].mxu0
        %v3689 = vadd.f32 %v3400, %v3688
        %v3690 = vpop.f32.mrb[0].mxu0
        %3691 = vmatprep.mubr.bf16.mxu0 %v2509
        %3692 = vmatmul.mubr.bf16.gmra.mrb[0].mxu0 %v2508
        %v3693 = vpop.f32.mrb[0].mxu0
        %v3694 = vadd.f32 %v3405, %v3693
        %v3695 = vpop.f32.mrb[0].mxu0
        %v3696 = vpop.f32.mrb[0].mxu0
        %v3697 = vadd.f32 %v3408, %v3696
        %v3698 = vpop.f32.mrb[0].mxu0
        %3699 = vmatprep.mubr.bf16.mxu0 %v2517
        %3700 = vmatmul.mubr.bf16.gmra.mrb[0].mxu0 %v2516
        %v3701 = vpop.f32.mrb[0].mxu0
        %v3702 = vadd.f32 %v3413, %v3701
        %v3703 = vpop.f32.mrb[0].mxu0
        %v3704 = vpop.f32.mrb[0].mxu0
        %v3705 = vadd.f32 %v3416, %v3704
        %v3706 = vpop.f32.mrb[0].mxu0
        %3707 = vmatprep.mubr.bf16.mxu0 %v2525
        %3708 = vmatmul.mubr.bf16.gmra.mrb[0].mxu0 %v2524
        %v3709 = vpop.f32.mrb[0].mxu0
        %v3710 = vadd.f32 %v3421, %v3709
        %v3711 = vpop.f32.mrb[0].mxu0
        %v3712 = vpop.f32.mrb[0].mxu0
        %v3713 = vadd.f32 %v3424, %v3712
        %v3714 = vpop.f32.mrb[0].mxu0
        %3715 = vmatprep.mubr.bf16.mxu0 %v2533
        %3716 = vmatmul.mubr.bf16.gmra.mrb[0].mxu0 %v2532
        %v3717 = vpop.f32.mrb[0].mxu0
        %v3718 = vadd.f32 %v3429, %v3717
        %v3719 = vpop.f32.mrb[0].mxu0
        %v3720 = vpop.f32.mrb[0].mxu0
        %v3721 = vadd.f32 %v3432, %v3720
        %v3722 = vpop.f32.mrb[0].mxu0
        %3723 = vmatprep.mubr.bf16.mxu0 %v2541
        %3724 = vmatmul.mubr.bf16.gmra.mrb[0].mxu0 %v2540
        %v3725 = vpop.f32.mrb[0].mxu0
        %v3726 = vadd.f32 %v3437, %v3725
        %v3727 = vpop.f32.mrb[0].mxu0
        %v3728 = vpop.f32.mrb[0].mxu0
        %v3729 = vadd.f32 %v3440, %v3728
        %v3730 = vpop.f32.mrb[0].mxu0
        %3731 = vmatprep.mubr.bf16.mxu0 %v2549
        %3732 = vmatmul.mubr.bf16.gmra.mrb[0].mxu0 %v2548
        %v3733 = vpop.f32.mrb[0].mxu0
        %v3734 = vadd.f32 %v3445, %v3733
        %v3735 = vpop.f32.mrb[0].mxu0
        %v3736 = vpop.f32.mrb[0].mxu0
        %v3737 = vadd.f32 %v3448, %v3736
        %v3738 = vpop.f32.mrb[0].mxu0
        %3739 = vmatprep.mubr.bf16.mxu0 %v2557
        %3740 = vmatmul.mubr.bf16.gmra.mrb[0].mxu0 %v2556
        %v3741 = vpop.f32.mrb[0].mxu0
        %v3742 = vadd.f32 %v3453, %v3741
        %v3743 = vpop.f32.mrb[0].mxu0
        %v3744 = vpop.f32.mrb[0].mxu0
        %v3745 = vadd.f32 %v3456, %v3744
        %v3746 = vpop.f32.mrb[0].mxu0
        %3747 = vmatprep.mubr.bf16.mxu0 %v2565
        %3748 = vmatmul.mubr.bf16.gmra.mrb[0].mxu0 %v2564
        %v3749 = vpop.f32.mrb[0].mxu0
        %v3750 = vadd.f32 %v3461, %v3749
        %v3751 = vpop.f32.mrb[0].mxu0
        %v3752 = vpop.f32.mrb[0].mxu0
        %v3753 = vadd.f32 %v3464, %v3752
        %v3754 = vpop.f32.mrb[0].mxu0
        %3755 = vmatprep.mubr.bf16.mxu0 %v2573
        %3756 = vmatmul.mubr.bf16.gmra.mrb[0].mxu0 %v2572
        %v3757 = vpop.f32.mrb[0].mxu0
        %v3758 = vadd.f32 %v3469, %v3757
        %v3759 = vpop.f32.mrb[0].mxu0
        %v3760 = vpop.f32.mrb[0].mxu0
        %v3761 = vadd.f32 %v3472, %v3760
        %v3762 = vpop.f32.mrb[0].mxu0
        %3763 = vmatprep.mubr.bf16.mxu0 %v2581
        %3764 = vmatmul.mubr.bf16.gmra.mrb[0].mxu0 %v2580
        %v3765 = vpop.f32.mrb[0].mxu0
        %v3766 = vadd.f32 %v3477, %v3765
        %v3767 = vpop.f32.mrb[0].mxu0
        %v3768 = vpop.f32.mrb[0].mxu0
        %v3769 = vadd.f32 %v3480, %v3768
        %v3770 = vpop.f32.mrb[0].mxu0
        %3771 = vmatprep.mubr.bf16.mxu0 %v2589
        %3772 = vmatmul.mubr.bf16.gmra.mrb[0].mxu0 %v2588
        %v3773 = vpop.f32.mrb[0].mxu0
        %v3774 = vadd.f32 %v3485, %v3773
        %v3775 = vpop.f32.mrb[0].mxu0
        %v3776 = vpop.f32.mrb[0].mxu0
        %v3777 = vadd.f32 %v3488, %v3776
        %v3778 = vpop.f32.mrb[0].mxu0
        %3779 = vmatprep.mubr.bf16.mxu0 %v2597
        %3780 = vmatmul.mubr.bf16.gmra.mrb[0].mxu0 %v2596
        %v3781 = vpop.f32.mrb[0].mxu0
        %v3782 = vadd.f32 %v3493, %v3781
        %v3783 = vpop.f32.mrb[0].mxu0
        %v3784 = vpop.f32.mrb[0].mxu0
        %v3785 = vadd.f32 %v3496, %v3784
        %v3786 = vpop.f32.mrb[0].mxu0
        %3787 = vmatprep.mubr.bf16.mxu0 %v2605
        %3788 = vmatmul.mubr.bf16.gmra.mrb[0].mxu0 %v2604
        %v3789 = vpop.f32.mrb[0].mxu0
        %v3790 = vadd.f32 %v3501, %v3789
        %v3791 = vpop.f32.mrb[0].mxu0
        %v3792 = vpop.f32.mrb[0].mxu0
        %v3793 = vadd.f32 %v3504, %v3792
        %v3794 = vpop.f32.mrb[0].mxu0
        %3795 = vmatprep.mubr.bf16.mxu0 %v2613
        %3796 = vmatmul.mubr.bf16.gmra.mrb[0].mxu0 %v2612
        %v3797 = vpop.f32.mrb[0].mxu0
        %v3798 = vadd.f32 %v3509, %v3797
        %v3799 = vpop.f32.mrb[0].mxu0
        %v3800 = vpop.f32.mrb[0].mxu0
        %v3801 = vadd.f32 %v3512, %v3800
        %v3802 = vpop.f32.mrb[0].mxu0
        %3803 = vmatprep.mubr.bf16.mxu0 %v2621
        %3804 = vmatmul.mubr.bf16.gmra.mrb[0].mxu0 %v2620
        %v3805 = vpop.f32.mrb[0].mxu0
        %v3806 = vadd.f32 %v3517, %v3805
        %v3807 = vpop.f32.mrb[0].mxu0
        %v3808 = vpop.f32.mrb[0].mxu0
        %v3809 = vadd.f32 %v3520, %v3808
        %v3810 = vpop.f32.mrb[0].mxu0
        %3811 = vmatprep.mubr.bf16.mxu0 %v2629
        %3812 = vmatmul.mubr.bf16.gmra.mrb[0].mxu0 %v2628
        %v3813 = vpop.f32.mrb[0].mxu0
        %v3814 = vadd.f32 %v3525, %v3813
        %v3815 = vpop.f32.mrb[0].mxu0
        %v3816 = vpop.f32.mrb[0].mxu0
        %v3817 = vadd.f32 %v3528, %v3816
        %v3818 = vpop.f32.mrb[0].mxu0
        %3819 = vmatprep.mubr.bf16.mxu0 %v2637
        %3820 = vmatmul.mubr.bf16.gmra.mrb[0].mxu0 %v2636
        %v3821 = vpop.f32.mrb[0].mxu0
        %v3822 = vadd.f32 %v3533, %v3821
        %v3823 = vpop.f32.mrb[0].mxu0
        %v3824 = vpop.f32.mrb[0].mxu0
        %v3825 = vadd.f32 %v3536, %v3824
        %v3826 = vpop.f32.mrb[0].mxu0
        %3827 = vmatprep.mubr.bf16.mxu0 %v2645
        %3828 = vmatmul.mubr.bf16.gmra.mrb[0].mxu0 %v2644
        %v3829 = vpop.f32.mrb[0].mxu0
        %v3830 = vadd.f32 %v3541, %v3829
        %v3831 = vpop.f32.mrb[0].mxu0
        %v3832 = vpop.f32.mrb[0].mxu0
        %v3833 = vadd.f32 %v3544, %v3832
        %v3834 = vpop.f32.mrb[0].mxu0
        %3835 = vmatprep.mubr.bf16.mxu0 %v2653
        %3836 = vmatmul.mubr.bf16.gmra.mrb[0].mxu0 %v2652
        %v3837 = vpop.f32.mrb[0].mxu0
        %v3838 = vadd.f32 %v3549, %v3837
        %v3839 = vpop.f32.mrb[0].mxu0
        %v3840 = vpop.f32.mrb[0].mxu0
        %v3841 = vadd.f32 %v3552, %v3840
        %v3842 = vpop.f32.mrb[0].mxu0
        %3843 = vmatprep.mubr.bf16.mxu0 %v2661
        %3844 = vmatmul.mubr.bf16.gmra.mrb[0].mxu0 %v2660
        %v3845 = vpop.f32.mrb[0].mxu0
        %v3846 = vadd.f32 %v3557, %v3845
        %v3847 = vpop.f32.mrb[0].mxu0
        %v3848 = vpop.f32.mrb[0].mxu0
        %v3849 = vadd.f32 %v3560, %v3848
        %v3850 = vpop.f32.mrb[0].mxu0
        %3851 = vmatprep.mubr.bf16.mxu0 %v2669
        %3852 = vmatmul.mubr.bf16.gmra.mrb[0].mxu0 %v2668
        %v3853 = vpop.f32.mrb[0].mxu0
        %v3854 = vadd.f32 %v3565, %v3853
        %v3855 = vpop.f32.mrb[0].mxu0
        %v3856 = vpop.f32.mrb[0].mxu0
        %v3857 = vadd.f32 %v3568, %v3856
        %v3858 = vpop.f32.mrb[0].mxu0
        %3859 = vmatprep.mubr.bf16.mxu0 %v2677
        %3860 = vmatmul.mubr.bf16.gmra.mrb[0].mxu0 %v2676
        %v3861 = vpop.f32.mrb[0].mxu0
        %v3862 = vadd.f32 %v3573, %v3861
        %v3863 = vpop.f32.mrb[0].mxu0
        %v3864 = vpop.f32.mrb[0].mxu0
        %v3865 = vadd.f32 %v3576, %v3864
        %v3866 = vpop.f32.mrb[0].mxu0
        %3867 = vmatprep.mubr.bf16.mxu0 %v2685
        %3868 = vmatmul.mubr.bf16.gmra.mrb[0].mxu0 %v2684
        %v3869 = vpop.f32.mrb[0].mxu0
        %v3870 = vadd.f32 %v3581, %v3869
        %v3871 = vpop.f32.mrb[0].mxu0
        %v3872 = vpop.f32.mrb[0].mxu0
        %v3873 = vadd.f32 %v3584, %v3872
        %v3874 = vpop.f32.mrb[0].mxu0
        %3875 = vmatprep.mubr.bf16.mxu0 %v2693
        %3876 = vmatmul.mubr.bf16.gmra.mrb[0].mxu0 %v2692
        %v3877 = vpop.f32.mrb[0].mxu0
        %v3878 = vadd.f32 %v3589, %v3877
        %v3879 = vpop.f32.mrb[0].mxu0
        %v3880 = vpop.f32.mrb[0].mxu0
        %v3881 = vadd.f32 %v3592, %v3880
        %v3882 = vpop.f32.mrb[0].mxu0
        %3883 = vmatprep.mubr.bf16.mxu0 %v2701
        %3884 = vmatmul.mubr.bf16.gmra.mrb[0].mxu0 %v2700
        %v3885 = vpop.f32.mrb[0].mxu0
        %v3886 = vadd.f32 %v3597, %v3885
        %v3887 = vpop.f32.mrb[0].mxu0
        %v3888 = vpop.f32.mrb[0].mxu0
        %v3889 = vadd.f32 %v3600, %v3888
        %v3890 = vpop.f32.mrb[0].mxu0
        %3891 = vmatprep.mubr.bf16.mxu0 %v2709
        %3892 = vmatmul.mubr.bf16.gmra.mrb[0].mxu0 %v2708
        %v3893 = vpop.f32.mrb[0].mxu0
        %v3894 = vadd.f32 %v3605, %v3893
        %v3895 = vpop.f32.mrb[0].mxu0
        %v3896 = vpop.f32.mrb[0].mxu0
        %v3897 = vadd.f32 %v3608, %v3896
        %v3898 = vpop.f32.mrb[0].mxu0
        %3899 = vdwg.mxu0
        %3900 = vmatprep.subr.bf16.mxu0 0
        %3901 = vmatpush1.bf16.msra.mxu0 %v1036
        %3902 = vmatprep.subr.bf16.mxu0 0
        %3903 = vmatpush1.bf16.msra.mxu0 %v1037
        %3904 = vmatprep.subr.bf16.mxu0 0
        %3905 = vmatpush1.bf16.msra.mxu0 %v1038
        %3906 = vmatprep.subr.bf16.mxu0 0
        %3907 = vmatpush1.bf16.msra.mxu0 %v1039
        %3908 = vmatprep.subr.bf16.mxu0 0
        %3909 = vmatpush1.bf16.msra.mxu0 %v1040
        %3910 = vmatprep.subr.bf16.mxu0 0
        %3911 = vmatpush1.bf16.msra.mxu0 %v1041
        %3912 = vmatprep.subr.bf16.mxu0 0
        %3913 = vmatpush1.bf16.msra.mxu0 %v1042
        %3914 = vmatprep.subr.bf16.mxu0 0
        %3915 = vmatpush1.bf16.msra.mxu0 %v1043
        %3916 = vmatprep.subr.bf16.mxu0 0
        %3917 = vmatpush1.bf16.msra.mxu0 %v1044
        %3918 = vmatprep.subr.bf16.mxu0 0
        %3919 = vmatpush1.bf16.msra.mxu0 %v1045
        %3920 = vmatprep.subr.bf16.mxu0 0
        %3921 = vmatpush1.bf16.msra.mxu0 %v1046
        %3922 = vmatprep.subr.bf16.mxu0 0
        %3923 = vmatpush1.bf16.msra.mxu0 %v1047
        %3924 = vmatprep.subr.bf16.mxu0 0
        %3925 = vmatpush1.bf16.msra.mxu0 0
        %3926 = vmatprep.subr.bf16.mxu0 0
        %3927 = vmatpush1.bf16.msra.mxu0 0
        %3928 = vmatprep.subr.bf16.mxu0 0
        %3929 = vmatpush1.bf16.msra.mxu0 0
        %3930 = vmatprep.subr.bf16.mxu0 0
        %3931 = vmatpush1.bf16.msra.mxu0 0
        %3932 = vmatprep.mubr.bf16.mxu0 %v2938
        %3933 = vmatmul.mubr.bf16.gmra.mrb[0].mxu0 %v2462
        %v3934 = vpop.f32.mrb[0].mxu0
        %v3935 = vadd.f32 %v3646, %v3934
        %v3936 = vpop.f32.mrb[0].mxu0
        %v3937 = vpop.f32.mrb[0].mxu0
        %v3938 = vadd.f32 %v3649, %v3937
        %v3939 = vpop.f32.mrb[0].mxu0
        %3940 = vmatprep.mubr.bf16.mxu0 %v2941
        %3941 = vmatmul.mubr.bf16.gmra.mrb[0].mxu0 %v2470
        %v3942 = vpop.f32.mrb[0].mxu0
        %v3943 = vadd.f32 %v3654, %v3942
        %v3944 = vpop.f32.mrb[0].mxu0
        %v3945 = vpop.f32.mrb[0].mxu0
        %v3946 = vadd.f32 %v3657, %v3945
        %v3947 = vpop.f32.mrb[0].mxu0
        %3948 = vmatprep.mubr.bf16.mxu0 %v2944
        %3949 = vmatmul.mubr.bf16.gmra.mrb[0].mxu0 %v2478
        %v3950 = vpop.f32.mrb[0].mxu0
        %v3951 = vadd.f32 %v3662, %v3950
        %v3952 = vpop.f32.mrb[0].mxu0
        %v3953 = vpop.f32.mrb[0].mxu0
        %v3954 = vadd.f32 %v3665, %v3953
        %v3955 = vpop.f32.mrb[0].mxu0
        %3956 = vmatprep.mubr.bf16.mxu0 %v2947
        %3957 = vmatmul.mubr.bf16.gmra.mrb[0].mxu0 %v2486
        %v3958 = vpop.f32.mrb[0].mxu0
        %v3959 = vadd.f32 %v3670, %v3958
        %v3960 = vpop.f32.mrb[0].mxu0
        %v3961 = vpop.f32.mrb[0].mxu0
        %v3962 = vadd.f32 %v3673, %v3961
        %v3963 = vpop.f32.mrb[0].mxu0
        %3964 = vmatprep.mubr.bf16.mxu0 %v2950
        %3965 = vmatmul.mubr.bf16.gmra.mrb[0].mxu0 %v2494
        %v3966 = vpop.f32.mrb[0].mxu0
        %v3967 = vadd.f32 %v3678, %v3966
        %v3968 = vpop.f32.mrb[0].mxu0
        %v3969 = vpop.f32.mrb[0].mxu0
        %v3970 = vadd.f32 %v3681, %v3969
        %v3971 = vpop.f32.mrb[0].mxu0
        %3972 = vmatprep.mubr.bf16.mxu0 %v2953
        %3973 = vmatmul.mubr.bf16.gmra.mrb[0].mxu0 %v2502
        %v3974 = vpop.f32.mrb[0].mxu0
        %v3975 = vadd.f32 %v3686, %v3974
        %v3976 = vpop.f32.mrb[0].mxu0
        %v3977 = vpop.f32.mrb[0].mxu0
        %v3978 = vadd.f32 %v3689, %v3977
        %v3979 = vpop.f32.mrb[0].mxu0
        %3980 = vmatprep.mubr.bf16.mxu0 %v2956
        %3981 = vmatmul.mubr.bf16.gmra.mrb[0].mxu0 %v2510
        %v3982 = vpop.f32.mrb[0].mxu0
        %v3983 = vadd.f32 %v3694, %v3982
        %v3984 = vpop.f32.mrb[0].mxu0
        %v3985 = vpop.f32.mrb[0].mxu0
        %v3986 = vadd.f32 %v3697, %v3985
        %v3987 = vpop.f32.mrb[0].mxu0
        %3988 = vmatprep.mubr.bf16.mxu0 %v2959
        %3989 = vmatmul.mubr.bf16.gmra.mrb[0].mxu0 %v2518
        %v3990 = vpop.f32.mrb[0].mxu0
        %v3991 = vadd.f32 %v3702, %v3990
        %v3992 = vpop.f32.mrb[0].mxu0
        %v3993 = vpop.f32.mrb[0].mxu0
        %v3994 = vadd.f32 %v3705, %v3993
        %v3995 = vpop.f32.mrb[0].mxu0
        %3996 = vmatprep.mubr.bf16.mxu0 %v2962
        %3997 = vmatmul.mubr.bf16.gmra.mrb[0].mxu0 %v2526
        %v3998 = vpop.f32.mrb[0].mxu0
        %v3999 = vadd.f32 %v3710, %v3998
        %v4000 = vpop.f32.mrb[0].mxu0
        %v4001 = vpop.f32.mrb[0].mxu0
        %v4002 = vadd.f32 %v3713, %v4001
        %v4003 = vpop.f32.mrb[0].mxu0
        %4004 = vmatprep.mubr.bf16.mxu0 %v2965
        %4005 = vmatmul.mubr.bf16.gmra.mrb[0].mxu0 %v2534
        %v4006 = vpop.f32.mrb[0].mxu0
        %v4007 = vadd.f32 %v3718, %v4006
        %v4008 = vpop.f32.mrb[0].mxu0
        %v4009 = vpop.f32.mrb[0].mxu0
        %v4010 = vadd.f32 %v3721, %v4009
        %v4011 = vpop.f32.mrb[0].mxu0
        %4012 = vmatprep.mubr.bf16.mxu0 %v2968
        %4013 = vmatmul.mubr.bf16.gmra.mrb[0].mxu0 %v2542
        %v4014 = vpop.f32.mrb[0].mxu0
        %v4015 = vadd.f32 %v3726, %v4014
        %v4016 = vpop.f32.mrb[0].mxu0
        %v4017 = vpop.f32.mrb[0].mxu0
        %v4018 = vadd.f32 %v3729, %v4017
        %v4019 = vpop.f32.mrb[0].mxu0
        %4020 = vmatprep.mubr.bf16.mxu0 %v2971
        %4021 = vmatmul.mubr.bf16.gmra.mrb[0].mxu0 %v2550
        %v4022 = vpop.f32.mrb[0].mxu0
        %v4023 = vadd.f32 %v3734, %v4022
        %v4024 = vpop.f32.mrb[0].mxu0
        %v4025 = vpop.f32.mrb[0].mxu0
        %v4026 = vadd.f32 %v3737, %v4025
        %v4027 = vpop.f32.mrb[0].mxu0
        %4028 = vmatprep.mubr.bf16.mxu0 %v2974
        %4029 = vmatmul.mubr.bf16.gmra.mrb[0].mxu0 %v2558
        %v4030 = vpop.f32.mrb[0].mxu0
        %v4031 = vadd.f32 %v3742, %v4030
        %v4032 = vpop.f32.mrb[0].mxu0
        %v4033 = vpop.f32.mrb[0].mxu0
        %v4034 = vadd.f32 %v3745, %v4033
        %v4035 = vpop.f32.mrb[0].mxu0
        %4036 = vmatprep.mubr.bf16.mxu0 %v2977
        %4037 = vmatmul.mubr.bf16.gmra.mrb[0].mxu0 %v2566
        %v4038 = vpop.f32.mrb[0].mxu0
        %v4039 = vadd.f32 %v3750, %v4038
        %v4040 = vpop.f32.mrb[0].mxu0
        %v4041 = vpop.f32.mrb[0].mxu0
        %v4042 = vadd.f32 %v3753, %v4041
        %v4043 = vpop.f32.mrb[0].mxu0
        %4044 = vmatprep.mubr.bf16.mxu0 %v2980
        %4045 = vmatmul.mubr.bf16.gmra.mrb[0].mxu0 %v2574
        %v4046 = vpop.f32.mrb[0].mxu0
        %v4047 = vadd.f32 %v3758, %v4046
        %v4048 = vpop.f32.mrb[0].mxu0
        %v4049 = vpop.f32.mrb[0].mxu0
        %v4050 = vadd.f32 %v3761, %v4049
        %v4051 = vpop.f32.mrb[0].mxu0
        %4052 = vmatprep.mubr.bf16.mxu0 %v2983
        %4053 = vmatmul.mubr.bf16.gmra.mrb[0].mxu0 %v2582
        %v4054 = vpop.f32.mrb[0].mxu0
        %v4055 = vadd.f32 %v3766, %v4054
        %v4056 = vpop.f32.mrb[0].mxu0
        %v4057 = vpop.f32.mrb[0].mxu0
        %v4058 = vadd.f32 %v3769, %v4057
        %v4059 = vpop.f32.mrb[0].mxu0
        %4060 = vmatprep.mubr.bf16.mxu0 %v2986
        %4061 = vmatmul.mubr.bf16.gmra.mrb[0].mxu0 %v2590
        %v4062 = vpop.f32.mrb[0].mxu0
        %v4063 = vadd.f32 %v3774, %v4062
        %v4064 = vpop.f32.mrb[0].mxu0
        %v4065 = vpop.f32.mrb[0].mxu0
        %v4066 = vadd.f32 %v3777, %v4065
        %v4067 = vpop.f32.mrb[0].mxu0
        %4068 = vmatprep.mubr.bf16.mxu0 %v2989
        %4069 = vmatmul.mubr.bf16.gmra.mrb[0].mxu0 %v2598
        %v4070 = vpop.f32.mrb[0].mxu0
        %v4071 = vadd.f32 %v3782, %v4070
        %v4072 = vpop.f32.mrb[0].mxu0
        %v4073 = vpop.f32.mrb[0].mxu0
        %v4074 = vadd.f32 %v3785, %v4073
        %v4075 = vpop.f32.mrb[0].mxu0
        %4076 = vmatprep.mubr.bf16.mxu0 %v2992
        %4077 = vmatmul.mubr.bf16.gmra.mrb[0].mxu0 %v2606
        %v4078 = vpop.f32.mrb[0].mxu0
        %v4079 = vadd.f32 %v3790, %v4078
        %v4080 = vpop.f32.mrb[0].mxu0
        %v4081 = vpop.f32.mrb[0].mxu0
        %v4082 = vadd.f32 %v3793, %v4081
        %v4083 = vpop.f32.mrb[0].mxu0
        %4084 = vmatprep.mubr.bf16.mxu0 %v2995
        %4085 = vmatmul.mubr.bf16.gmra.mrb[0].mxu0 %v2614
        %v4086 = vpop.f32.mrb[0].mxu0
        %v4087 = vadd.f32 %v3798, %v4086
        %v4088 = vpop.f32.mrb[0].mxu0
        %v4089 = vpop.f32.mrb[0].mxu0
        %v4090 = vadd.f32 %v3801, %v4089
        %v4091 = vpop.f32.mrb[0].mxu0
        %4092 = vmatprep.mubr.bf16.mxu0 %v2998
        %4093 = vmatmul.mubr.bf16.gmra.mrb[0].mxu0 %v2622
        %v4094 = vpop.f32.mrb[0].mxu0
        %v4095 = vadd.f32 %v3806, %v4094
        %v4096 = vpop.f32.mrb[0].mxu0
        %v4097 = vpop.f32.mrb[0].mxu0
        %v4098 = vadd.f32 %v3809, %v4097
        %v4099 = vpop.f32.mrb[0].mxu0
        %4100 = vmatprep.mubr.bf16.mxu0 %v3001
        %4101 = vmatmul.mubr.bf16.gmra.mrb[0].mxu0 %v2630
        %v4102 = vpop.f32.mrb[0].mxu0
        %v4103 = vadd.f32 %v3814, %v4102
        %v4104 = vpop.f32.mrb[0].mxu0
        %v4105 = vpop.f32.mrb[0].mxu0
        %v4106 = vadd.f32 %v3817, %v4105
        %v4107 = vpop.f32.mrb[0].mxu0
        %4108 = vmatprep.mubr.bf16.mxu0 %v3004
        %4109 = vmatmul.mubr.bf16.gmra.mrb[0].mxu0 %v2638
        %v4110 = vpop.f32.mrb[0].mxu0
        %v4111 = vadd.f32 %v3822, %v4110
        %v4112 = vpop.f32.mrb[0].mxu0
        %v4113 = vpop.f32.mrb[0].mxu0
        %v4114 = vadd.f32 %v3825, %v4113
        %v4115 = vpop.f32.mrb[0].mxu0
        %4116 = vmatprep.mubr.bf16.mxu0 %v3007
        %4117 = vmatmul.mubr.bf16.gmra.mrb[0].mxu0 %v2646
        %v4118 = vpop.f32.mrb[0].mxu0
        %v4119 = vadd.f32 %v3830, %v4118
        %v4120 = vpop.f32.mrb[0].mxu0
        %v4121 = vpop.f32.mrb[0].mxu0
        %v4122 = vadd.f32 %v3833, %v4121
        %v4123 = vpop.f32.mrb[0].mxu0
        %4124 = vmatprep.mubr.bf16.mxu0 %v3010
        %4125 = vmatmul.mubr.bf16.gmra.mrb[0].mxu0 %v2654
        %v4126 = vpop.f32.mrb[0].mxu0
        %v4127 = vadd.f32 %v3838, %v4126
        %v4128 = vpop.f32.mrb[0].mxu0
        %v4129 = vpop.f32.mrb[0].mxu0
        %v4130 = vadd.f32 %v3841, %v4129
        %v4131 = vpop.f32.mrb[0].mxu0
        %4132 = vmatprep.mubr.bf16.mxu0 %v3013
        %4133 = vmatmul.mubr.bf16.gmra.mrb[0].mxu0 %v2662
        %v4134 = vpop.f32.mrb[0].mxu0
        %v4135 = vadd.f32 %v3846, %v4134
        %v4136 = vpop.f32.mrb[0].mxu0
        %v4137 = vpop.f32.mrb[0].mxu0
        %v4138 = vadd.f32 %v3849, %v4137
        %v4139 = vpop.f32.mrb[0].mxu0
        %4140 = vmatprep.mubr.bf16.mxu0 %v3016
        %4141 = vmatmul.mubr.bf16.gmra.mrb[0].mxu0 %v2670
        %v4142 = vpop.f32.mrb[0].mxu0
        %v4143 = vadd.f32 %v3854, %v4142
        %v4144 = vpop.f32.mrb[0].mxu0
        %v4145 = vpop.f32.mrb[0].mxu0
        %v4146 = vadd.f32 %v3857, %v4145
        %v4147 = vpop.f32.mrb[0].mxu0
        %4148 = vmatprep.mubr.bf16.mxu0 %v3019
        %4149 = vmatmul.mubr.bf16.gmra.mrb[0].mxu0 %v2678
        %v4150 = vpop.f32.mrb[0].mxu0
        %v4151 = vadd.f32 %v3862, %v4150
        %v4152 = vpop.f32.mrb[0].mxu0
        %v4153 = vpop.f32.mrb[0].mxu0
        %v4154 = vadd.f32 %v3865, %v4153
        %v4155 = vpop.f32.mrb[0].mxu0
        %4156 = vmatprep.mubr.bf16.mxu0 %v3022
        %4157 = vmatmul.mubr.bf16.gmra.mrb[0].mxu0 %v2686
        %v4158 = vpop.f32.mrb[0].mxu0
        %v4159 = vadd.f32 %v3870, %v4158
        %v4160 = vpop.f32.mrb[0].mxu0
        %v4161 = vpop.f32.mrb[0].mxu0
        %v4162 = vadd.f32 %v3873, %v4161
        %v4163 = vpop.f32.mrb[0].mxu0
        %4164 = vmatprep.mubr.bf16.mxu0 %v3025
        %4165 = vmatmul.mubr.bf16.gmra.mrb[0].mxu0 %v2694
        %v4166 = vpop.f32.mrb[0].mxu0
        %v4167 = vadd.f32 %v3878, %v4166
        %v4168 = vpop.f32.mrb[0].mxu0
        %v4169 = vpop.f32.mrb[0].mxu0
        %v4170 = vadd.f32 %v3881, %v4169
        %v4171 = vpop.f32.mrb[0].mxu0
        %4172 = vmatprep.mubr.bf16.mxu0 %v3028
        %4173 = vmatmul.mubr.bf16.gmra.mrb[0].mxu0 %v2702
        %v4174 = vpop.f32.mrb[0].mxu0
        %v4175 = vadd.f32 %v3886, %v4174
        %v4176 = vpop.f32.mrb[0].mxu0
        %v4177 = vpop.f32.mrb[0].mxu0
        %v4178 = vadd.f32 %v3889, %v4177
        %v4179 = vpop.f32.mrb[0].mxu0
        %4180 = vmatprep.mubr.bf16.mxu0 %v3031
        %4181 = vmatmul.mubr.bf16.gmra.mrb[0].mxu0 %v2710
        %v4182 = vpop.f32.mrb[0].mxu0
        %v4183 = vadd.f32 %v3894, %v4182
        %v4184 = vpop.f32.mrb[0].mxu0
        %v4185 = vpop.f32.mrb[0].mxu0
        %v4186 = vadd.f32 %v3897, %v4185
        %v4187 = vpop.f32.mrb[0].mxu0
        %4188 = vdwg.mxu0
        %v4189 = vmax.f32 %v3935, 0.0
        %v4190 = vmax.f32 %v3938, 0.0
        %v4191 = vmax.f32 %v3943, 0.0
        %v4192 = vmax.f32 %v3946, 0.0
        %v4193 = vmax.f32 %v3951, 0.0
        %v4194 = vmax.f32 %v3954, 0.0
        %v4195 = vmax.f32 %v3959, 0.0
        %v4196 = vmax.f32 %v3962, 0.0
        %v4197 = vmax.f32 %v3967, 0.0
        %v4198 = vmax.f32 %v3970, 0.0
        %v4199 = vmax.f32 %v3975, 0.0
        %v4200 = vmax.f32 %v3978, 0.0
        %v4201 = vmax.f32 %v3983, 0.0
        %v4202 = vmax.f32 %v3986, 0.0
        %v4203 = vmax.f32 %v3991, 0.0
        %v4204 = vmax.f32 %v3994, 0.0
        %v4205 = vmax.f32 %v3999, 0.0
        %v4206 = vmax.f32 %v4002, 0.0
        %v4207 = vmax.f32 %v4007, 0.0
        %v4208 = vmax.f32 %v4010, 0.0
        %v4209 = vmax.f32 %v4015, 0.0
        %v4210 = vmax.f32 %v4018, 0.0
        %v4211 = vmax.f32 %v4023, 0.0
        %v4212 = vmax.f32 %v4026, 0.0
        %v4213 = vmax.f32 %v4031, 0.0
        %v4214 = vmax.f32 %v4034, 0.0
        %v4215 = vmax.f32 %v4039, 0.0
        %v4216 = vmax.f32 %v4042, 0.0
        %v4217 = vmax.f32 %v4047, 0.0
        %v4218 = vmax.f32 %v4050, 0.0
        %v4219 = vmax.f32 %v4055, 0.0
        %v4220 = vmax.f32 %v4058, 0.0
        %v4221 = vmax.f32 %v4063, 0.0
        %v4222 = vmax.f32 %v4066, 0.0
        %v4223 = vmax.f32 %v4071, 0.0
        %v4224 = vmax.f32 %v4074, 0.0
        %v4225 = vmax.f32 %v4079, 0.0
        %v4226 = vmax.f32 %v4082, 0.0
        %v4227 = vmax.f32 %v4087, 0.0
        %v4228 = vmax.f32 %v4090, 0.0
        %v4229 = vmax.f32 %v4095, 0.0
        %v4230 = vmax.f32 %v4098, 0.0
        %v4231 = vmax.f32 %v4103, 0.0
        %v4232 = vmax.f32 %v4106, 0.0
        %v4233 = vmax.f32 %v4111, 0.0
        %v4234 = vmax.f32 %v4114, 0.0
        %v4235 = vmax.f32 %v4119, 0.0
        %v4236 = vmax.f32 %v4122, 0.0
        %v4237 = vmax.f32 %v4127, 0.0
        %v4238 = vmax.f32 %v4130, 0.0
        %v4239 = vmax.f32 %v4135, 0.0
        %v4240 = vmax.f32 %v4138, 0.0
        %v4241 = vmax.f32 %v4143, 0.0
        %v4242 = vmax.f32 %v4146, 0.0
        %v4243 = vmax.f32 %v4151, 0.0
        %v4244 = vmax.f32 %v4154, 0.0
        %v4245 = vmax.f32 %v4159, 0.0
        %v4246 = vmax.f32 %v4162, 0.0
        %v4247 = vmax.f32 %v4167, 0.0
        %v4248 = vmax.f32 %v4170, 0.0
        %v4249 = vmax.f32 %v4175, 0.0
        %v4250 = vmax.f32 %v4178, 0.0
        %v4251 = vmax.f32 %v4183, 0.0
        %v4252 = vmax.f32 %v4186, 0.0
        %v4253 = vpack.c.bf16 %v4190, %v4189
        %v4254 = vpack.c.bf16 %v4192, %v4191
        %v4255 = vpack.c.bf16 %v4194, %v4193
        %v4256 = vpack.c.bf16 %v4196, %v4195
        %v4257 = vpack.c.bf16 %v4198, %v4197
        %v4258 = vpack.c.bf16 %v4200, %v4199
        %v4259 = vpack.c.bf16 %v4202, %v4201
        %v4260 = vpack.c.bf16 %v4204, %v4203
        %v4261 = vpack.c.bf16 %v4206, %v4205
        %v4262 = vpack.c.bf16 %v4208, %v4207
        %v4263 = vpack.c.bf16 %v4210, %v4209
        %v4264 = vpack.c.bf16 %v4212, %v4211
        %v4265 = vpack.c.bf16 %v4214, %v4213
        %v4266 = vpack.c.bf16 %v4216, %v4215
        %v4267 = vpack.c.bf16 %v4218, %v4217
        %v4268 = vpack.c.bf16 %v4220, %v4219
        %v4269 = vpack.c.bf16 %v4222, %v4221
        %v4270 = vpack.c.bf16 %v4224, %v4223
        %v4271 = vpack.c.bf16 %v4226, %v4225
        %v4272 = vpack.c.bf16 %v4228, %v4227
        %v4273 = vpack.c.bf16 %v4230, %v4229
        %v4274 = vpack.c.bf16 %v4232, %v4231
        %v4275 = vpack.c.bf16 %v4234, %v4233
        %v4276 = vpack.c.bf16 %v4236, %v4235
        %v4277 = vpack.c.bf16 %v4238, %v4237
        %v4278 = vpack.c.bf16 %v4240, %v4239
        %v4279 = vpack.c.bf16 %v4242, %v4241
        %v4280 = vpack.c.bf16 %v4244, %v4243
        %v4281 = vpack.c.bf16 %v4246, %v4245
        %v4282 = vpack.c.bf16 %v4248, %v4247
        %v4283 = vpack.c.bf16 %v4250, %v4249
        %v4284 = vpack.c.bf16 %v4252, %v4251
        %v4285 = vld [vmem:[%s2] sm:$0xff]
        %v4286 = vld [vmem:[%s2 + $0x8] sm:$0xff]
        %v4287 = vld [vmem:[%s2 + $0x10] sm:$0xff]
        %v4288 = vld [vmem:[%s2 + $0x18] sm:$0xff]
        %v4289 = vld [vmem:[%s2 + $0x20] sm:$0xff]
        %v4290 = vld [vmem:[%s2 + $0x28] sm:$0xff]
        %v4291 = vld [vmem:[%s2 + $0x30] sm:$0xff]
        %v4292 = vld [vmem:[%s2 + $0x38] sm:$0xff]
        %v4293 = vld [vmem:[%s2 + $0x40] sm:$0xff]
        %v4294 = vld [vmem:[%s2 + $0x48] sm:$0xff]
        %v4295 = vld [vmem:[%s2 + $0x50] sm:$0xff]
        %v4296 = vld [vmem:[%s2 + $0x58] sm:$0xff]
        %v4297 = vld [vmem:[%s2 + $0x60] sm:$0xff]
        %v4298 = vld [vmem:[%s2 + $0x68] sm:$0xff]
        %v4299 = vld [vmem:[%s2 + $0x70] sm:$0xff]
        %v4300 = vld [vmem:[%s2 + $0x78] sm:$0xff]
        %v4301 = vld [vmem:[%s2 + $0x80] sm:$0xff]
        %v4302 = vld [vmem:[%s2 + $0x88] sm:$0xff]
        %v4303 = vld [vmem:[%s2 + $0x90] sm:$0xff]
        %v4304 = vld [vmem:[%s2 + $0x98] sm:$0xff]
        %v4305 = vld [vmem:[%s2 + $0xa0] sm:$0xff]
        %v4306 = vld [vmem:[%s2 + $0xa8] sm:$0xff]
        %v4307 = vld [vmem:[%s2 + $0xb0] sm:$0xff]
        %v4308 = vld [vmem:[%s2 + $0xb8] sm:$0xff]
        %v4309 = vld [vmem:[%s2 + $0xc0] sm:$0xff]
        %v4310 = vld [vmem:[%s2 + $0xc8] sm:$0xff]
        %v4311 = vld [vmem:[%s2 + $0xd0] sm:$0xff]
        %v4312 = vld [vmem:[%s2 + $0xd8] sm:$0xff]
        %v4313 = vld [vmem:[%s2 + $0xe0] sm:$0xff]
        %v4314 = vld [vmem:[%s2 + $0xe8] sm:$0xff]
        %v4315 = vld [vmem:[%s2 + $0xf0] sm:$0xff]
        %v4316 = vld [vmem:[%s2 + $0xf8] sm:$0xff]
        %v4317 = vld [vmem:[%s2 + $0x100] sm:$0xff]
        %v4318 = vld [vmem:[%s2 + $0x108] sm:$0xff]
        %v4319 = vld [vmem:[%s2 + $0x110] sm:$0xff]
        %v4320 = vld [vmem:[%s2 + $0x118] sm:$0xff]
        %v4321 = vld [vmem:[%s2 + $0x120] sm:$0xff]
        %v4322 = vld [vmem:[%s2 + $0x128] sm:$0xff]
        %v4323 = vld [vmem:[%s2 + $0x130] sm:$0xff]
        %v4324 = vld [vmem:[%s2 + $0x138] sm:$0xff]
        %v4325 = vld [vmem:[%s2 + $0x140] sm:$0xff]
        %v4326 = vld [vmem:[%s2 + $0x148] sm:$0xff]
        %v4327 = vld [vmem:[%s2 + $0x150] sm:$0xff]
        %v4328 = vld [vmem:[%s2 + $0x158] sm:$0xff]
        %v4329 = vld [vmem:[%s2 + $0x160] sm:$0xff]
        %v4330 = vld [vmem:[%s2 + $0x168] sm:$0xff]
        %v4331 = vld [vmem:[%s2 + $0x170] sm:$0xff]
        %v4332 = vld [vmem:[%s2 + $0x178] sm:$0xff]
        %v4333 = vld [vmem:[%s2 + $0x180] sm:$0xff]
        %v4334 = vld [vmem:[%s2 + $0x188] sm:$0xff]
        %v4335 = vld [vmem:[%s2 + $0x190] sm:$0xff]
        %v4336 = vld [vmem:[%s2 + $0x198] sm:$0xff]
        %v4337 = vld [vmem:[%s2 + $0x1a0] sm:$0xff]
        %v4338 = vld [vmem:[%s2 + $0x1a8] sm:$0xff]
        %v4339 = vld [vmem:[%s2 + $0x1b0] sm:$0xff]
        %v4340 = vld [vmem:[%s2 + $0x1b8] sm:$0xff]
        %v4341 = vld [vmem:[%s2 + $0x1c0] sm:$0xff]
        %v4342 = vld [vmem:[%s2 + $0x1c8] sm:$0xff]
        %v4343 = vld [vmem:[%s2 + $0x1d0] sm:$0xff]
        %v4344 = vld [vmem:[%s2 + $0x1d8] sm:$0xff]
        %v4345 = vld [vmem:[%s2 + $0x1e0] sm:$0xff]
        %v4346 = vld [vmem:[%s2 + $0x1e8] sm:$0xff]
        %v4347 = vld [vmem:[%s2 + $0x1f0] sm:$0xff]
        %v4348 = vld [vmem:[%s2 + $0x1f8] sm:$0xff]
        %v4349 = vld [vmem:[%s6] sm:$0xff]
        %v4350 = vld [vmem:[%s6 + $0x8] sm:$0xff]
        %v4351 = vld [vmem:[%s6 + $0x10] sm:$0xff]
        %v4352 = vld [vmem:[%s6 + $0x18] sm:$0xff]
        %v4353 = vld [vmem:[%s6 + $0x20] sm:$0xff]
        %v4354 = vld [vmem:[%s6 + $0x28] sm:$0xff]
        %v4355 = vld [vmem:[%s6 + $0x30] sm:$0xff]
        %v4356 = vld [vmem:[%s6 + $0x38] sm:$0xff]
        %v4357 = vld [vmem:[%s6 + $0x40] sm:$0xff]
        %v4358 = vld [vmem:[%s6 + $0x48] sm:$0xff]
        %v4359 = vld [vmem:[%s6 + $0x50] sm:$0xff]
        %v4360 = vld [vmem:[%s6 + $0x58] sm:$0xff]
        %v4361 = vld [vmem:[%s6 + $0x60] sm:$0xff]
        %v4362 = vld [vmem:[%s6 + $0x68] sm:$0xff]
        %v4363 = vld [vmem:[%s6 + $0x70] sm:$0xff]
        %v4364 = vld [vmem:[%s6 + $0x78] sm:$0xff]
        %v4365 = vld [vmem:[%s6 + $0x80] sm:$0xff]
        %v4366 = vld [vmem:[%s6 + $0x88] sm:$0xff]
        %v4367 = vld [vmem:[%s6 + $0x90] sm:$0xff]
        %v4368 = vld [vmem:[%s6 + $0x98] sm:$0xff]
        %v4369 = vld [vmem:[%s6 + $0xa0] sm:$0xff]
        %v4370 = vld [vmem:[%s6 + $0xa8] sm:$0xff]
        %v4371 = vld [vmem:[%s6 + $0xb0] sm:$0xff]
        %v4372 = vld [vmem:[%s6 + $0xb8] sm:$0xff]
        %v4373 = vld [vmem:[%s6 + $0xc0] sm:$0xff]
        %v4374 = vld [vmem:[%s6 + $0xc8] sm:$0xff]
        %v4375 = vld [vmem:[%s6 + $0xd0] sm:$0xff]
        %v4376 = vld [vmem:[%s6 + $0xd8] sm:$0xff]
        %v4377 = vld [vmem:[%s6 + $0xe0] sm:$0xff]
        %v4378 = vld [vmem:[%s6 + $0xe8] sm:$0xff]
        %v4379 = vld [vmem:[%s6 + $0xf0] sm:$0xff]
        %v4380 = vld [vmem:[%s6 + $0xf8] sm:$0xff]
        %4382 = vset.pattern.permute.xlu0 0
        %4383 = vperm.xlu0 %4382, %v4349
        %v4384 = vpop.permute.xlu0 %4383
        %4387 = vset.pattern.permute.xlu0 0
        %4388 = vperm.xlu0 %4387, %v4350
        %v4389 = vpop.permute.xlu0 %4388
        %4392 = vset.pattern.permute.xlu0 0
        %4393 = vperm.xlu0 %4392, %v4351
        %v4394 = vpop.permute.xlu0 %4393
        %4397 = vset.pattern.permute.xlu0 0
        %4398 = vperm.xlu0 %4397, %v4352
        %v4399 = vpop.permute.xlu0 %4398
        %4402 = vset.pattern.permute.xlu0 0
        %4403 = vperm.xlu0 %4402, %v4353
        %v4404 = vpop.permute.xlu0 %4403
        %4407 = vset.pattern.permute.xlu0 0
        %4408 = vperm.xlu0 %4407, %v4354
        %v4409 = vpop.permute.xlu0 %4408
        %4412 = vset.pattern.permute.xlu0 0
        %4413 = vperm.xlu0 %4412, %v4355
        %v4414 = vpop.permute.xlu0 %4413
        %4417 = vset.pattern.permute.xlu0 0
        %4418 = vperm.xlu0 %4417, %v4356
        %v4419 = vpop.permute.xlu0 %4418
        %4422 = vset.pattern.permute.xlu0 0
        %4423 = vperm.xlu0 %4422, %v4357
        %v4424 = vpop.permute.xlu0 %4423
        %4427 = vset.pattern.permute.xlu0 0
        %4428 = vperm.xlu0 %4427, %v4358
        %v4429 = vpop.permute.xlu0 %4428
        %4432 = vset.pattern.permute.xlu0 0
        %4433 = vperm.xlu0 %4432, %v4359
        %v4434 = vpop.permute.xlu0 %4433
        %4437 = vset.pattern.permute.xlu0 0
        %4438 = vperm.xlu0 %4437, %v4360
        %v4439 = vpop.permute.xlu0 %4438
        %4442 = vset.pattern.permute.xlu0 0
        %4443 = vperm.xlu0 %4442, %v4361
        %v4444 = vpop.permute.xlu0 %4443
        %4447 = vset.pattern.permute.xlu0 0
        %4448 = vperm.xlu0 %4447, %v4362
        %v4449 = vpop.permute.xlu0 %4448
        %4452 = vset.pattern.permute.xlu0 0
        %4453 = vperm.xlu0 %4452, %v4363
        %v4454 = vpop.permute.xlu0 %4453
        %4457 = vset.pattern.permute.xlu0 0
        %4458 = vperm.xlu0 %4457, %v4364
        %v4459 = vpop.permute.xlu0 %4458
        %4462 = vset.pattern.permute.xlu0 0
        %4463 = vperm.xlu0 %4462, %v4365
        %v4464 = vpop.permute.xlu0 %4463
        %4467 = vset.pattern.permute.xlu0 0
        %4468 = vperm.xlu0 %4467, %v4366
        %v4469 = vpop.permute.xlu0 %4468
        %4472 = vset.pattern.permute.xlu0 0
        %4473 = vperm.xlu0 %4472, %v4367
        %v4474 = vpop.permute.xlu0 %4473
        %4477 = vset.pattern.permute.xlu0 0
        %4478 = vperm.xlu0 %4477, %v4368
        %v4479 = vpop.permute.xlu0 %4478
        %4482 = vset.pattern.permute.xlu0 0
        %4483 = vperm.xlu0 %4482, %v4369
        %v4484 = vpop.permute.xlu0 %4483
        %4487 = vset.pattern.permute.xlu0 0
        %4488 = vperm.xlu0 %4487, %v4370
        %v4489 = vpop.permute.xlu0 %4488
        %4492 = vset.pattern.permute.xlu0 0
        %4493 = vperm.xlu0 %4492, %v4371
        %v4494 = vpop.permute.xlu0 %4493
        %4497 = vset.pattern.permute.xlu0 0
        %4498 = vperm.xlu0 %4497, %v4372
        %v4499 = vpop.permute.xlu0 %4498
        %4502 = vset.pattern.permute.xlu0 0
        %4503 = vperm.xlu0 %4502, %v4373
        %v4504 = vpop.permute.xlu0 %4503
        %4507 = vset.pattern.permute.xlu0 0
        %4508 = vperm.xlu0 %4507, %v4374
        %v4509 = vpop.permute.xlu0 %4508
        %4512 = vset.pattern.permute.xlu0 0
        %4513 = vperm.xlu0 %4512, %v4375
        %v4514 = vpop.permute.xlu0 %4513
        %4517 = vset.pattern.permute.xlu0 0
        %4518 = vperm.xlu0 %4517, %v4376
        %v4519 = vpop.permute.xlu0 %4518
        %4522 = vset.pattern.permute.xlu0 0
        %4523 = vperm.xlu0 %4522, %v4377
        %v4524 = vpop.permute.xlu0 %4523
        %4527 = vset.pattern.permute.xlu0 0
        %4528 = vperm.xlu0 %4527, %v4378
        %v4529 = vpop.permute.xlu0 %4528
        %4532 = vset.pattern.permute.xlu0 0
        %4533 = vperm.xlu0 %4532, %v4379
        %v4534 = vpop.permute.xlu0 %4533
        %4537 = vset.pattern.permute.xlu0 0
        %4538 = vperm.xlu0 %4537, %v4380
        %v4539 = vpop.permute.xlu0 %4538
        %v4605 = vunpack.c.l.b16 %v4285
        %v4606 = vunpack.c.h.b16 %v4285
        %v4607 = vunpack.c.l.b16 %v4286
        %v4608 = vunpack.c.h.b16 %v4286
        %v4609 = vunpack.c.l.b16 %v4287
        %v4610 = vunpack.c.h.b16 %v4287
        %v4611 = vunpack.c.l.b16 %v4288
        %v4612 = vunpack.c.h.b16 %v4288
        %v4613 = vunpack.c.l.b16 %v4289
        %v4614 = vunpack.c.h.b16 %v4289
        %v4615 = vunpack.c.l.b16 %v4290
        %v4616 = vunpack.c.h.b16 %v4290
        %v4617 = vunpack.c.l.b16 %v4291
        %v4618 = vunpack.c.h.b16 %v4291
        %v4619 = vunpack.c.l.b16 %v4292
        %v4620 = vunpack.c.h.b16 %v4292
        %v4621 = vunpack.c.l.b16 %v4293
        %v4622 = vunpack.c.h.b16 %v4293
        %v4623 = vunpack.c.l.b16 %v4294
        %v4624 = vunpack.c.h.b16 %v4294
        %v4625 = vunpack.c.l.b16 %v4295
        %v4626 = vunpack.c.h.b16 %v4295
        %v4627 = vunpack.c.l.b16 %v4296
        %v4628 = vunpack.c.h.b16 %v4296
        %v4629 = vunpack.c.l.b16 %v4297
        %v4630 = vunpack.c.h.b16 %v4297
        %v4631 = vunpack.c.l.b16 %v4298
        %v4632 = vunpack.c.h.b16 %v4298
        %v4633 = vunpack.c.l.b16 %v4299
        %v4634 = vunpack.c.h.b16 %v4299
        %v4635 = vunpack.c.l.b16 %v4300
        %v4636 = vunpack.c.h.b16 %v4300
        %v4637 = vunpack.c.l.b16 %v4301
        %v4638 = vunpack.c.h.b16 %v4301
        %v4639 = vunpack.c.l.b16 %v4302
        %v4640 = vunpack.c.h.b16 %v4302
        %v4641 = vunpack.c.l.b16 %v4303
        %v4642 = vunpack.c.h.b16 %v4303
        %v4643 = vunpack.c.l.b16 %v4304
        %v4644 = vunpack.c.h.b16 %v4304
        %v4645 = vunpack.c.l.b16 %v4305
        %v4646 = vunpack.c.h.b16 %v4305
        %v4647 = vunpack.c.l.b16 %v4306
        %v4648 = vunpack.c.h.b16 %v4306
        %v4649 = vunpack.c.l.b16 %v4307
        %v4650 = vunpack.c.h.b16 %v4307
        %v4651 = vunpack.c.l.b16 %v4308
        %v4652 = vunpack.c.h.b16 %v4308
        %v4653 = vunpack.c.l.b16 %v4309
        %v4654 = vunpack.c.h.b16 %v4309
        %v4655 = vunpack.c.l.b16 %v4310
        %v4656 = vunpack.c.h.b16 %v4310
        %v4657 = vunpack.c.l.b16 %v4311
        %v4658 = vunpack.c.h.b16 %v4311
        %v4659 = vunpack.c.l.b16 %v4312
        %v4660 = vunpack.c.h.b16 %v4312
        %v4661 = vunpack.c.l.b16 %v4313
        %v4662 = vunpack.c.h.b16 %v4313
        %v4663 = vunpack.c.l.b16 %v4314
        %v4664 = vunpack.c.h.b16 %v4314
        %v4665 = vunpack.c.l.b16 %v4315
        %v4666 = vunpack.c.h.b16 %v4315
        %v4667 = vunpack.c.l.b16 %v4316
        %v4668 = vunpack.c.h.b16 %v4316
        %v4669 = vunpack.c.l.b16 %v4317
        %v4670 = vunpack.c.h.b16 %v4317
        %v4671 = vunpack.c.l.b16 %v4318
        %v4672 = vunpack.c.h.b16 %v4318
        %v4673 = vunpack.c.l.b16 %v4319
        %v4674 = vunpack.c.h.b16 %v4319
        %v4675 = vunpack.c.l.b16 %v4320
        %v4676 = vunpack.c.h.b16 %v4320
        %v4677 = vunpack.c.l.b16 %v4321
        %v4678 = vunpack.c.h.b16 %v4321
        %v4679 = vunpack.c.l.b16 %v4322
        %v4680 = vunpack.c.h.b16 %v4322
        %v4681 = vunpack.c.l.b16 %v4323
        %v4682 = vunpack.c.h.b16 %v4323
        %v4683 = vunpack.c.l.b16 %v4324
        %v4684 = vunpack.c.h.b16 %v4324
        %v4685 = vunpack.c.l.b16 %v4325
        %v4686 = vunpack.c.h.b16 %v4325
        %v4687 = vunpack.c.l.b16 %v4326
        %v4688 = vunpack.c.h.b16 %v4326
        %v4689 = vunpack.c.l.b16 %v4327
        %v4690 = vunpack.c.h.b16 %v4327
        %v4691 = vunpack.c.l.b16 %v4328
        %v4692 = vunpack.c.h.b16 %v4328
        %v4693 = vunpack.c.l.b16 %v4329
        %v4694 = vunpack.c.h.b16 %v4329
        %v4695 = vunpack.c.l.b16 %v4330
        %v4696 = vunpack.c.h.b16 %v4330
        %v4697 = vunpack.c.l.b16 %v4331
        %v4698 = vunpack.c.h.b16 %v4331
        %v4699 = vunpack.c.l.b16 %v4332
        %v4700 = vunpack.c.h.b16 %v4332
        %v4701 = vunpack.c.l.b16 %v4333
        %v4702 = vunpack.c.h.b16 %v4333
        %v4703 = vunpack.c.l.b16 %v4334
        %v4704 = vunpack.c.h.b16 %v4334
        %v4705 = vunpack.c.l.b16 %v4335
        %v4706 = vunpack.c.h.b16 %v4335
        %v4707 = vunpack.c.l.b16 %v4336
        %v4708 = vunpack.c.h.b16 %v4336
        %v4709 = vunpack.c.l.b16 %v4337
        %v4710 = vunpack.c.h.b16 %v4337
        %v4711 = vunpack.c.l.b16 %v4338
        %v4712 = vunpack.c.h.b16 %v4338
        %v4713 = vunpack.c.l.b16 %v4339
        %v4714 = vunpack.c.h.b16 %v4339
        %v4715 = vunpack.c.l.b16 %v4340
        %v4716 = vunpack.c.h.b16 %v4340
        %v4717 = vunpack.c.l.b16 %v4341
        %v4718 = vunpack.c.h.b16 %v4341
        %v4719 = vunpack.c.l.b16 %v4342
        %v4720 = vunpack.c.h.b16 %v4342
        %v4721 = vunpack.c.l.b16 %v4343
        %v4722 = vunpack.c.h.b16 %v4343
        %v4723 = vunpack.c.l.b16 %v4344
        %v4724 = vunpack.c.h.b16 %v4344
        %v4725 = vunpack.c.l.b16 %v4345
        %v4726 = vunpack.c.h.b16 %v4345
        %v4727 = vunpack.c.l.b16 %v4346
        %v4728 = vunpack.c.h.b16 %v4346
        %v4729 = vunpack.c.l.b16 %v4347
        %v4730 = vunpack.c.h.b16 %v4347
        %v4731 = vunpack.c.l.b16 %v4348
        %v4732 = vunpack.c.h.b16 %v4348
        %v4733 = vpack.c.b16 %v4609, %v4605
        %v4734 = vpack.c.b16 %v4610, %v4606
        %v4735 = vpack.c.b16 %v4611, %v4607
        %v4736 = vpack.c.b16 %v4612, %v4608
        %v4737 = vpack.c.b16 %v4617, %v4613
        %v4738 = vpack.c.b16 %v4618, %v4614
        %v4739 = vpack.c.b16 %v4619, %v4615
        %v4740 = vpack.c.b16 %v4620, %v4616
        %v4741 = vpack.c.b16 %v4625, %v4621
        %v4742 = vpack.c.b16 %v4626, %v4622
        %v4743 = vpack.c.b16 %v4627, %v4623
        %v4744 = vpack.c.b16 %v4628, %v4624
        %v4745 = vpack.c.b16 %v4633, %v4629
        %v4746 = vpack.c.b16 %v4634, %v4630
        %v4747 = vpack.c.b16 %v4635, %v4631
        %v4748 = vpack.c.b16 %v4636, %v4632
        %v4749 = vpack.c.b16 %v4641, %v4637
        %v4750 = vpack.c.b16 %v4642, %v4638
        %v4751 = vpack.c.b16 %v4643, %v4639
        %v4752 = vpack.c.b16 %v4644, %v4640
        %v4753 = vpack.c.b16 %v4649, %v4645
        %v4754 = vpack.c.b16 %v4650, %v4646
        %v4755 = vpack.c.b16 %v4651, %v4647
        %v4756 = vpack.c.b16 %v4652, %v4648
        %v4757 = vpack.c.b16 %v4657, %v4653
        %v4758 = vpack.c.b16 %v4658, %v4654
        %v4759 = vpack.c.b16 %v4659, %v4655
        %v4760 = vpack.c.b16 %v4660, %v4656
        %v4761 = vpack.c.b16 %v4665, %v4661
        %v4762 = vpack.c.b16 %v4666, %v4662
        %v4763 = vpack.c.b16 %v4667, %v4663
        %v4764 = vpack.c.b16 %v4668, %v4664
        %v4765 = vpack.c.b16 %v4673, %v4669
        %v4766 = vpack.c.b16 %v4674, %v4670
        %v4767 = vpack.c.b16 %v4675, %v4671
        %v4768 = vpack.c.b16 %v4676, %v4672
        %v4769 = vpack.c.b16 %v4681, %v4677
        %v4770 = vpack.c.b16 %v4682, %v4678
        %v4771 = vpack.c.b16 %v4683, %v4679
        %v4772 = vpack.c.b16 %v4684, %v4680
        %v4773 = vpack.c.b16 %v4689, %v4685
        %v4774 = vpack.c.b16 %v4690, %v4686
        %v4775 = vpack.c.b16 %v4691, %v4687
        %v4776 = vpack.c.b16 %v4692, %v4688
        %v4777 = vpack.c.b16 %v4697, %v4693
        %v4778 = vpack.c.b16 %v4698, %v4694
        %v4779 = vpack.c.b16 %v4699, %v4695
        %v4780 = vpack.c.b16 %v4700, %v4696
        %v4781 = vpack.c.b16 %v4705, %v4701
        %v4782 = vpack.c.b16 %v4706, %v4702
        %v4783 = vpack.c.b16 %v4707, %v4703
        %v4784 = vpack.c.b16 %v4708, %v4704
        %v4785 = vpack.c.b16 %v4713, %v4709
        %v4786 = vpack.c.b16 %v4714, %v4710
        %v4787 = vpack.c.b16 %v4715, %v4711
        %v4788 = vpack.c.b16 %v4716, %v4712
        %v4789 = vpack.c.b16 %v4721, %v4717
        %v4790 = vpack.c.b16 %v4722, %v4718
        %v4791 = vpack.c.b16 %v4723, %v4719
        %v4792 = vpack.c.b16 %v4724, %v4720
        %v4793 = vpack.c.b16 %v4729, %v4725
        %v4794 = vpack.c.b16 %v4730, %v4726
        %v4795 = vpack.c.b16 %v4731, %v4727
        %v4796 = vpack.c.b16 %v4732, %v4728
        %4861 = vmatprep.subr.bf16.mxu0 0
        %4862 = vmatpush1.bf16.msra.mxu0 %v4253
        %4863 = vmatprep.subr.bf16.mxu0 0
        %4864 = vmatpush1.bf16.msra.mxu0 %v4254
        %4865 = vmatprep.subr.bf16.mxu0 0
        %4866 = vmatpush1.bf16.msra.mxu0 %v4255
        %4867 = vmatprep.subr.bf16.mxu0 0
        %4868 = vmatpush1.bf16.msra.mxu0 %v4256
        %4869 = vmatprep.subr.bf16.mxu0 0
        %4870 = vmatpush1.bf16.msra.mxu0 %v4257
        %4871 = vmatprep.subr.bf16.mxu0 0
        %4872 = vmatpush1.bf16.msra.mxu0 %v4258
        %4873 = vmatprep.subr.bf16.mxu0 0
        %4874 = vmatpush1.bf16.msra.mxu0 %v4259
        %4875 = vmatprep.subr.bf16.mxu0 0
        %4876 = vmatpush1.bf16.msra.mxu0 %v4260
        %4877 = vmatprep.subr.bf16.mxu0 0
        %4878 = vmatpush1.bf16.msra.mxu0 %v4261
        %4879 = vmatprep.subr.bf16.mxu0 0
        %4880 = vmatpush1.bf16.msra.mxu0 %v4262
        %4881 = vmatprep.subr.bf16.mxu0 0
        %4882 = vmatpush1.bf16.msra.mxu0 %v4263
        %4883 = vmatprep.subr.bf16.mxu0 0
        %4884 = vmatpush1.bf16.msra.mxu0 %v4264
        %4885 = vmatprep.subr.bf16.mxu0 0
        %4886 = vmatpush1.bf16.msra.mxu0 %v4265
        %4887 = vmatprep.subr.bf16.mxu0 0
        %4888 = vmatpush1.bf16.msra.mxu0 %v4266
        %4889 = vmatprep.subr.bf16.mxu0 0
        %4890 = vmatpush1.bf16.msra.mxu0 %v4267
        %4891 = vmatprep.subr.bf16.mxu0 0
        %4892 = vmatpush1.bf16.msra.mxu0 %v4268
        %4893 = vmatprep.mubr.bf16.mxu0 %v4734
        %4894 = vmatmul.mubr.bf16.gmra.mrb[0].mxu0 %v4733
        %v4895 = vpop.f32.mrb[0].mxu0
        %v4896 = vadd.f32 %v4384, %v4895
        %v4897 = vpop.f32.mrb[0].mxu0
        %v4898 = vpop.f32.mrb[0].mxu0
        %v4899 = vadd.f32 %v4389, %v4898
        %v4900 = vpop.f32.mrb[0].mxu0
        %4901 = vmatprep.mubr.bf16.mxu0 %v4738
        %4902 = vmatmul.mubr.bf16.gmra.mrb[0].mxu0 %v4737
        %v4903 = vpop.f32.mrb[0].mxu0
        %v4904 = vadd.f32 %v4394, %v4903
        %v4905 = vpop.f32.mrb[0].mxu0
        %v4906 = vpop.f32.mrb[0].mxu0
        %v4907 = vadd.f32 %v4399, %v4906
        %v4908 = vpop.f32.mrb[0].mxu0
        %4909 = vmatprep.mubr.bf16.mxu0 %v4742
        %4910 = vmatmul.mubr.bf16.gmra.mrb[0].mxu0 %v4741
        %v4911 = vpop.f32.mrb[0].mxu0
        %v4912 = vadd.f32 %v4404, %v4911
        %v4913 = vpop.f32.mrb[0].mxu0
        %v4914 = vpop.f32.mrb[0].mxu0
        %v4915 = vadd.f32 %v4409, %v4914
        %v4916 = vpop.f32.mrb[0].mxu0
        %4917 = vmatprep.mubr.bf16.mxu0 %v4746
        %4918 = vmatmul.mubr.bf16.gmra.mrb[0].mxu0 %v4745
        %v4919 = vpop.f32.mrb[0].mxu0
        %v4920 = vadd.f32 %v4414, %v4919
        %v4921 = vpop.f32.mrb[0].mxu0
        %v4922 = vpop.f32.mrb[0].mxu0
        %v4923 = vadd.f32 %v4419, %v4922
        %v4924 = vpop.f32.mrb[0].mxu0
        %4925 = vmatprep.mubr.bf16.mxu0 %v4750
        %4926 = vmatmul.mubr.bf16.gmra.mrb[0].mxu0 %v4749
        %v4927 = vpop.f32.mrb[0].mxu0
        %v4928 = vadd.f32 %v4424, %v4927
        %v4929 = vpop.f32.mrb[0].mxu0
        %v4930 = vpop.f32.mrb[0].mxu0
        %v4931 = vadd.f32 %v4429, %v4930
        %v4932 = vpop.f32.mrb[0].mxu0
        %4933 = vmatprep.mubr.bf16.mxu0 %v4754
        %4934 = vmatmul.mubr.bf16.gmra.mrb[0].mxu0 %v4753
        %v4935 = vpop.f32.mrb[0].mxu0
        %v4936 = vadd.f32 %v4434, %v4935
        %v4937 = vpop.f32.mrb[0].mxu0
        %v4938 = vpop.f32.mrb[0].mxu0
        %v4939 = vadd.f32 %v4439, %v4938
        %v4940 = vpop.f32.mrb[0].mxu0
        %4941 = vmatprep.mubr.bf16.mxu0 %v4758
        %4942 = vmatmul.mubr.bf16.gmra.mrb[0].mxu0 %v4757
        %v4943 = vpop.f32.mrb[0].mxu0
        %v4944 = vadd.f32 %v4444, %v4943
        %v4945 = vpop.f32.mrb[0].mxu0
        %v4946 = vpop.f32.mrb[0].mxu0
        %v4947 = vadd.f32 %v4449, %v4946
        %v4948 = vpop.f32.mrb[0].mxu0
        %4949 = vmatprep.mubr.bf16.mxu0 %v4762
        %4950 = vmatmul.mubr.bf16.gmra.mrb[0].mxu0 %v4761
        %v4951 = vpop.f32.mrb[0].mxu0
        %v4952 = vadd.f32 %v4454, %v4951
        %v4953 = vpop.f32.mrb[0].mxu0
        %v4954 = vpop.f32.mrb[0].mxu0
        %v4955 = vadd.f32 %v4459, %v4954
        %v4956 = vpop.f32.mrb[0].mxu0
        %4957 = vmatprep.mubr.bf16.mxu0 %v4766
        %4958 = vmatmul.mubr.bf16.gmra.mrb[0].mxu0 %v4765
        %v4959 = vpop.f32.mrb[0].mxu0
        %v4960 = vadd.f32 %v4464, %v4959
        %v4961 = vpop.f32.mrb[0].mxu0
        %v4962 = vpop.f32.mrb[0].mxu0
        %v4963 = vadd.f32 %v4469, %v4962
        %v4964 = vpop.f32.mrb[0].mxu0
        %4965 = vmatprep.mubr.bf16.mxu0 %v4770
        %4966 = vmatmul.mubr.bf16.gmra.mrb[0].mxu0 %v4769
        %v4967 = vpop.f32.mrb[0].mxu0
        %v4968 = vadd.f32 %v4474, %v4967
        %v4969 = vpop.f32.mrb[0].mxu0
        %v4970 = vpop.f32.mrb[0].mxu0
        %v4971 = vadd.f32 %v4479, %v4970
        %v4972 = vpop.f32.mrb[0].mxu0
        %4973 = vmatprep.mubr.bf16.mxu0 %v4774
        %4974 = vmatmul.mubr.bf16.gmra.mrb[0].mxu0 %v4773
        %v4975 = vpop.f32.mrb[0].mxu0
        %v4976 = vadd.f32 %v4484, %v4975
        %v4977 = vpop.f32.mrb[0].mxu0
        %v4978 = vpop.f32.mrb[0].mxu0
        %v4979 = vadd.f32 %v4489, %v4978
        %v4980 = vpop.f32.mrb[0].mxu0
        %4981 = vmatprep.mubr.bf16.mxu0 %v4778
        %4982 = vmatmul.mubr.bf16.gmra.mrb[0].mxu0 %v4777
        %v4983 = vpop.f32.mrb[0].mxu0
        %v4984 = vadd.f32 %v4494, %v4983
        %v4985 = vpop.f32.mrb[0].mxu0
        %v4986 = vpop.f32.mrb[0].mxu0
        %v4987 = vadd.f32 %v4499, %v4986
        %v4988 = vpop.f32.mrb[0].mxu0
        %4989 = vmatprep.mubr.bf16.mxu0 %v4782
        %4990 = vmatmul.mubr.bf16.gmra.mrb[0].mxu0 %v4781
        %v4991 = vpop.f32.mrb[0].mxu0
        %v4992 = vadd.f32 %v4504, %v4991
        %v4993 = vpop.f32.mrb[0].mxu0
        %v4994 = vpop.f32.mrb[0].mxu0
        %v4995 = vadd.f32 %v4509, %v4994
        %v4996 = vpop.f32.mrb[0].mxu0
        %4997 = vmatprep.mubr.bf16.mxu0 %v4786
        %4998 = vmatmul.mubr.bf16.gmra.mrb[0].mxu0 %v4785
        %v4999 = vpop.f32.mrb[0].mxu0
        %v5000 = vadd.f32 %v4514, %v4999
        %v5001 = vpop.f32.mrb[0].mxu0
        %v5002 = vpop.f32.mrb[0].mxu0
        %v5003 = vadd.f32 %v4519, %v5002
        %v5004 = vpop.f32.mrb[0].mxu0
        %5005 = vmatprep.mubr.bf16.mxu0 %v4790
        %5006 = vmatmul.mubr.bf16.gmra.mrb[0].mxu0 %v4789
        %v5007 = vpop.f32.mrb[0].mxu0
        %v5008 = vadd.f32 %v4524, %v5007
        %v5009 = vpop.f32.mrb[0].mxu0
        %v5010 = vpop.f32.mrb[0].mxu0
        %v5011 = vadd.f32 %v4529, %v5010
        %v5012 = vpop.f32.mrb[0].mxu0
        %5013 = vmatprep.mubr.bf16.mxu0 %v4794
        %5014 = vmatmul.mubr.bf16.gmra.mrb[0].mxu0 %v4793
        %v5015 = vpop.f32.mrb[0].mxu0
        %v5016 = vadd.f32 %v4534, %v5015
        %v5017 = vpop.f32.mrb[0].mxu0
        %v5018 = vpop.f32.mrb[0].mxu0
        %v5019 = vadd.f32 %v4539, %v5018
        %v5020 = vpop.f32.mrb[0].mxu0
        %5021 = vdwg.mxu0
        %5022 = vmatprep.subr.bf16.mxu0 0
        %5023 = vmatpush1.bf16.msra.mxu0 %v4269
        %5024 = vmatprep.subr.bf16.mxu0 0
        %5025 = vmatpush1.bf16.msra.mxu0 %v4270
        %5026 = vmatprep.subr.bf16.mxu0 0
        %5027 = vmatpush1.bf16.msra.mxu0 %v4271
        %5028 = vmatprep.subr.bf16.mxu0 0
        %5029 = vmatpush1.bf16.msra.mxu0 %v4272
        %5030 = vmatprep.subr.bf16.mxu0 0
        %5031 = vmatpush1.bf16.msra.mxu0 %v4273
        %5032 = vmatprep.subr.bf16.mxu0 0
        %5033 = vmatpush1.bf16.msra.mxu0 %v4274
        %5034 = vmatprep.subr.bf16.mxu0 0
        %5035 = vmatpush1.bf16.msra.mxu0 %v4275
        %5036 = vmatprep.subr.bf16.mxu0 0
        %5037 = vmatpush1.bf16.msra.mxu0 %v4276
        %5038 = vmatprep.subr.bf16.mxu0 0
        %5039 = vmatpush1.bf16.msra.mxu0 %v4277
        %5040 = vmatprep.subr.bf16.mxu0 0
        %5041 = vmatpush1.bf16.msra.mxu0 %v4278
        %5042 = vmatprep.subr.bf16.mxu0 0
        %5043 = vmatpush1.bf16.msra.mxu0 %v4279
        %5044 = vmatprep.subr.bf16.mxu0 0
        %5045 = vmatpush1.bf16.msra.mxu0 %v4280
        %5046 = vmatprep.subr.bf16.mxu0 0
        %5047 = vmatpush1.bf16.msra.mxu0 %v4281
        %5048 = vmatprep.subr.bf16.mxu0 0
        %5049 = vmatpush1.bf16.msra.mxu0 %v4282
        %5050 = vmatprep.subr.bf16.mxu0 0
        %5051 = vmatpush1.bf16.msra.mxu0 %v4283
        %5052 = vmatprep.subr.bf16.mxu0 0
        %5053 = vmatpush1.bf16.msra.mxu0 %v4284
        %5054 = vmatprep.mubr.bf16.mxu0 %v4736
        %5055 = vmatmul.mubr.bf16.gmra.mrb[0].mxu0 %v4735
        %v5056 = vpop.f32.mrb[0].mxu0
        %v5057 = vadd.f32 %v4896, %v5056
        %v5058 = vpop.f32.mrb[0].mxu0
        %v5059 = vpop.f32.mrb[0].mxu0
        %v5060 = vadd.f32 %v4899, %v5059
        %v5061 = vpop.f32.mrb[0].mxu0
        %5062 = vmatprep.mubr.bf16.mxu0 %v4740
        %5063 = vmatmul.mubr.bf16.gmra.mrb[0].mxu0 %v4739
        %v5064 = vpop.f32.mrb[0].mxu0
        %v5065 = vadd.f32 %v4904, %v5064
        %v5066 = vpop.f32.mrb[0].mxu0
        %v5067 = vpop.f32.mrb[0].mxu0
        %v5068 = vadd.f32 %v4907, %v5067
        %v5069 = vpop.f32.mrb[0].mxu0
        %5070 = vmatprep.mubr.bf16.mxu0 %v4744
        %5071 = vmatmul.mubr.bf16.gmra.mrb[0].mxu0 %v4743
        %v5072 = vpop.f32.mrb[0].mxu0
        %v5073 = vadd.f32 %v4912, %v5072
        %v5074 = vpop.f32.mrb[0].mxu0
        %v5075 = vpop.f32.mrb[0].mxu0
        %v5076 = vadd.f32 %v4915, %v5075
        %v5077 = vpop.f32.mrb[0].mxu0
        %5078 = vmatprep.mubr.bf16.mxu0 %v4748
        %5079 = vmatmul.mubr.bf16.gmra.mrb[0].mxu0 %v4747
        %v5080 = vpop.f32.mrb[0].mxu0
        %v5081 = vadd.f32 %v4920, %v5080
        %v5082 = vpop.f32.mrb[0].mxu0
        %v5083 = vpop.f32.mrb[0].mxu0
        %v5084 = vadd.f32 %v4923, %v5083
        %v5085 = vpop.f32.mrb[0].mxu0
        %5086 = vmatprep.mubr.bf16.mxu0 %v4752
        %5087 = vmatmul.mubr.bf16.gmra.mrb[0].mxu0 %v4751
        %v5088 = vpop.f32.mrb[0].mxu0
        %v5089 = vadd.f32 %v4928, %v5088
        %v5090 = vpop.f32.mrb[0].mxu0
        %v5091 = vpop.f32.mrb[0].mxu0
        %v5092 = vadd.f32 %v4931, %v5091
        %v5093 = vpop.f32.mrb[0].mxu0
        %5094 = vmatprep.mubr.bf16.mxu0 %v4756
        %5095 = vmatmul.mubr.bf16.gmra.mrb[0].mxu0 %v4755
        %v5096 = vpop.f32.mrb[0].mxu0
        %v5097 = vadd.f32 %v4936, %v5096
        %v5098 = vpop.f32.mrb[0].mxu0
        %v5099 = vpop.f32.mrb[0].mxu0
        %v5100 = vadd.f32 %v4939, %v5099
        %v5101 = vpop.f32.mrb[0].mxu0
        %5102 = vmatprep.mubr.bf16.mxu0 %v4760
        %5103 = vmatmul.mubr.bf16.gmra.mrb[0].mxu0 %v4759
        %v5104 = vpop.f32.mrb[0].mxu0
        %v5105 = vadd.f32 %v4944, %v5104
        %v5106 = vpop.f32.mrb[0].mxu0
        %v5107 = vpop.f32.mrb[0].mxu0
        %v5108 = vadd.f32 %v4947, %v5107
        %v5109 = vpop.f32.mrb[0].mxu0
        %5110 = vmatprep.mubr.bf16.mxu0 %v4764
        %5111 = vmatmul.mubr.bf16.gmra.mrb[0].mxu0 %v4763
        %v5112 = vpop.f32.mrb[0].mxu0
        %v5113 = vadd.f32 %v4952, %v5112
        %v5114 = vpop.f32.mrb[0].mxu0
        %v5115 = vpop.f32.mrb[0].mxu0
        %v5116 = vadd.f32 %v4955, %v5115
        %v5117 = vpop.f32.mrb[0].mxu0
        %5118 = vmatprep.mubr.bf16.mxu0 %v4768
        %5119 = vmatmul.mubr.bf16.gmra.mrb[0].mxu0 %v4767
        %v5120 = vpop.f32.mrb[0].mxu0
        %v5121 = vadd.f32 %v4960, %v5120
        %v5122 = vpop.f32.mrb[0].mxu0
        %v5123 = vpop.f32.mrb[0].mxu0
        %v5124 = vadd.f32 %v4963, %v5123
        %v5125 = vpop.f32.mrb[0].mxu0
        %5126 = vmatprep.mubr.bf16.mxu0 %v4772
        %5127 = vmatmul.mubr.bf16.gmra.mrb[0].mxu0 %v4771
        %v5128 = vpop.f32.mrb[0].mxu0
        %v5129 = vadd.f32 %v4968, %v5128
        %v5130 = vpop.f32.mrb[0].mxu0
        %v5131 = vpop.f32.mrb[0].mxu0
        %v5132 = vadd.f32 %v4971, %v5131
        %v5133 = vpop.f32.mrb[0].mxu0
        %5134 = vmatprep.mubr.bf16.mxu0 %v4776
        %5135 = vmatmul.mubr.bf16.gmra.mrb[0].mxu0 %v4775
        %v5136 = vpop.f32.mrb[0].mxu0
        %v5137 = vadd.f32 %v4976, %v5136
        %v5138 = vpop.f32.mrb[0].mxu0
        %v5139 = vpop.f32.mrb[0].mxu0
        %v5140 = vadd.f32 %v4979, %v5139
        %v5141 = vpop.f32.mrb[0].mxu0
        %5142 = vmatprep.mubr.bf16.mxu0 %v4780
        %5143 = vmatmul.mubr.bf16.gmra.mrb[0].mxu0 %v4779
        %v5144 = vpop.f32.mrb[0].mxu0
        %v5145 = vadd.f32 %v4984, %v5144
        %v5146 = vpop.f32.mrb[0].mxu0
        %v5147 = vpop.f32.mrb[0].mxu0
        %v5148 = vadd.f32 %v4987, %v5147
        %v5149 = vpop.f32.mrb[0].mxu0
        %5150 = vmatprep.mubr.bf16.mxu0 %v4784
        %5151 = vmatmul.mubr.bf16.gmra.mrb[0].mxu0 %v4783
        %v5152 = vpop.f32.mrb[0].mxu0
        %v5153 = vadd.f32 %v4992, %v5152
        %v5154 = vpop.f32.mrb[0].mxu0
        %v5155 = vpop.f32.mrb[0].mxu0
        %v5156 = vadd.f32 %v4995, %v5155
        %v5157 = vpop.f32.mrb[0].mxu0
        %5158 = vmatprep.mubr.bf16.mxu0 %v4788
        %5159 = vmatmul.mubr.bf16.gmra.mrb[0].mxu0 %v4787
        %v5160 = vpop.f32.mrb[0].mxu0
        %v5161 = vadd.f32 %v5000, %v5160
        %v5162 = vpop.f32.mrb[0].mxu0
        %v5163 = vpop.f32.mrb[0].mxu0
        %v5164 = vadd.f32 %v5003, %v5163
        %v5165 = vpop.f32.mrb[0].mxu0
        %5166 = vmatprep.mubr.bf16.mxu0 %v4792
        %5167 = vmatmul.mubr.bf16.gmra.mrb[0].mxu0 %v4791
        %v5168 = vpop.f32.mrb[0].mxu0
        %v5169 = vadd.f32 %v5008, %v5168
        %v5170 = vpop.f32.mrb[0].mxu0
        %v5171 = vpop.f32.mrb[0].mxu0
        %v5172 = vadd.f32 %v5011, %v5171
        %v5173 = vpop.f32.mrb[0].mxu0
        %5174 = vmatprep.mubr.bf16.mxu0 %v4796
        %5175 = vmatmul.mubr.bf16.gmra.mrb[0].mxu0 %v4795
        %v5176 = vpop.f32.mrb[0].mxu0
        %v5177 = vadd.f32 %v5016, %v5176
        %v5178 = vpop.f32.mrb[0].mxu0
        %v5179 = vpop.f32.mrb[0].mxu0
        %v5180 = vadd.f32 %v5019, %v5179
        %v5181 = vpop.f32.mrb[0].mxu0
        %5182 = vdwg.mxu0
        %v5183 = vmax.f32 %v5057, 0.0
        %v5184 = vmax.f32 %v5060, 0.0
        %v5185 = vmax.f32 %v5065, 0.0
        %v5186 = vmax.f32 %v5068, 0.0
        %v5187 = vmax.f32 %v5073, 0.0
        %v5188 = vmax.f32 %v5076, 0.0
        %v5189 = vmax.f32 %v5081, 0.0
        %v5190 = vmax.f32 %v5084, 0.0
        %v5191 = vmax.f32 %v5089, 0.0
        %v5192 = vmax.f32 %v5092, 0.0
        %v5193 = vmax.f32 %v5097, 0.0
        %v5194 = vmax.f32 %v5100, 0.0
        %v5195 = vmax.f32 %v5105, 0.0
        %v5196 = vmax.f32 %v5108, 0.0
        %v5197 = vmax.f32 %v5113, 0.0
        %v5198 = vmax.f32 %v5116, 0.0
        %v5199 = vmax.f32 %v5121, 0.0
        %v5200 = vmax.f32 %v5124, 0.0
        %v5201 = vmax.f32 %v5129, 0.0
        %v5202 = vmax.f32 %v5132, 0.0
        %v5203 = vmax.f32 %v5137, 0.0
        %v5204 = vmax.f32 %v5140, 0.0
        %v5205 = vmax.f32 %v5145, 0.0
        %v5206 = vmax.f32 %v5148, 0.0
        %v5207 = vmax.f32 %v5153, 0.0
        %v5208 = vmax.f32 %v5156, 0.0
        %v5209 = vmax.f32 %v5161, 0.0
        %v5210 = vmax.f32 %v5164, 0.0
        %v5211 = vmax.f32 %v5169, 0.0
        %v5212 = vmax.f32 %v5172, 0.0
        %v5213 = vmax.f32 %v5177, 0.0
        %v5214 = vmax.f32 %v5180, 0.0
        %v5215 = vpack.c.bf16 %v5184, %v5183
        %v5216 = vpack.c.bf16 %v5186, %v5185
        %v5217 = vpack.c.bf16 %v5188, %v5187
        %v5218 = vpack.c.bf16 %v5190, %v5189
        %v5219 = vpack.c.bf16 %v5192, %v5191
        %v5220 = vpack.c.bf16 %v5194, %v5193
        %v5221 = vpack.c.bf16 %v5196, %v5195
        %v5222 = vpack.c.bf16 %v5198, %v5197
        %v5223 = vpack.c.bf16 %v5200, %v5199
        %v5224 = vpack.c.bf16 %v5202, %v5201
        %v5225 = vpack.c.bf16 %v5204, %v5203
        %v5226 = vpack.c.bf16 %v5206, %v5205
        %v5227 = vpack.c.bf16 %v5208, %v5207
        %v5228 = vpack.c.bf16 %v5210, %v5209
        %v5229 = vpack.c.bf16 %v5212, %v5211
        %v5230 = vpack.c.bf16 %v5214, %v5213
        %v5231 = vld [vmem:[%s3] sm:$0xff]
        %v5232 = vld [vmem:[%s3 + $0x8] sm:$0xff]
        %v5233 = vld [vmem:[%s3 + $0x10] sm:$0xff]
        %v5234 = vld [vmem:[%s3 + $0x18] sm:$0xff]
        %v5235 = vld [vmem:[%s3 + $0x20] sm:$0xff]
        %v5236 = vld [vmem:[%s3 + $0x28] sm:$0xff]
        %v5237 = vld [vmem:[%s3 + $0x30] sm:$0xff]
        %v5238 = vld [vmem:[%s3 + $0x38] sm:$0xff]
        %v5239 = vld [vmem:[%s3 + $0x40] sm:$0xff]
        %v5240 = vld [vmem:[%s3 + $0x48] sm:$0xff]
        %v5241 = vld [vmem:[%s3 + $0x50] sm:$0xff]
        %v5242 = vld [vmem:[%s3 + $0x58] sm:$0xff]
        %v5243 = vld [vmem:[%s3 + $0x60] sm:$0xff]
        %v5244 = vld [vmem:[%s3 + $0x68] sm:$0xff]
        %v5245 = vld [vmem:[%s3 + $0x70] sm:$0xff]
        %v5246 = vld [vmem:[%s3 + $0x78] sm:$0xff]
        %v5247 = vld [vmem:[%s7] sm:$0xff]
        %v5248 = vld [vmem:[%s7 + $0x8] sm:$0xff]
        %v5249 = vld [vmem:[%s7 + $0x10] sm:$0xff]
        %v5250 = vld [vmem:[%s7 + $0x18] sm:$0xff]
        %v5251 = vld [vmem:[%s7 + $0x20] sm:$0xff]
        %v5252 = vld [vmem:[%s7 + $0x28] sm:$0xff]
        %v5253 = vld [vmem:[%s7 + $0x30] sm:$0xff]
        %v5254 = vld [vmem:[%s7 + $0x38] sm:$0xff]
        %v5255 = vld [vmem:[%s7 + $0x40] sm:$0xff]
        %v5256 = vld [vmem:[%s7 + $0x48] sm:$0xff]
        %v5257 = vld [vmem:[%s7 + $0x50] sm:$0xff]
        %v5258 = vld [vmem:[%s7 + $0x58] sm:$0xff]
        %v5259 = vld [vmem:[%s7 + $0x60] sm:$0xff]
        %v5260 = vld [vmem:[%s7 + $0x68] sm:$0xff]
        %v5261 = vld [vmem:[%s7 + $0x70] sm:$0xff]
        %v5262 = vld [vmem:[%s7 + $0x78] sm:$0xff]
        %5264 = vset.pattern.permute.xlu0 0
        %5265 = vperm.xlu0 %5264, %v5247
        %v5266 = vpop.permute.xlu0 %5265
        %5269 = vset.pattern.permute.xlu0 0
        %5270 = vperm.xlu0 %5269, %v5248
        %v5271 = vpop.permute.xlu0 %5270
        %5274 = vset.pattern.permute.xlu0 0
        %5275 = vperm.xlu0 %5274, %v5249
        %v5276 = vpop.permute.xlu0 %5275
        %5279 = vset.pattern.permute.xlu0 0
        %5280 = vperm.xlu0 %5279, %v5250
        %v5281 = vpop.permute.xlu0 %5280
        %5284 = vset.pattern.permute.xlu0 0
        %5285 = vperm.xlu0 %5284, %v5251
        %v5286 = vpop.permute.xlu0 %5285
        %5289 = vset.pattern.permute.xlu0 0
        %5290 = vperm.xlu0 %5289, %v5252
        %v5291 = vpop.permute.xlu0 %5290
        %5294 = vset.pattern.permute.xlu0 0
        %5295 = vperm.xlu0 %5294, %v5253
        %v5296 = vpop.permute.xlu0 %5295
        %5299 = vset.pattern.permute.xlu0 0
        %5300 = vperm.xlu0 %5299, %v5254
        %v5301 = vpop.permute.xlu0 %5300
        %5304 = vset.pattern.permute.xlu0 0
        %5305 = vperm.xlu0 %5304, %v5255
        %v5306 = vpop.permute.xlu0 %5305
        %5309 = vset.pattern.permute.xlu0 0
        %5310 = vperm.xlu0 %5309, %v5256
        %v5311 = vpop.permute.xlu0 %5310
        %5314 = vset.pattern.permute.xlu0 0
        %5315 = vperm.xlu0 %5314, %v5257
        %v5316 = vpop.permute.xlu0 %5315
        %5319 = vset.pattern.permute.xlu0 0
        %5320 = vperm.xlu0 %5319, %v5258
        %v5321 = vpop.permute.xlu0 %5320
        %5324 = vset.pattern.permute.xlu0 0
        %5325 = vperm.xlu0 %5324, %v5259
        %v5326 = vpop.permute.xlu0 %5325
        %5329 = vset.pattern.permute.xlu0 0
        %5330 = vperm.xlu0 %5329, %v5260
        %v5331 = vpop.permute.xlu0 %5330
        %5334 = vset.pattern.permute.xlu0 0
        %5335 = vperm.xlu0 %5334, %v5261
        %v5336 = vpop.permute.xlu0 %5335
        %5339 = vset.pattern.permute.xlu0 0
        %5340 = vperm.xlu0 %5339, %v5262
        %v5341 = vpop.permute.xlu0 %5340
        %v5359 = vunpack.c.l.b16 %v5231
        %v5360 = vunpack.c.h.b16 %v5231
        %v5361 = vunpack.c.l.b16 %v5232
        %v5362 = vunpack.c.h.b16 %v5232
        %v5363 = vunpack.c.l.b16 %v5233
        %v5364 = vunpack.c.h.b16 %v5233
        %v5365 = vunpack.c.l.b16 %v5234
        %v5366 = vunpack.c.h.b16 %v5234
        %v5367 = vunpack.c.l.b16 %v5235
        %v5368 = vunpack.c.h.b16 %v5235
        %v5369 = vunpack.c.l.b16 %v5236
        %v5370 = vunpack.c.h.b16 %v5236
        %v5371 = vunpack.c.l.b16 %v5237
        %v5372 = vunpack.c.h.b16 %v5237
        %v5373 = vunpack.c.l.b16 %v5238
        %v5374 = vunpack.c.h.b16 %v5238
        %v5375 = vunpack.c.l.b16 %v5239
        %v5376 = vunpack.c.h.b16 %v5239
        %v5377 = vunpack.c.l.b16 %v5240
        %v5378 = vunpack.c.h.b16 %v5240
        %v5379 = vunpack.c.l.b16 %v5241
        %v5380 = vunpack.c.h.b16 %v5241
        %v5381 = vunpack.c.l.b16 %v5242
        %v5382 = vunpack.c.h.b16 %v5242
        %v5383 = vunpack.c.l.b16 %v5243
        %v5384 = vunpack.c.h.b16 %v5243
        %v5385 = vunpack.c.l.b16 %v5244
        %v5386 = vunpack.c.h.b16 %v5244
        %v5387 = vunpack.c.l.b16 %v5245
        %v5388 = vunpack.c.h.b16 %v5245
        %v5389 = vunpack.c.l.b16 %v5246
        %v5390 = vunpack.c.h.b16 %v5246
        %v5391 = vpack.c.b16 %v5361, %v5359
        %v5392 = vpack.c.b16 %v5362, %v5360
        %v5393 = vpack.c.b16 %v5365, %v5363
        %v5394 = vpack.c.b16 %v5366, %v5364
        %v5395 = vpack.c.b16 %v5369, %v5367
        %v5396 = vpack.c.b16 %v5370, %v5368
        %v5397 = vpack.c.b16 %v5373, %v5371
        %v5398 = vpack.c.b16 %v5374, %v5372
        %v5399 = vpack.c.b16 %v5377, %v5375
        %v5400 = vpack.c.b16 %v5378, %v5376
        %v5401 = vpack.c.b16 %v5381, %v5379
        %v5402 = vpack.c.b16 %v5382, %v5380
        %v5403 = vpack.c.b16 %v5385, %v5383
        %v5404 = vpack.c.b16 %v5386, %v5384
        %v5405 = vpack.c.b16 %v5389, %v5387
        %v5406 = vpack.c.b16 %v5390, %v5388
        %5423 = vmatprep.subr.bf16.mxu0 0
        %5424 = vmatpush1.bf16.msra.mxu0 %v5215
        %5425 = vmatprep.subr.bf16.mxu0 0
        %5426 = vmatpush1.bf16.msra.mxu0 %v5216
        %5427 = vmatprep.subr.bf16.mxu0 0
        %5428 = vmatpush1.bf16.msra.mxu0 %v5217
        %5429 = vmatprep.subr.bf16.mxu0 0
        %5430 = vmatpush1.bf16.msra.mxu0 %v5218
        %5431 = vmatprep.subr.bf16.mxu0 0
        %5432 = vmatpush1.bf16.msra.mxu0 %v5219
        %5433 = vmatprep.subr.bf16.mxu0 0
        %5434 = vmatpush1.bf16.msra.mxu0 %v5220
        %5435 = vmatprep.subr.bf16.mxu0 0
        %5436 = vmatpush1.bf16.msra.mxu0 %v5221
        %5437 = vmatprep.subr.bf16.mxu0 0
        %5438 = vmatpush1.bf16.msra.mxu0 %v5222
        %5439 = vmatprep.subr.bf16.mxu0 0
        %5440 = vmatpush1.bf16.msra.mxu0 %v5223
        %5441 = vmatprep.subr.bf16.mxu0 0
        %5442 = vmatpush1.bf16.msra.mxu0 %v5224
        %5443 = vmatprep.subr.bf16.mxu0 0
        %5444 = vmatpush1.bf16.msra.mxu0 %v5225
        %5445 = vmatprep.subr.bf16.mxu0 0
        %5446 = vmatpush1.bf16.msra.mxu0 %v5226
        %5447 = vmatprep.subr.bf16.mxu0 0
        %5448 = vmatpush1.bf16.msra.mxu0 %v5227
        %5449 = vmatprep.subr.bf16.mxu0 0
        %5450 = vmatpush1.bf16.msra.mxu0 %v5228
        %5451 = vmatprep.subr.bf16.mxu0 0
        %5452 = vmatpush1.bf16.msra.mxu0 %v5229
        %5453 = vmatprep.subr.bf16.mxu0 0
        %5454 = vmatpush1.bf16.msra.mxu0 %v5230
        %5455 = vmatprep.mubr.bf16.mxu0 %v5392
        %5456 = vmatmul.mubr.bf16.gmra.mrb[0].mxu0 %v5391
        %v5457 = vpop.f32.mrb[0].mxu0
        %v5458 = vadd.f32 %v5266, %v5457
        %v5459 = vpop.f32.mrb[0].mxu0
        %v5460 = vpop.f32.mrb[0].mxu0
        %v5461 = vadd.f32 %v5271, %v5460
        %v5462 = vpop.f32.mrb[0].mxu0
        %5463 = vmatprep.mubr.bf16.mxu0 %v5394
        %5464 = vmatmul.mubr.bf16.gmra.mrb[0].mxu0 %v5393
        %v5465 = vpop.f32.mrb[0].mxu0
        %v5466 = vadd.f32 %v5276, %v5465
        %v5467 = vpop.f32.mrb[0].mxu0
        %v5468 = vpop.f32.mrb[0].mxu0
        %v5469 = vadd.f32 %v5281, %v5468
        %v5470 = vpop.f32.mrb[0].mxu0
        %5471 = vmatprep.mubr.bf16.mxu0 %v5396
        %5472 = vmatmul.mubr.bf16.gmra.mrb[0].mxu0 %v5395
        %v5473 = vpop.f32.mrb[0].mxu0
        %v5474 = vadd.f32 %v5286, %v5473
        %v5475 = vpop.f32.mrb[0].mxu0
        %v5476 = vpop.f32.mrb[0].mxu0
        %v5477 = vadd.f32 %v5291, %v5476
        %v5478 = vpop.f32.mrb[0].mxu0
        %5479 = vmatprep.mubr.bf16.mxu0 %v5398
        %5480 = vmatmul.mubr.bf16.gmra.mrb[0].mxu0 %v5397
        %v5481 = vpop.f32.mrb[0].mxu0
        %v5482 = vadd.f32 %v5296, %v5481
        %v5483 = vpop.f32.mrb[0].mxu0
        %v5484 = vpop.f32.mrb[0].mxu0
        %v5485 = vadd.f32 %v5301, %v5484
        %v5486 = vpop.f32.mrb[0].mxu0
        %5487 = vmatprep.mubr.bf16.mxu0 %v5400
        %5488 = vmatmul.mubr.bf16.gmra.mrb[0].mxu0 %v5399
        %v5489 = vpop.f32.mrb[0].mxu0
        %v5490 = vadd.f32 %v5306, %v5489
        %v5491 = vpop.f32.mrb[0].mxu0
        %v5492 = vpop.f32.mrb[0].mxu0
        %v5493 = vadd.f32 %v5311, %v5492
        %v5494 = vpop.f32.mrb[0].mxu0
        %5495 = vmatprep.mubr.bf16.mxu0 %v5402
        %5496 = vmatmul.mubr.bf16.gmra.mrb[0].mxu0 %v5401
        %v5497 = vpop.f32.mrb[0].mxu0
        %v5498 = vadd.f32 %v5316, %v5497
        %v5499 = vpop.f32.mrb[0].mxu0
        %v5500 = vpop.f32.mrb[0].mxu0
        %v5501 = vadd.f32 %v5321, %v5500
        %v5502 = vpop.f32.mrb[0].mxu0
        %5503 = vmatprep.mubr.bf16.mxu0 %v5404
        %5504 = vmatmul.mubr.bf16.gmra.mrb[0].mxu0 %v5403
        %v5505 = vpop.f32.mrb[0].mxu0
        %v5506 = vadd.f32 %v5326, %v5505
        %v5507 = vpop.f32.mrb[0].mxu0
        %v5508 = vpop.f32.mrb[0].mxu0
        %v5509 = vadd.f32 %v5331, %v5508
        %v5510 = vpop.f32.mrb[0].mxu0
        %5511 = vmatprep.mubr.bf16.mxu0 %v5406
        %5512 = vmatmul.mubr.bf16.gmra.mrb[0].mxu0 %v5405
        %v5513 = vpop.f32.mrb[0].mxu0
        %v5514 = vadd.f32 %v5336, %v5513
        %v5515 = vpop.f32.mrb[0].mxu0
        %v5516 = vpop.f32.mrb[0].mxu0
        %v5517 = vadd.f32 %v5341, %v5516
        %v5518 = vpop.f32.mrb[0].mxu0
        %5519 = vdwg.mxu0
        %v5520 = vmax.f32 %v5458, 0.0
        %v5521 = vmax.f32 %v5461, 0.0
        %v5522 = vmax.f32 %v5466, 0.0
        %v5523 = vmax.f32 %v5469, 0.0
        %v5524 = vmax.f32 %v5474, 0.0
        %v5525 = vmax.f32 %v5477, 0.0
        %v5526 = vmax.f32 %v5482, 0.0
        %v5527 = vmax.f32 %v5485, 0.0
        %v5528 = vmax.f32 %v5490, 0.0
        %v5529 = vmax.f32 %v5493, 0.0
        %v5530 = vmax.f32 %v5498, 0.0
        %v5531 = vmax.f32 %v5501, 0.0
        %v5532 = vmax.f32 %v5506, 0.0
        %v5533 = vmax.f32 %v5509, 0.0
        %v5534 = vmax.f32 %v5514, 0.0
        %v5535 = vmax.f32 %v5517, 0.0
        %v5536 = vpack.c.bf16 %v5521, %v5520
        %v5537 = vpack.c.bf16 %v5523, %v5522
        %v5538 = vpack.c.bf16 %v5525, %v5524
        %v5539 = vpack.c.bf16 %v5527, %v5526
        %v5540 = vpack.c.bf16 %v5529, %v5528
        %v5541 = vpack.c.bf16 %v5531, %v5530
        %v5542 = vpack.c.bf16 %v5533, %v5532
        %v5543 = vpack.c.bf16 %v5535, %v5534
        %v5544 = vld [vmem:[%s4] sm:$0xf]
        %v5545 = vld [vmem:[%s8] sm:$0xff]
        %5547 = vset.pattern.permute.xlu0 0
        %5548 = vperm.xlu0 %5547, %v5545
        %v5549 = vpop.permute.xlu0 %5548
        %5551 = vmatprep.subr.bf16.mxu0 0
        %5552 = vmatpush1.bf16.msra.mxu0 %v5536
        %5553 = vmatprep.subr.bf16.mxu0 0
        %5554 = vmatpush1.bf16.msra.mxu0 %v5537
        %5555 = vmatprep.subr.bf16.mxu0 0
        %5556 = vmatpush1.bf16.msra.mxu0 %v5538
        %5557 = vmatprep.subr.bf16.mxu0 0
        %5558 = vmatpush1.bf16.msra.mxu0 %v5539
        %5559 = vmatprep.subr.bf16.mxu0 0
        %5560 = vmatpush1.bf16.msra.mxu0 %v5540
        %5561 = vmatprep.subr.bf16.mxu0 0
        %5562 = vmatpush1.bf16.msra.mxu0 %v5541
        %5563 = vmatprep.subr.bf16.mxu0 0
        %5564 = vmatpush1.bf16.msra.mxu0 %v5542
        %5565 = vmatprep.subr.bf16.mxu0 0
        %5566 = vmatpush1.bf16.msra.mxu0 %v5543
        %5567 = vmatprep.subr.bf16.mxu0 0
        %5568 = vmatpush1.bf16.msra.mxu0 0
        %5569 = vmatprep.subr.bf16.mxu0 0
        %5570 = vmatpush1.bf16.msra.mxu0 0
        %5571 = vmatprep.subr.bf16.mxu0 0
        %5572 = vmatpush1.bf16.msra.mxu0 0
        %5573 = vmatprep.subr.bf16.mxu0 0
        %5574 = vmatpush1.bf16.msra.mxu0 0
        %5575 = vmatprep.subr.bf16.mxu0 0
        %5576 = vmatpush1.bf16.msra.mxu0 0
        %5577 = vmatprep.subr.bf16.mxu0 0
        %5578 = vmatpush1.bf16.msra.mxu0 0
        %5579 = vmatprep.subr.bf16.mxu0 0
        %5580 = vmatpush1.bf16.msra.mxu0 0
        %5581 = vmatprep.subr.bf16.mxu0 0
        %5582 = vmatpush1.bf16.msra.mxu0 0
        %5583 = vmatprep.mubr.bf16.mxu0 0
        %5584 = vmatmul.mubr.bf16.gmra.mrb[0].mxu0 %v5544
        %v5585 = vpop.f32.mrb[0].mxu0
        %v5586 = vadd.f32 %v5549, %v5585
        %v5587 = vpop.f32.mrb[0].mxu0
        %v5588 = vpop.f32.mrb[0].mxu0
        %v5589 = vpop.f32.mrb[0].mxu0
        %5590 = vdwg.mxu0
        %5591 = vst [vmem:[%s866] sm:$0x7] %v5586
        %p5592 = scmp.lt.s32.totalorder %s24, 1
        %s5593 = scalar_select %p5592, %s24, 1
        %p5594 = scmp.lt.s32.totalorder %s25, 1
        %s5595 = scalar_select %p5594, %s25, 1
        %s5596 = smul.addr %s5593, 2
        %s5597 = sadd.s32 %s5595, %s5596
        %s5598 = smul.addr %s5597, 4
        %s5599 = scalar_lea.vmem %s9, %s5598
        // Predicated region
        $region95: #{rot_green_forward.1} parent=89 // pred_check
          %p5600 = pneg %p248
        $region96: #{rot_green_forward.1} parent=89 // pred_check_branch
          %5602 = sbr.rel (%p5600) target = $region98
        $region97: #{rot_green_forward.1} parent=89 // pred_region
          _
        $region98: #{rot_green_forward.1} parent=89 // pred_fallthru
          _
      $region90: #{rot_green_forward.1} parent=5 // pred_fallthru
        _
      %p5603 = scmp.le.s32.totalorder 2, %s15
      // Predicated region
      $region99: #{rot_green_forward.1} parent=5 // pred_check
        %p5604 = pneg %p5603
      $region100: #{rot_green_forward.1} parent=5 // pred_check_branch
        %5606 = sbr.rel (%p5604) target = $region102
      $region101: #{rot_green_forward.1} parent=5 // pred_region
        %s5607 = ssub.s32 %s15, 2
        // Predicated region
        $region103: #{rot_green_forward.1} parent=101 // pred_check
          %p5608 = pneg %p254
        $region104: #{rot_green_forward.1} parent=101 // pred_check_branch
          %5610 = sbr.rel (%p5608) target = $region106
        $region105: #{rot_green_forward.1} parent=101 // pred_region
          %p5611 = scmp.lt.s32.totalorder %s26, 1
          %s5612 = scalar_select %p5611, %s26, 1
          %p5613 = scmp.lt.s32.totalorder %s27, 1
          %s5614 = scalar_select %p5613, %s27, 1
          %s5615 = smul.addr %s5612, 2
          %s5616 = sadd.s32 %s5614, %s5615
          %s5617 = smul.addr %s5616, 4
          %s5618 = scalar_lea.vmem %s9, %s5617
        $region106: #{rot_green_forward.1} parent=101 // pred_fallthru
          _
      $region102: #{rot_green_forward.1} parent=5 // pred_fallthru
        _
    $region6: #{rot_green_forward.1} parent=1 // loop_footer
      %s19 = sadd.s32 1, %s15
    $region7: #{rot_green_forward.1} parent=1 // loop_footer_branch
      %14 = sbr.rel target = $region3
    $region8: #{rot_green_forward.1} parent=1 // loop_exit
      _

</llo_original>
